<compile_context>
chip_gen: v6e
topology: v6e:2x2x1
jax: 0.10.0
libtpu: 0.0.40
codegen_flags: <defaults>
</compile_context>

<pallas_src>
import functools

import numpy as np
import jax
import jax.numpy as jnp
from jax import lax
from jax.experimental import pallas as pl
from jax.experimental.pallas import tpu as pltpu


# ---------------------------------------------------------------------------
# Static tap metadata: lane shift and border mask for each of the 9 taps.
# Flattened spatial index l = h*W + w; tap (dy, dx) reads l + dy*W + dx.
# ---------------------------------------------------------------------------
def _make_taps(H, W):
    shifts = []
    masks = np.zeros((9, H * W), np.float32)
    hh = np.arange(H)[:, None]
    ww = np.arange(W)[None, :]
    t = 0
    for ky in range(3):
        for kx in range(3):
            dy, dx = ky - 1, kx - 1
            shifts.append(dy * W + dx)
            valid = ((hh + dy >= 0) & (hh + dy < H) &
                     (ww + dx >= 0) & (ww + dx < W))
            masks[t] = valid.astype(np.float32).reshape(-1)
            t += 1
    return tuple(shifts), jnp.asarray(masks)


# ---------------------------------------------------------------------------
# In-kernel helpers (traced; static Python loops are fully unrolled).
# ---------------------------------------------------------------------------
def _conv3x3_packed(x_all, w_ref, mask_ref, shifts, n_images, c_in, c_out, hw):
    """3x3 / stride-1 / zero-pad conv on a packed (n_images*c_in, hw) value.

    w_ref:    (c_out, 9*c_in) ref; column t*c_in + ci holds w[ky, kx, ci, :].
    mask_ref: (9, hw) ref of {0,1} border masks (zero-padding semantics).
    Returns a list of n_images (c_out, hw) f32 conv outputs (VPU/XLU only).
    """
    accs = [jnp.zeros((c_out, hw), jnp.float32) for _ in range(n_images)]
    for t, s in enumerate(shifts):
        if s == 0:                      # center tap: no shift, mask all-ones
            xs = x_all
        else:                           # one XLU lane rotate + border zeroing
            xs = pltpu.roll(x_all, shift=(-s) % hw, axis=1) * mask_ref[t:t + 1, :]
        for n in range(n_images):
            base = n * c_in
            for ci in range(c_in):
                row = xs[base + ci:base + ci + 1, :]                 # (1, hw)
                col = w_ref[:, t * c_in + ci:t * c_in + ci + 1]      # (c_out, 1)
                accs[n] = accs[n] + row * col                        # broadcast-FMA
    return accs


def _batchnorm_relu(ys, hw, eps):
    """PyTorch training-mode BN (gamma=1, beta=0) + ReLU over a list of per-image
    (C, hw) conv outputs.  Centered (two-pass) biased variance; rsqrt on EUP."""
    inv_count = 1.0 / float(len(ys) * hw)
    total = jnp.sum(ys[0], axis=1, keepdims=True)
    for y in ys[1:]:
        total = total + jnp.sum(y, axis=1, keepdims=True)
    mean = total * inv_count                                 # (C, 1)
    centered = [y - mean for y in ys]
    ss = jnp.zeros_like(mean)
    for c in centered:
        ss = ss + jnp.sum(c * c, axis=1, keepdims=True)
    scale = lax.rsqrt(ss * inv_count + eps)                  # (C, 1)
    return [jnp.maximum(c * scale, 0.0) for c in centered]


# ---------------------------------------------------------------------------
# Fused DConv kernel: conv1 -> BN1 -> ReLU -> conv2 -> BN2 -> ReLU, whole batch.
# ---------------------------------------------------------------------------
def dconv_kernel(x_ref, w1_ref, w2_ref, mask_ref, o_ref, *,
                 shifts, eps, n_batch, c_in, c_out, hw):
    # Layer 1: all images packed into one (n_batch*c_in, hw) tile so the 9
    # per-tap rolls / border masks are shared across the whole batch.
    x_all = x_ref[...]
    h1 = _conv3x3_packed(x_all, w1_ref, mask_ref, shifts, n_batch, c_in, c_out, hw)
    h1 = _batchnorm_relu(h1, hw, eps)
    # Layer 2: per image (c_out = 8 already fills the sublanes of every vreg).
    h2 = []
    for n in range(n_batch):
        h2.extend(_conv3x3_packed(h1[n], w2_ref, mask_ref, shifts,
                                  1, c_out, c_out, hw))
    h2 = _batchnorm_relu(h2, hw, eps)
    for n in range(n_batch):
        o_ref[n * c_out:(n + 1) * c_out, :] = h2[n]          # tile-aligned store


def dconv_forward(x_nchw, w1_hwio, w2_hwio, eps=1e-5):
    N, Cin, H, W = x_nchw.shape
    Cout = w1_hwio.shape[-1]
    HW = H * W

    # Batch+channels in sublanes / flat spatial in lanes; contiguous reshapes only.
    x_flat = x_nchw.reshape(N * Cin, HW).astype(jnp.float32)
    # Weights flattened to 2D (Cout, 9*Cin): column t*Cin+ci holds w[ky,kx,ci,:].
    w1 = jnp.transpose(w1_hwio.reshape(9 * Cin, Cout)).astype(jnp.float32)
    w2 = jnp.transpose(w2_hwio.reshape(9 * Cout, Cout)).astype(jnp.float32)
    shifts, masks = _make_taps(H, W)

    kernel = functools.partial(
        dconv_kernel, shifts=shifts, eps=eps,
        n_batch=N, c_in=Cin, c_out=Cout, hw=HW)

    out = pl.pallas_call(
        kernel,
        out_shape=jax.ShapeDtypeStruct((N * Cout, HW), jnp.float32),
        grid=(1,),
        in_specs=[
            pl.BlockSpec((N * Cin, HW), lambda i: (0, 0)),
            pl.BlockSpec((Cout, 9 * Cin), lambda i: (0, 0)),
            pl.BlockSpec((Cout, 9 * Cout), lambda i: (0, 0)),
            pl.BlockSpec((9, HW), lambda i: (0, 0)),
        ],
        out_specs=pl.BlockSpec((N * Cout, HW), lambda i: (0, 0)),
        compiler_params=pltpu.CompilerParams(
            dimension_semantics=("arbitrary",)),
    )(x_flat, w1, w2, masks)

    return out.reshape(N, Cout, H, W)


# ---------------------------------------------------------------------------
# Pure-JAX reference (for correctness check).
# ---------------------------------------------------------------------------
def _ref_conv_bn_relu(x_nchw, w_hwio, eps=1e-5):
    y = lax.conv_general_dilated(
        x_nchw, w_hwio, window_strides=(1, 1), padding="SAME",
        dimension_numbers=("NCHW", "HWIO", "NCHW"))
    mean = jnp.mean(y, axis=(0, 2, 3), keepdims=True)
    var = jnp.mean(jnp.square(y - mean), axis=(0, 2, 3), keepdims=True)
    return jnp.maximum((y - mean) / jnp.sqrt(var + eps), 0.0)


def _ref_dconv(x_nchw, w1, w2):
    return _ref_conv_bn_relu(_ref_conv_bn_relu(x_nchw, w1), w2)


if __name__ == "__main__":
    # Small shapes: batch=2, in_channels=4, out_channels=8, spatial 16x16.
    N, Cin, Cout, H, W = 2, 4, 8, 16, 16

    key = jax.random.PRNGKey(0)
    kx, kw1, kw2 = jax.random.split(key, 3)

    x = jax.random.normal(kx, (N, Cin, H, W), dtype=jnp.float32)
    # Deterministic synthetic weights (HWIO), no bias (Conv2d(bias=False)).
    w1 = jax.random.normal(kw1, (3, 3, Cin, Cout), dtype=jnp.float32) * 0.1
    w2 = jax.random.normal(kw2, (3, 3, Cout, Cout), dtype=jnp.float32) * 0.1

    out = jax.jit(dconv_forward)(x, w1, w2)
    out = jax.block_until_ready(out)

    ref = _ref_dconv(x, w1, w2)
    assert out.shape == (N, Cout, H, W), out.shape
    max_err = float(jnp.max(jnp.abs(out - ref)))
    assert jnp.allclose(out, ref, rtol=1e-4, atol=1e-4), max_err

    print("KERNEL_OK")
</pallas_src>

<mosaic_0001>
module attributes {stable_mosaic.version = 11 : i64} {
  func.func @dconv_kernel(%arg0: i32, %arg1: memref<8x256xf32, #tpu.memory_space<vmem>>, %arg2: memref<8x36xf32, #tpu.memory_space<vmem>>, %arg3: memref<8x72xf32, #tpu.memory_space<vmem>>, %arg4: memref<9x256xf32, #tpu.memory_space<vmem>>, %arg5: memref<16x256xf32, #tpu.memory_space<vmem>>) attributes {dimension_semantics = [#tpu.dimension_semantics<arbitrary>], iteration_bounds = array<i64: 1>, scalar_prefetch = 0 : i64, scratch_operands = 0 : i64, tpu.core_type = #tpu.core_type<tc>, window_params = [{pipeline_mode = #tpu.pipeline_mode<synchronous>, transform_indices = @transform_0, window_bounds = array<i64: 8, 256>}, {pipeline_mode = #tpu.pipeline_mode<synchronous>, transform_indices = @transform_1, window_bounds = array<i64: 8, 36>}, {pipeline_mode = #tpu.pipeline_mode<synchronous>, transform_indices = @transform_2, window_bounds = array<i64: 8, 72>}, {pipeline_mode = #tpu.pipeline_mode<synchronous>, transform_indices = @transform_3, window_bounds = array<i64: 9, 256>}, {pipeline_mode = #tpu.pipeline_mode<synchronous>, transform_indices = @transform_4, window_bounds = array<i64: 16, 256>}]} {
    %c0 = arith.constant 0 : index
    %c0_0 = arith.constant 0 : index
    %0 = vector.load %arg1[%c0, %c0_0] : memref<8x256xf32, #tpu.memory_space<vmem>>, vector<8x256xf32>
    %cst = arith.constant 0.000000e+00 : f32
    %1 = vector.broadcast %cst : f32 to vector<8x256xf32>
    %cst_1 = arith.constant 0.000000e+00 : f32
    %2 = vector.broadcast %cst_1 : f32 to vector<8x256xf32>
    %c17_i32 = arith.constant 17 : i32
    %3 = tpu.dynamic_rotate %0 by %c17_i32 dim 1 : vector<8x256xf32>, i32 -> vector<8x256xf32>
    %c0_2 = arith.constant 0 : index
    %c0_3 = arith.constant 0 : index
    %4 = vector.load %arg4[%c0_2, %c0_3] : memref<9x256xf32, #tpu.memory_space<vmem>>, vector<1x256xf32>
    %5 = vector.broadcast %4 : vector<1x256xf32> to vector<8x256xf32>
    %6 = arith.mulf %3, %5 : vector<8x256xf32>
    %7 = vector.extract_strided_slice %6 {offsets = [0, 0], sizes = [1, 256], strides = [1, 1]} : vector<8x256xf32> to vector<1x256xf32>
    %c0_4 = arith.constant 0 : index
    %c0_5 = arith.constant 0 : index
    %8 = vector.load %arg2[%c0_4, %c0_5] : memref<8x36xf32, #tpu.memory_space<vmem>>, vector<8x1xf32>
    %9 = vector.broadcast %7 : vector<1x256xf32> to vector<8x256xf32>
    %10 = vector.broadcast %8 : vector<8x1xf32> to vector<8x256xf32>
    %11 = arith.mulf %9, %10 : vector<8x256xf32>
    %12 = arith.addf %1, %11 : vector<8x256xf32>
    %13 = vector.extract_strided_slice %6 {offsets = [1, 0], sizes = [1, 256], strides = [1, 1]} : vector<8x256xf32> to vector<1x256xf32>
    %c0_6 = arith.constant 0 : index
    %c1 = arith.constant 1 : index
    %14 = vector.load %arg2[%c0_6, %c1] : memref<8x36xf32, #tpu.memory_space<vmem>>, vector<8x1xf32>
    %15 = vector.broadcast %13 : vector<1x256xf32> to vector<8x256xf32>
    %16 = vector.broadcast %14 : vector<8x1xf32> to vector<8x256xf32>
    %17 = arith.mulf %15, %16 : vector<8x256xf32>
    %18 = arith.addf %12, %17 : vector<8x256xf32>
    %19 = vector.extract_strided_slice %6 {offsets = [2, 0], sizes = [1, 256], strides = [1, 1]} : vector<8x256xf32> to vector<1x256xf32>
    %c0_7 = arith.constant 0 : index
    %c2 = arith.constant 2 : index
    %20 = vector.load %arg2[%c0_7, %c2] : memref<8x36xf32, #tpu.memory_space<vmem>>, vector<8x1xf32>
    %21 = vector.broadcast %19 : vector<1x256xf32> to vector<8x256xf32>
    %22 = vector.broadcast %20 : vector<8x1xf32> to vector<8x256xf32>
    %23 = arith.mulf %21, %22 : vector<8x256xf32>
    %24 = arith.addf %18, %23 : vector<8x256xf32>
    %25 = vector.extract_strided_slice %6 {offsets = [3, 0], sizes = [1, 256], strides = [1, 1]} : vector<8x256xf32> to vector<1x256xf32>
    %c0_8 = arith.constant 0 : index
    %c3 = arith.constant 3 : index
    %26 = vector.load %arg2[%c0_8, %c3] : memref<8x36xf32, #tpu.memory_space<vmem>>, vector<8x1xf32>
    %27 = vector.broadcast %25 : vector<1x256xf32> to vector<8x256xf32>
    %28 = vector.broadcast %26 : vector<8x1xf32> to vector<8x256xf32>
    %29 = arith.mulf %27, %28 : vector<8x256xf32>
    %30 = arith.addf %24, %29 : vector<8x256xf32>
    %31 = vector.extract_strided_slice %6 {offsets = [4, 0], sizes = [1, 256], strides = [1, 1]} : vector<8x256xf32> to vector<1x256xf32>
    %c0_9 = arith.constant 0 : index
    %c0_10 = arith.constant 0 : index
    %32 = vector.load %arg2[%c0_9, %c0_10] : memref<8x36xf32, #tpu.memory_space<vmem>>, vector<8x1xf32>
    %33 = vector.broadcast %31 : vector<1x256xf32> to vector<8x256xf32>
    %34 = vector.broadcast %32 : vector<8x1xf32> to vector<8x256xf32>
    %35 = arith.mulf %33, %34 : vector<8x256xf32>
    %36 = arith.addf %2, %35 : vector<8x256xf32>
    %37 = vector.extract_strided_slice %6 {offsets = [5, 0], sizes = [1, 256], strides = [1, 1]} : vector<8x256xf32> to vector<1x256xf32>
    %c0_11 = arith.constant 0 : index
    %c1_12 = arith.constant 1 : index
    %38 = vector.load %arg2[%c0_11, %c1_12] : memref<8x36xf32, #tpu.memory_space<vmem>>, vector<8x1xf32>
    %39 = vector.broadcast %37 : vector<1x256xf32> to vector<8x256xf32>
    %40 = vector.broadcast %38 : vector<8x1xf32> to vector<8x256xf32>
    %41 = arith.mulf %39, %40 : vector<8x256xf32>
    %42 = arith.addf %36, %41 : vector<8x256xf32>
    %43 = vector.extract_strided_slice %6 {offsets = [6, 0], sizes = [1, 256], strides = [1, 1]} : vector<8x256xf32> to vector<1x256xf32>
    %c0_13 = arith.constant 0 : index
    %c2_14 = arith.constant 2 : index
    %44 = vector.load %arg2[%c0_13, %c2_14] : memref<8x36xf32, #tpu.memory_space<vmem>>, vector<8x1xf32>
    %45 = vector.broadcast %43 : vector<1x256xf32> to vector<8x256xf32>
    %46 = vector.broadcast %44 : vector<8x1xf32> to vector<8x256xf32>
    %47 = arith.mulf %45, %46 : vector<8x256xf32>
    %48 = arith.addf %42, %47 : vector<8x256xf32>
    %49 = vector.extract_strided_slice %6 {offsets = [7, 0], sizes = [1, 256], strides = [1, 1]} : vector<8x256xf32> to vector<1x256xf32>
    %c0_15 = arith.constant 0 : index
    %c3_16 = arith.constant 3 : index
    %50 = vector.load %arg2[%c0_15, %c3_16] : memref<8x36xf32, #tpu.memory_space<vmem>>, vector<8x1xf32>
    %51 = vector.broadcast %49 : vector<1x256xf32> to vector<8x256xf32>
    %52 = vector.broadcast %50 : vector<8x1xf32> to vector<8x256xf32>
    %53 = arith.mulf %51, %52 : vector<8x256xf32>
    %54 = arith.addf %48, %53 : vector<8x256xf32>
    %c16_i32 = arith.constant 16 : i32
    %55 = tpu.dynamic_rotate %0 by %c16_i32 dim 1 : vector<8x256xf32>, i32 -> vector<8x256xf32>
    %c1_17 = arith.constant 1 : index
    %c0_18 = arith.constant 0 : index
    %56 = vector.load %arg4[%c1_17, %c0_18] : memref<9x256xf32, #tpu.memory_space<vmem>>, vector<1x256xf32>
    %57 = vector.broadcast %56 : vector<1x256xf32> to vector<8x256xf32>
    %58 = arith.mulf %55, %57 : vector<8x256xf32>
    %59 = vector.extract_strided_slice %58 {offsets = [0, 0], sizes = [1, 256], strides = [1, 1]} : vector<8x256xf32> to vector<1x256xf32>
    %c0_19 = arith.constant 0 : index
    %c4 = arith.constant 4 : index
    %60 = vector.load %arg2[%c0_19, %c4] : memref<8x36xf32, #tpu.memory_space<vmem>>, vector<8x1xf32>
    %61 = vector.broadcast %59 : vector<1x256xf32> to vector<8x256xf32>
    %62 = vector.broadcast %60 : vector<8x1xf32> to vector<8x256xf32>
    %63 = arith.mulf %61, %62 : vector<8x256xf32>
    %64 = arith.addf %30, %63 : vector<8x256xf32>
    %65 = vector.extract_strided_slice %58 {offsets = [1, 0], sizes = [1, 256], strides = [1, 1]} : vector<8x256xf32> to vector<1x256xf32>
    %c0_20 = arith.constant 0 : index
    %c5 = arith.constant 5 : index
    %66 = vector.load %arg2[%c0_20, %c5] : memref<8x36xf32, #tpu.memory_space<vmem>>, vector<8x1xf32>
    %67 = vector.broadcast %65 : vector<1x256xf32> to vector<8x256xf32>
    %68 = vector.broadcast %66 : vector<8x1xf32> to vector<8x256xf32>
    %69 = arith.mulf %67, %68 : vector<8x256xf32>
    %70 = arith.addf %64, %69 : vector<8x256xf32>
    %71 = vector.extract_strided_slice %58 {offsets = [2, 0], sizes = [1, 256], strides = [1, 1]} : vector<8x256xf32> to vector<1x256xf32>
    %c0_21 = arith.constant 0 : index
    %c6 = arith.constant 6 : index
    %72 = vector.load %arg2[%c0_21, %c6] : memref<8x36xf32, #tpu.memory_space<vmem>>, vector<8x1xf32>
    %73 = vector.broadcast %71 : vector<1x256xf32> to vector<8x256xf32>
    %74 = vector.broadcast %72 : vector<8x1xf32> to vector<8x256xf32>
    %75 = arith.mulf %73, %74 : vector<8x256xf32>
    %76 = arith.addf %70, %75 : vector<8x256xf32>
    %77 = vector.extract_strided_slice %58 {offsets = [3, 0], sizes = [1, 256], strides = [1, 1]} : vector<8x256xf32> to vector<1x256xf32>
    %c0_22 = arith.constant 0 : index
    %c7 = arith.constant 7 : index
    %78 = vector.load %arg2[%c0_22, %c7] : memref<8x36xf32, #tpu.memory_space<vmem>>, vector<8x1xf32>
    %79 = vector.broadcast %77 : vector<1x256xf32> to vector<8x256xf32>
    %80 = vector.broadcast %78 : vector<8x1xf32> to vector<8x256xf32>
    %81 = arith.mulf %79, %80 : vector<8x256xf32>
    %82 = arith.addf %76, %81 : vector<8x256xf32>
    %83 = vector.extract_strided_slice %58 {offsets = [4, 0], sizes = [1, 256], strides = [1, 1]} : vector<8x256xf32> to vector<1x256xf32>
    %c0_23 = arith.constant 0 : index
    %c4_24 = arith.constant 4 : index
    %84 = vector.load %arg2[%c0_23, %c4_24] : memref<8x36xf32, #tpu.memory_space<vmem>>, vector<8x1xf32>
    %85 = vector.broadcast %83 : vector<1x256xf32> to vector<8x256xf32>
    %86 = vector.broadcast %84 : vector<8x1xf32> to vector<8x256xf32>
    %87 = arith.mulf %85, %86 : vector<8x256xf32>
    %88 = arith.addf %54, %87 : vector<8x256xf32>
    %89 = vector.extract_strided_slice %58 {offsets = [5, 0], sizes = [1, 256], strides = [1, 1]} : vector<8x256xf32> to vector<1x256xf32>
    %c0_25 = arith.constant 0 : index
    %c5_26 = arith.constant 5 : index
    %90 = vector.load %arg2[%c0_25, %c5_26] : memref<8x36xf32, #tpu.memory_space<vmem>>, vector<8x1xf32>
    %91 = vector.broadcast %89 : vector<1x256xf32> to vector<8x256xf32>
    %92 = vector.broadcast %90 : vector<8x1xf32> to vector<8x256xf32>
    %93 = arith.mulf %91, %92 : vector<8x256xf32>
    %94 = arith.addf %88, %93 : vector<8x256xf32>
    %95 = vector.extract_strided_slice %58 {offsets = [6, 0], sizes = [1, 256], strides = [1, 1]} : vector<8x256xf32> to vector<1x256xf32>
    %c0_27 = arith.constant 0 : index
    %c6_28 = arith.constant 6 : index
    %96 = vector.load %arg2[%c0_27, %c6_28] : memref<8x36xf32, #tpu.memory_space<vmem>>, vector<8x1xf32>
    %97 = vector.broadcast %95 : vector<1x256xf32> to vector<8x256xf32>
    %98 = vector.broadcast %96 : vector<8x1xf32> to vector<8x256xf32>
    %99 = arith.mulf %97, %98 : vector<8x256xf32>
    %100 = arith.addf %94, %99 : vector<8x256xf32>
    %101 = vector.extract_strided_slice %58 {offsets = [7, 0], sizes = [1, 256], strides = [1, 1]} : vector<8x256xf32> to vector<1x256xf32>
    %c0_29 = arith.constant 0 : index
    %c7_30 = arith.constant 7 : index
    %102 = vector.load %arg2[%c0_29, %c7_30] : memref<8x36xf32, #tpu.memory_space<vmem>>, vector<8x1xf32>
    %103 = vector.broadcast %101 : vector<1x256xf32> to vector<8x256xf32>
    %104 = vector.broadcast %102 : vector<8x1xf32> to vector<8x256xf32>
    %105 = arith.mulf %103, %104 : vector<8x256xf32>
    %106 = arith.addf %100, %105 : vector<8x256xf32>
    %c15_i32 = arith.constant 15 : i32
    %107 = tpu.dynamic_rotate %0 by %c15_i32 dim 1 : vector<8x256xf32>, i32 -> vector<8x256xf32>
    %c2_31 = arith.constant 2 : index
    %c0_32 = arith.constant 0 : index
    %108 = vector.load %arg4[%c2_31, %c0_32] : memref<9x256xf32, #tpu.memory_space<vmem>>, vector<1x256xf32>
    %109 = vector.broadcast %108 : vector<1x256xf32> to vector<8x256xf32>
    %110 = arith.mulf %107, %109 : vector<8x256xf32>
    %111 = vector.extract_strided_slice %110 {offsets = [0, 0], sizes = [1, 256], strides = [1, 1]} : vector<8x256xf32> to vector<1x256xf32>
    %c0_33 = arith.constant 0 : index
    %c8 = arith.constant 8 : index
    %112 = vector.load %arg2[%c0_33, %c8] : memref<8x36xf32, #tpu.memory_space<vmem>>, vector<8x1xf32>
    %113 = vector.broadcast %111 : vector<1x256xf32> to vector<8x256xf32>
    %114 = vector.broadcast %112 : vector<8x1xf32> to vector<8x256xf32>
    %115 = arith.mulf %113, %114 : vector<8x256xf32>
    %116 = arith.addf %82, %115 : vector<8x256xf32>
    %117 = vector.extract_strided_slice %110 {offsets = [1, 0], sizes = [1, 256], strides = [1, 1]} : vector<8x256xf32> to vector<1x256xf32>
    %c0_34 = arith.constant 0 : index
    %c9 = arith.constant 9 : index
    %118 = vector.load %arg2[%c0_34, %c9] : memref<8x36xf32, #tpu.memory_space<vmem>>, vector<8x1xf32>
    %119 = vector.broadcast %117 : vector<1x256xf32> to vector<8x256xf32>
    %120 = vector.broadcast %118 : vector<8x1xf32> to vector<8x256xf32>
    %121 = arith.mulf %119, %120 : vector<8x256xf32>
    %122 = arith.addf %116, %121 : vector<8x256xf32>
    %123 = vector.extract_strided_slice %110 {offsets = [2, 0], sizes = [1, 256], strides = [1, 1]} : vector<8x256xf32> to vector<1x256xf32>
    %c0_35 = arith.constant 0 : index
    %c10 = arith.constant 10 : index
    %124 = vector.load %arg2[%c0_35, %c10] : memref<8x36xf32, #tpu.memory_space<vmem>>, vector<8x1xf32>
    %125 = vector.broadcast %123 : vector<1x256xf32> to vector<8x256xf32>
    %126 = vector.broadcast %124 : vector<8x1xf32> to vector<8x256xf32>
    %127 = arith.mulf %125, %126 : vector<8x256xf32>
    %128 = arith.addf %122, %127 : vector<8x256xf32>
    %129 = vector.extract_strided_slice %110 {offsets = [3, 0], sizes = [1, 256], strides = [1, 1]} : vector<8x256xf32> to vector<1x256xf32>
    %c0_36 = arith.constant 0 : index
    %c11 = arith.constant 11 : index
    %130 = vector.load %arg2[%c0_36, %c11] : memref<8x36xf32, #tpu.memory_space<vmem>>, vector<8x1xf32>
    %131 = vector.broadcast %129 : vector<1x256xf32> to vector<8x256xf32>
    %132 = vector.broadcast %130 : vector<8x1xf32> to vector<8x256xf32>
    %133 = arith.mulf %131, %132 : vector<8x256xf32>
    %134 = arith.addf %128, %133 : vector<8x256xf32>
    %135 = vector.extract_strided_slice %110 {offsets = [4, 0], sizes = [1, 256], strides = [1, 1]} : vector<8x256xf32> to vector<1x256xf32>
    %c0_37 = arith.constant 0 : index
    %c8_38 = arith.constant 8 : index
    %136 = vector.load %arg2[%c0_37, %c8_38] : memref<8x36xf32, #tpu.memory_space<vmem>>, vector<8x1xf32>
    %137 = vector.broadcast %135 : vector<1x256xf32> to vector<8x256xf32>
    %138 = vector.broadcast %136 : vector<8x1xf32> to vector<8x256xf32>
    %139 = arith.mulf %137, %138 : vector<8x256xf32>
    %140 = arith.addf %106, %139 : vector<8x256xf32>
    %141 = vector.extract_strided_slice %110 {offsets = [5, 0], sizes = [1, 256], strides = [1, 1]} : vector<8x256xf32> to vector<1x256xf32>
    %c0_39 = arith.constant 0 : index
    %c9_40 = arith.constant 9 : index
    %142 = vector.load %arg2[%c0_39, %c9_40] : memref<8x36xf32, #tpu.memory_space<vmem>>, vector<8x1xf32>
    %143 = vector.broadcast %141 : vector<1x256xf32> to vector<8x256xf32>
    %144 = vector.broadcast %142 : vector<8x1xf32> to vector<8x256xf32>
    %145 = arith.mulf %143, %144 : vector<8x256xf32>
    %146 = arith.addf %140, %145 : vector<8x256xf32>
    %147 = vector.extract_strided_slice %110 {offsets = [6, 0], sizes = [1, 256], strides = [1, 1]} : vector<8x256xf32> to vector<1x256xf32>
    %c0_41 = arith.constant 0 : index
    %c10_42 = arith.constant 10 : index
    %148 = vector.load %arg2[%c0_41, %c10_42] : memref<8x36xf32, #tpu.memory_space<vmem>>, vector<8x1xf32>
    %149 = vector.broadcast %147 : vector<1x256xf32> to vector<8x256xf32>
    %150 = vector.broadcast %148 : vector<8x1xf32> to vector<8x256xf32>
    %151 = arith.mulf %149, %150 : vector<8x256xf32>
    %152 = arith.addf %146, %151 : vector<8x256xf32>
    %153 = vector.extract_strided_slice %110 {offsets = [7, 0], sizes = [1, 256], strides = [1, 1]} : vector<8x256xf32> to vector<1x256xf32>
    %c0_43 = arith.constant 0 : index
    %c11_44 = arith.constant 11 : index
    %154 = vector.load %arg2[%c0_43, %c11_44] : memref<8x36xf32, #tpu.memory_space<vmem>>, vector<8x1xf32>
    %155 = vector.broadcast %153 : vector<1x256xf32> to vector<8x256xf32>
    %156 = vector.broadcast %154 : vector<8x1xf32> to vector<8x256xf32>
    %157 = arith.mulf %155, %156 : vector<8x256xf32>
    %158 = arith.addf %152, %157 : vector<8x256xf32>
    %c1_i32 = arith.constant 1 : i32
    %159 = tpu.dynamic_rotate %0 by %c1_i32 dim 1 : vector<8x256xf32>, i32 -> vector<8x256xf32>
    %c3_45 = arith.constant 3 : index
    %c0_46 = arith.constant 0 : index
    %160 = vector.load %arg4[%c3_45, %c0_46] : memref<9x256xf32, #tpu.memory_space<vmem>>, vector<1x256xf32>
    %161 = vector.broadcast %160 : vector<1x256xf32> to vector<8x256xf32>
    %162 = arith.mulf %159, %161 : vector<8x256xf32>
    %163 = vector.extract_strided_slice %162 {offsets = [0, 0], sizes = [1, 256], strides = [1, 1]} : vector<8x256xf32> to vector<1x256xf32>
    %c0_47 = arith.constant 0 : index
    %c12 = arith.constant 12 : index
    %164 = vector.load %arg2[%c0_47, %c12] : memref<8x36xf32, #tpu.memory_space<vmem>>, vector<8x1xf32>
    %165 = vector.broadcast %163 : vector<1x256xf32> to vector<8x256xf32>
    %166 = vector.broadcast %164 : vector<8x1xf32> to vector<8x256xf32>
    %167 = arith.mulf %165, %166 : vector<8x256xf32>
    %168 = arith.addf %134, %167 : vector<8x256xf32>
    %169 = vector.extract_strided_slice %162 {offsets = [1, 0], sizes = [1, 256], strides = [1, 1]} : vector<8x256xf32> to vector<1x256xf32>
    %c0_48 = arith.constant 0 : index
    %c13 = arith.constant 13 : index
    %170 = vector.load %arg2[%c0_48, %c13] : memref<8x36xf32, #tpu.memory_space<vmem>>, vector<8x1xf32>
    %171 = vector.broadcast %169 : vector<1x256xf32> to vector<8x256xf32>
    %172 = vector.broadcast %170 : vector<8x1xf32> to vector<8x256xf32>
    %173 = arith.mulf %171, %172 : vector<8x256xf32>
    %174 = arith.addf %168, %173 : vector<8x256xf32>
    %175 = vector.extract_strided_slice %162 {offsets = [2, 0], sizes = [1, 256], strides = [1, 1]} : vector<8x256xf32> to vector<1x256xf32>
    %c0_49 = arith.constant 0 : index
    %c14 = arith.constant 14 : index
    %176 = vector.load %arg2[%c0_49, %c14] : memref<8x36xf32, #tpu.memory_space<vmem>>, vector<8x1xf32>
    %177 = vector.broadcast %175 : vector<1x256xf32> to vector<8x256xf32>
    %178 = vector.broadcast %176 : vector<8x1xf32> to vector<8x256xf32>
    %179 = arith.mulf %177, %178 : vector<8x256xf32>
    %180 = arith.addf %174, %179 : vector<8x256xf32>
    %181 = vector.extract_strided_slice %162 {offsets = [3, 0], sizes = [1, 256], strides = [1, 1]} : vector<8x256xf32> to vector<1x256xf32>
    %c0_50 = arith.constant 0 : index
    %c15 = arith.constant 15 : index
    %182 = vector.load %arg2[%c0_50, %c15] : memref<8x36xf32, #tpu.memory_space<vmem>>, vector<8x1xf32>
    %183 = vector.broadcast %181 : vector<1x256xf32> to vector<8x256xf32>
    %184 = vector.broadcast %182 : vector<8x1xf32> to vector<8x256xf32>
    %185 = arith.mulf %183, %184 : vector<8x256xf32>
    %186 = arith.addf %180, %185 : vector<8x256xf32>
    %187 = vector.extract_strided_slice %162 {offsets = [4, 0], sizes = [1, 256], strides = [1, 1]} : vector<8x256xf32> to vector<1x256xf32>
    %c0_51 = arith.constant 0 : index
    %c12_52 = arith.constant 12 : index
    %188 = vector.load %arg2[%c0_51, %c12_52] : memref<8x36xf32, #tpu.memory_space<vmem>>, vector<8x1xf32>
    %189 = vector.broadcast %187 : vector<1x256xf32> to vector<8x256xf32>
    %190 = vector.broadcast %188 : vector<8x1xf32> to vector<8x256xf32>
    %191 = arith.mulf %189, %190 : vector<8x256xf32>
    %192 = arith.addf %158, %191 : vector<8x256xf32>
    %193 = vector.extract_strided_slice %162 {offsets = [5, 0], sizes = [1, 256], strides = [1, 1]} : vector<8x256xf32> to vector<1x256xf32>
    %c0_53 = arith.constant 0 : index
    %c13_54 = arith.constant 13 : index
    %194 = vector.load %arg2[%c0_53, %c13_54] : memref<8x36xf32, #tpu.memory_space<vmem>>, vector<8x1xf32>
    %195 = vector.broadcast %193 : vector<1x256xf32> to vector<8x256xf32>
    %196 = vector.broadcast %194 : vector<8x1xf32> to vector<8x256xf32>
    %197 = arith.mulf %195, %196 : vector<8x256xf32>
    %198 = arith.addf %192, %197 : vector<8x256xf32>
    %199 = vector.extract_strided_slice %162 {offsets = [6, 0], sizes = [1, 256], strides = [1, 1]} : vector<8x256xf32> to vector<1x256xf32>
    %c0_55 = arith.constant 0 : index
    %c14_56 = arith.constant 14 : index
    %200 = vector.load %arg2[%c0_55, %c14_56] : memref<8x36xf32, #tpu.memory_space<vmem>>, vector<8x1xf32>
    %201 = vector.broadcast %199 : vector<1x256xf32> to vector<8x256xf32>
    %202 = vector.broadcast %200 : vector<8x1xf32> to vector<8x256xf32>
    %203 = arith.mulf %201, %202 : vector<8x256xf32>
    %204 = arith.addf %198, %203 : vector<8x256xf32>
    %205 = vector.extract_strided_slice %162 {offsets = [7, 0], sizes = [1, 256], strides = [1, 1]} : vector<8x256xf32> to vector<1x256xf32>
    %c0_57 = arith.constant 0 : index
    %c15_58 = arith.constant 15 : index
    %206 = vector.load %arg2[%c0_57, %c15_58] : memref<8x36xf32, #tpu.memory_space<vmem>>, vector<8x1xf32>
    %207 = vector.broadcast %205 : vector<1x256xf32> to vector<8x256xf32>
    %208 = vector.broadcast %206 : vector<8x1xf32> to vector<8x256xf32>
    %209 = arith.mulf %207, %208 : vector<8x256xf32>
    %210 = arith.addf %204, %209 : vector<8x256xf32>
    %211 = vector.extract_strided_slice %0 {offsets = [0, 0], sizes = [1, 256], strides = [1, 1]} : vector<8x256xf32> to vector<1x256xf32>
    %c0_59 = arith.constant 0 : index
    %c16 = arith.constant 16 : index
    %212 = vector.load %arg2[%c0_59, %c16] : memref<8x36xf32, #tpu.memory_space<vmem>>, vector<8x1xf32>
    %213 = vector.broadcast %211 : vector<1x256xf32> to vector<8x256xf32>
    %214 = vector.broadcast %212 : vector<8x1xf32> to vector<8x256xf32>
    %215 = arith.mulf %213, %214 : vector<8x256xf32>
    %216 = arith.addf %186, %215 : vector<8x256xf32>
    %217 = vector.extract_strided_slice %0 {offsets = [1, 0], sizes = [1, 256], strides = [1, 1]} : vector<8x256xf32> to vector<1x256xf32>
    %c0_60 = arith.constant 0 : index
    %c17 = arith.constant 17 : index
    %218 = vector.load %arg2[%c0_60, %c17] : memref<8x36xf32, #tpu.memory_space<vmem>>, vector<8x1xf32>
    %219 = vector.broadcast %217 : vector<1x256xf32> to vector<8x256xf32>
    %220 = vector.broadcast %218 : vector<8x1xf32> to vector<8x256xf32>
    %221 = arith.mulf %219, %220 : vector<8x256xf32>
    %222 = arith.addf %216, %221 : vector<8x256xf32>
    %223 = vector.extract_strided_slice %0 {offsets = [2, 0], sizes = [1, 256], strides = [1, 1]} : vector<8x256xf32> to vector<1x256xf32>
    %c0_61 = arith.constant 0 : index
    %c18 = arith.constant 18 : index
    %224 = vector.load %arg2[%c0_61, %c18] : memref<8x36xf32, #tpu.memory_space<vmem>>, vector<8x1xf32>
    %225 = vector.broadcast %223 : vector<1x256xf32> to vector<8x256xf32>
    %226 = vector.broadcast %224 : vector<8x1xf32> to vector<8x256xf32>
    %227 = arith.mulf %225, %226 : vector<8x256xf32>
    %228 = arith.addf %222, %227 : vector<8x256xf32>
    %229 = vector.extract_strided_slice %0 {offsets = [3, 0], sizes = [1, 256], strides = [1, 1]} : vector<8x256xf32> to vector<1x256xf32>
    %c0_62 = arith.constant 0 : index
    %c19 = arith.constant 19 : index
    %230 = vector.load %arg2[%c0_62, %c19] : memref<8x36xf32, #tpu.memory_space<vmem>>, vector<8x1xf32>
    %231 = vector.broadcast %229 : vector<1x256xf32> to vector<8x256xf32>
    %232 = vector.broadcast %230 : vector<8x1xf32> to vector<8x256xf32>
    %233 = arith.mulf %231, %232 : vector<8x256xf32>
    %234 = arith.addf %228, %233 : vector<8x256xf32>
    %235 = vector.extract_strided_slice %0 {offsets = [4, 0], sizes = [1, 256], strides = [1, 1]} : vector<8x256xf32> to vector<1x256xf32>
    %c0_63 = arith.constant 0 : index
    %c16_64 = arith.constant 16 : index
    %236 = vector.load %arg2[%c0_63, %c16_64] : memref<8x36xf32, #tpu.memory_space<vmem>>, vector<8x1xf32>
    %237 = vector.broadcast %235 : vector<1x256xf32> to vector<8x256xf32>
    %238 = vector.broadcast %236 : vector<8x1xf32> to vector<8x256xf32>
    %239 = arith.mulf %237, %238 : vector<8x256xf32>
    %240 = arith.addf %210, %239 : vector<8x256xf32>
    %241 = vector.extract_strided_slice %0 {offsets = [5, 0], sizes = [1, 256], strides = [1, 1]} : vector<8x256xf32> to vector<1x256xf32>
    %c0_65 = arith.constant 0 : index
    %c17_66 = arith.constant 17 : index
    %242 = vector.load %arg2[%c0_65, %c17_66] : memref<8x36xf32, #tpu.memory_space<vmem>>, vector<8x1xf32>
    %243 = vector.broadcast %241 : vector<1x256xf32> to vector<8x256xf32>
    %244 = vector.broadcast %242 : vector<8x1xf32> to vector<8x256xf32>
    %245 = arith.mulf %243, %244 : vector<8x256xf32>
    %246 = arith.addf %240, %245 : vector<8x256xf32>
    %247 = vector.extract_strided_slice %0 {offsets = [6, 0], sizes = [1, 256], strides = [1, 1]} : vector<8x256xf32> to vector<1x256xf32>
    %c0_67 = arith.constant 0 : index
    %c18_68 = arith.constant 18 : index
    %248 = vector.load %arg2[%c0_67, %c18_68] : memref<8x36xf32, #tpu.memory_space<vmem>>, vector<8x1xf32>
    %249 = vector.broadcast %247 : vector<1x256xf32> to vector<8x256xf32>
    %250 = vector.broadcast %248 : vector<8x1xf32> to vector<8x256xf32>
    %251 = arith.mulf %249, %250 : vector<8x256xf32>
    %252 = arith.addf %246, %251 : vector<8x256xf32>
    %253 = vector.extract_strided_slice %0 {offsets = [7, 0], sizes = [1, 256], strides = [1, 1]} : vector<8x256xf32> to vector<1x256xf32>
    %c0_69 = arith.constant 0 : index
    %c19_70 = arith.constant 19 : index
    %254 = vector.load %arg2[%c0_69, %c19_70] : memref<8x36xf32, #tpu.memory_space<vmem>>, vector<8x1xf32>
    %255 = vector.broadcast %253 : vector<1x256xf32> to vector<8x256xf32>
    %256 = vector.broadcast %254 : vector<8x1xf32> to vector<8x256xf32>
    %257 = arith.mulf %255, %256 : vector<8x256xf32>
    %258 = arith.addf %252, %257 : vector<8x256xf32>
    %c255_i32 = arith.constant 255 : i32
    %259 = tpu.dynamic_rotate %0 by %c255_i32 dim 1 : vector<8x256xf32>, i32 -> vector<8x256xf32>
    %c5_71 = arith.constant 5 : index
    %c0_72 = arith.constant 0 : index
    %260 = vector.load %arg4[%c5_71, %c0_72] : memref<9x256xf32, #tpu.memory_space<vmem>>, vector<1x256xf32>
    %261 = vector.broadcast %260 : vector<1x256xf32> to vector<8x256xf32>
    %262 = arith.mulf %259, %261 : vector<8x256xf32>
    %263 = vector.extract_strided_slice %262 {offsets = [0, 0], sizes = [1, 256], strides = [1, 1]} : vector<8x256xf32> to vector<1x256xf32>
    %c0_73 = arith.constant 0 : index
    %c20 = arith.constant 20 : index
    %264 = vector.load %arg2[%c0_73, %c20] : memref<8x36xf32, #tpu.memory_space<vmem>>, vector<8x1xf32>
    %265 = vector.broadcast %263 : vector<1x256xf32> to vector<8x256xf32>
    %266 = vector.broadcast %264 : vector<8x1xf32> to vector<8x256xf32>
    %267 = arith.mulf %265, %266 : vector<8x256xf32>
    %268 = arith.addf %234, %267 : vector<8x256xf32>
    %269 = vector.extract_strided_slice %262 {offsets = [1, 0], sizes = [1, 256], strides = [1, 1]} : vector<8x256xf32> to vector<1x256xf32>
    %c0_74 = arith.constant 0 : index
    %c21 = arith.constant 21 : index
    %270 = vector.load %arg2[%c0_74, %c21] : memref<8x36xf32, #tpu.memory_space<vmem>>, vector<8x1xf32>
    %271 = vector.broadcast %269 : vector<1x256xf32> to vector<8x256xf32>
    %272 = vector.broadcast %270 : vector<8x1xf32> to vector<8x256xf32>
    %273 = arith.mulf %271, %272 : vector<8x256xf32>
    %274 = arith.addf %268, %273 : vector<8x256xf32>
    %275 = vector.extract_strided_slice %262 {offsets = [2, 0], sizes = [1, 256], strides = [1, 1]} : vector<8x256xf32> to vector<1x256xf32>
    %c0_75 = arith.constant 0 : index
    %c22 = arith.constant 22 : index
    %276 = vector.load %arg2[%c0_75, %c22] : memref<8x36xf32, #tpu.memory_space<vmem>>, vector<8x1xf32>
    %277 = vector.broadcast %275 : vector<1x256xf32> to vector<8x256xf32>
    %278 = vector.broadcast %276 : vector<8x1xf32> to vector<8x256xf32>
    %279 = arith.mulf %277, %278 : vector<8x256xf32>
    %280 = arith.addf %274, %279 : vector<8x256xf32>
    %281 = vector.extract_strided_slice %262 {offsets = [3, 0], sizes = [1, 256], strides = [1, 1]} : vector<8x256xf32> to vector<1x256xf32>
    %c0_76 = arith.constant 0 : index
    %c23 = arith.constant 23 : index
    %282 = vector.load %arg2[%c0_76, %c23] : memref<8x36xf32, #tpu.memory_space<vmem>>, vector<8x1xf32>
    %283 = vector.broadcast %281 : vector<1x256xf32> to vector<8x256xf32>
    %284 = vector.broadcast %282 : vector<8x1xf32> to vector<8x256xf32>
    %285 = arith.mulf %283, %284 : vector<8x256xf32>
    %286 = arith.addf %280, %285 : vector<8x256xf32>
    %287 = vector.extract_strided_slice %262 {offsets = [4, 0], sizes = [1, 256], strides = [1, 1]} : vector<8x256xf32> to vector<1x256xf32>
    %c0_77 = arith.constant 0 : index
    %c20_78 = arith.constant 20 : index
    %288 = vector.load %arg2[%c0_77, %c20_78] : memref<8x36xf32, #tpu.memory_space<vmem>>, vector<8x1xf32>
    %289 = vector.broadcast %287 : vector<1x256xf32> to vector<8x256xf32>
    %290 = vector.broadcast %288 : vector<8x1xf32> to vector<8x256xf32>
    %291 = arith.mulf %289, %290 : vector<8x256xf32>
    %292 = arith.addf %258, %291 : vector<8x256xf32>
    %293 = vector.extract_strided_slice %262 {offsets = [5, 0], sizes = [1, 256], strides = [1, 1]} : vector<8x256xf32> to vector<1x256xf32>
    %c0_79 = arith.constant 0 : index
    %c21_80 = arith.constant 21 : index
    %294 = vector.load %arg2[%c0_79, %c21_80] : memref<8x36xf32, #tpu.memory_space<vmem>>, vector<8x1xf32>
    %295 = vector.broadcast %293 : vector<1x256xf32> to vector<8x256xf32>
    %296 = vector.broadcast %294 : vector<8x1xf32> to vector<8x256xf32>
    %297 = arith.mulf %295, %296 : vector<8x256xf32>
    %298 = arith.addf %292, %297 : vector<8x256xf32>
    %299 = vector.extract_strided_slice %262 {offsets = [6, 0], sizes = [1, 256], strides = [1, 1]} : vector<8x256xf32> to vector<1x256xf32>
    %c0_81 = arith.constant 0 : index
    %c22_82 = arith.constant 22 : index
    %300 = vector.load %arg2[%c0_81, %c22_82] : memref<8x36xf32, #tpu.memory_space<vmem>>, vector<8x1xf32>
    %301 = vector.broadcast %299 : vector<1x256xf32> to vector<8x256xf32>
    %302 = vector.broadcast %300 : vector<8x1xf32> to vector<8x256xf32>
    %303 = arith.mulf %301, %302 : vector<8x256xf32>
    %304 = arith.addf %298, %303 : vector<8x256xf32>
    %305 = vector.extract_strided_slice %262 {offsets = [7, 0], sizes = [1, 256], strides = [1, 1]} : vector<8x256xf32> to vector<1x256xf32>
    %c0_83 = arith.constant 0 : index
    %c23_84 = arith.constant 23 : index
    %306 = vector.load %arg2[%c0_83, %c23_84] : memref<8x36xf32, #tpu.memory_space<vmem>>, vector<8x1xf32>
    %307 = vector.broadcast %305 : vector<1x256xf32> to vector<8x256xf32>
    %308 = vector.broadcast %306 : vector<8x1xf32> to vector<8x256xf32>
    %309 = arith.mulf %307, %308 : vector<8x256xf32>
    %310 = arith.addf %304, %309 : vector<8x256xf32>
    %c241_i32 = arith.constant 241 : i32
    %311 = tpu.dynamic_rotate %0 by %c241_i32 dim 1 : vector<8x256xf32>, i32 -> vector<8x256xf32>
    %c6_85 = arith.constant 6 : index
    %c0_86 = arith.constant 0 : index
    %312 = vector.load %arg4[%c6_85, %c0_86] : memref<9x256xf32, #tpu.memory_space<vmem>>, vector<1x256xf32>
    %313 = vector.broadcast %312 : vector<1x256xf32> to vector<8x256xf32>
    %314 = arith.mulf %311, %313 : vector<8x256xf32>
    %315 = vector.extract_strided_slice %314 {offsets = [0, 0], sizes = [1, 256], strides = [1, 1]} : vector<8x256xf32> to vector<1x256xf32>
    %c0_87 = arith.constant 0 : index
    %c24 = arith.constant 24 : index
    %316 = vector.load %arg2[%c0_87, %c24] : memref<8x36xf32, #tpu.memory_space<vmem>>, vector<8x1xf32>
    %317 = vector.broadcast %315 : vector<1x256xf32> to vector<8x256xf32>
    %318 = vector.broadcast %316 : vector<8x1xf32> to vector<8x256xf32>
    %319 = arith.mulf %317, %318 : vector<8x256xf32>
    %320 = arith.addf %286, %319 : vector<8x256xf32>
    %321 = vector.extract_strided_slice %314 {offsets = [1, 0], sizes = [1, 256], strides = [1, 1]} : vector<8x256xf32> to vector<1x256xf32>
    %c0_88 = arith.constant 0 : index
    %c25 = arith.constant 25 : index
    %322 = vector.load %arg2[%c0_88, %c25] : memref<8x36xf32, #tpu.memory_space<vmem>>, vector<8x1xf32>
    %323 = vector.broadcast %321 : vector<1x256xf32> to vector<8x256xf32>
    %324 = vector.broadcast %322 : vector<8x1xf32> to vector<8x256xf32>
    %325 = arith.mulf %323, %324 : vector<8x256xf32>
    %326 = arith.addf %320, %325 : vector<8x256xf32>
    %327 = vector.extract_strided_slice %314 {offsets = [2, 0], sizes = [1, 256], strides = [1, 1]} : vector<8x256xf32> to vector<1x256xf32>
    %c0_89 = arith.constant 0 : index
    %c26 = arith.constant 26 : index
    %328 = vector.load %arg2[%c0_89, %c26] : memref<8x36xf32, #tpu.memory_space<vmem>>, vector<8x1xf32>
    %329 = vector.broadcast %327 : vector<1x256xf32> to vector<8x256xf32>
    %330 = vector.broadcast %328 : vector<8x1xf32> to vector<8x256xf32>
    %331 = arith.mulf %329, %330 : vector<8x256xf32>
    %332 = arith.addf %326, %331 : vector<8x256xf32>
    %333 = vector.extract_strided_slice %314 {offsets = [3, 0], sizes = [1, 256], strides = [1, 1]} : vector<8x256xf32> to vector<1x256xf32>
    %c0_90 = arith.constant 0 : index
    %c27 = arith.constant 27 : index
    %334 = vector.load %arg2[%c0_90, %c27] : memref<8x36xf32, #tpu.memory_space<vmem>>, vector<8x1xf32>
    %335 = vector.broadcast %333 : vector<1x256xf32> to vector<8x256xf32>
    %336 = vector.broadcast %334 : vector<8x1xf32> to vector<8x256xf32>
    %337 = arith.mulf %335, %336 : vector<8x256xf32>
    %338 = arith.addf %332, %337 : vector<8x256xf32>
    %339 = vector.extract_strided_slice %314 {offsets = [4, 0], sizes = [1, 256], strides = [1, 1]} : vector<8x256xf32> to vector<1x256xf32>
    %c0_91 = arith.constant 0 : index
    %c24_92 = arith.constant 24 : index
    %340 = vector.load %arg2[%c0_91, %c24_92] : memref<8x36xf32, #tpu.memory_space<vmem>>, vector<8x1xf32>
    %341 = vector.broadcast %339 : vector<1x256xf32> to vector<8x256xf32>
    %342 = vector.broadcast %340 : vector<8x1xf32> to vector<8x256xf32>
    %343 = arith.mulf %341, %342 : vector<8x256xf32>
    %344 = arith.addf %310, %343 : vector<8x256xf32>
    %345 = vector.extract_strided_slice %314 {offsets = [5, 0], sizes = [1, 256], strides = [1, 1]} : vector<8x256xf32> to vector<1x256xf32>
    %c0_93 = arith.constant 0 : index
    %c25_94 = arith.constant 25 : index
    %346 = vector.load %arg2[%c0_93, %c25_94] : memref<8x36xf32, #tpu.memory_space<vmem>>, vector<8x1xf32>
    %347 = vector.broadcast %345 : vector<1x256xf32> to vector<8x256xf32>
    %348 = vector.broadcast %346 : vector<8x1xf32> to vector<8x256xf32>
    %349 = arith.mulf %347, %348 : vector<8x256xf32>
    %350 = arith.addf %344, %349 : vector<8x256xf32>
    %351 = vector.extract_strided_slice %314 {offsets = [6, 0], sizes = [1, 256], strides = [1, 1]} : vector<8x256xf32> to vector<1x256xf32>
    %c0_95 = arith.constant 0 : index
    %c26_96 = arith.constant 26 : index
    %352 = vector.load %arg2[%c0_95, %c26_96] : memref<8x36xf32, #tpu.memory_space<vmem>>, vector<8x1xf32>
    %353 = vector.broadcast %351 : vector<1x256xf32> to vector<8x256xf32>
    %354 = vector.broadcast %352 : vector<8x1xf32> to vector<8x256xf32>
    %355 = arith.mulf %353, %354 : vector<8x256xf32>
    %356 = arith.addf %350, %355 : vector<8x256xf32>
    %357 = vector.extract_strided_slice %314 {offsets = [7, 0], sizes = [1, 256], strides = [1, 1]} : vector<8x256xf32> to vector<1x256xf32>
    %c0_97 = arith.constant 0 : index
    %c27_98 = arith.constant 27 : index
    %358 = vector.load %arg2[%c0_97, %c27_98] : memref<8x36xf32, #tpu.memory_space<vmem>>, vector<8x1xf32>
    %359 = vector.broadcast %357 : vector<1x256xf32> to vector<8x256xf32>
    %360 = vector.broadcast %358 : vector<8x1xf32> to vector<8x256xf32>
    %361 = arith.mulf %359, %360 : vector<8x256xf32>
    %362 = arith.addf %356, %361 : vector<8x256xf32>
    %c240_i32 = arith.constant 240 : i32
    %363 = tpu.dynamic_rotate %0 by %c240_i32 dim 1 : vector<8x256xf32>, i32 -> vector<8x256xf32>
    %c7_99 = arith.constant 7 : index
    %c0_100 = arith.constant 0 : index
    %364 = vector.load %arg4[%c7_99, %c0_100] : memref<9x256xf32, #tpu.memory_space<vmem>>, vector<1x256xf32>
    %365 = vector.broadcast %364 : vector<1x256xf32> to vector<8x256xf32>
    %366 = arith.mulf %363, %365 : vector<8x256xf32>
    %367 = vector.extract_strided_slice %366 {offsets = [0, 0], sizes = [1, 256], strides = [1, 1]} : vector<8x256xf32> to vector<1x256xf32>
    %c0_101 = arith.constant 0 : index
    %c28 = arith.constant 28 : index
    %368 = vector.load %arg2[%c0_101, %c28] : memref<8x36xf32, #tpu.memory_space<vmem>>, vector<8x1xf32>
    %369 = vector.broadcast %367 : vector<1x256xf32> to vector<8x256xf32>
    %370 = vector.broadcast %368 : vector<8x1xf32> to vector<8x256xf32>
    %371 = arith.mulf %369, %370 : vector<8x256xf32>
    %372 = arith.addf %338, %371 : vector<8x256xf32>
    %373 = vector.extract_strided_slice %366 {offsets = [1, 0], sizes = [1, 256], strides = [1, 1]} : vector<8x256xf32> to vector<1x256xf32>
    %c0_102 = arith.constant 0 : index
    %c29 = arith.constant 29 : index
    %374 = vector.load %arg2[%c0_102, %c29] : memref<8x36xf32, #tpu.memory_space<vmem>>, vector<8x1xf32>
    %375 = vector.broadcast %373 : vector<1x256xf32> to vector<8x256xf32>
    %376 = vector.broadcast %374 : vector<8x1xf32> to vector<8x256xf32>
    %377 = arith.mulf %375, %376 : vector<8x256xf32>
    %378 = arith.addf %372, %377 : vector<8x256xf32>
    %379 = vector.extract_strided_slice %366 {offsets = [2, 0], sizes = [1, 256], strides = [1, 1]} : vector<8x256xf32> to vector<1x256xf32>
    %c0_103 = arith.constant 0 : index
    %c30 = arith.constant 30 : index
    %380 = vector.load %arg2[%c0_103, %c30] : memref<8x36xf32, #tpu.memory_space<vmem>>, vector<8x1xf32>
    %381 = vector.broadcast %379 : vector<1x256xf32> to vector<8x256xf32>
    %382 = vector.broadcast %380 : vector<8x1xf32> to vector<8x256xf32>
    %383 = arith.mulf %381, %382 : vector<8x256xf32>
    %384 = arith.addf %378, %383 : vector<8x256xf32>
    %385 = vector.extract_strided_slice %366 {offsets = [3, 0], sizes = [1, 256], strides = [1, 1]} : vector<8x256xf32> to vector<1x256xf32>
    %c0_104 = arith.constant 0 : index
    %c31 = arith.constant 31 : index
    %386 = vector.load %arg2[%c0_104, %c31] : memref<8x36xf32, #tpu.memory_space<vmem>>, vector<8x1xf32>
    %387 = vector.broadcast %385 : vector<1x256xf32> to vector<8x256xf32>
    %388 = vector.broadcast %386 : vector<8x1xf32> to vector<8x256xf32>
    %389 = arith.mulf %387, %388 : vector<8x256xf32>
    %390 = arith.addf %384, %389 : vector<8x256xf32>
    %391 = vector.extract_strided_slice %366 {offsets = [4, 0], sizes = [1, 256], strides = [1, 1]} : vector<8x256xf32> to vector<1x256xf32>
    %c0_105 = arith.constant 0 : index
    %c28_106 = arith.constant 28 : index
    %392 = vector.load %arg2[%c0_105, %c28_106] : memref<8x36xf32, #tpu.memory_space<vmem>>, vector<8x1xf32>
    %393 = vector.broadcast %391 : vector<1x256xf32> to vector<8x256xf32>
    %394 = vector.broadcast %392 : vector<8x1xf32> to vector<8x256xf32>
    %395 = arith.mulf %393, %394 : vector<8x256xf32>
    %396 = arith.addf %362, %395 : vector<8x256xf32>
    %397 = vector.extract_strided_slice %366 {offsets = [5, 0], sizes = [1, 256], strides = [1, 1]} : vector<8x256xf32> to vector<1x256xf32>
    %c0_107 = arith.constant 0 : index
    %c29_108 = arith.constant 29 : index
    %398 = vector.load %arg2[%c0_107, %c29_108] : memref<8x36xf32, #tpu.memory_space<vmem>>, vector<8x1xf32>
    %399 = vector.broadcast %397 : vector<1x256xf32> to vector<8x256xf32>
    %400 = vector.broadcast %398 : vector<8x1xf32> to vector<8x256xf32>
    %401 = arith.mulf %399, %400 : vector<8x256xf32>
    %402 = arith.addf %396, %401 : vector<8x256xf32>
    %403 = vector.extract_strided_slice %366 {offsets = [6, 0], sizes = [1, 256], strides = [1, 1]} : vector<8x256xf32> to vector<1x256xf32>
    %c0_109 = arith.constant 0 : index
    %c30_110 = arith.constant 30 : index
    %404 = vector.load %arg2[%c0_109, %c30_110] : memref<8x36xf32, #tpu.memory_space<vmem>>, vector<8x1xf32>
    %405 = vector.broadcast %403 : vector<1x256xf32> to vector<8x256xf32>
    %406 = vector.broadcast %404 : vector<8x1xf32> to vector<8x256xf32>
    %407 = arith.mulf %405, %406 : vector<8x256xf32>
    %408 = arith.addf %402, %407 : vector<8x256xf32>
    %409 = vector.extract_strided_slice %366 {offsets = [7, 0], sizes = [1, 256], strides = [1, 1]} : vector<8x256xf32> to vector<1x256xf32>
    %c0_111 = arith.constant 0 : index
    %c31_112 = arith.constant 31 : index
    %410 = vector.load %arg2[%c0_111, %c31_112] : memref<8x36xf32, #tpu.memory_space<vmem>>, vector<8x1xf32>
    %411 = vector.broadcast %409 : vector<1x256xf32> to vector<8x256xf32>
    %412 = vector.broadcast %410 : vector<8x1xf32> to vector<8x256xf32>
    %413 = arith.mulf %411, %412 : vector<8x256xf32>
    %414 = arith.addf %408, %413 : vector<8x256xf32>
    %c239_i32 = arith.constant 239 : i32
    %415 = tpu.dynamic_rotate %0 by %c239_i32 dim 1 : vector<8x256xf32>, i32 -> vector<8x256xf32>
    %c8_113 = arith.constant 8 : index
    %c0_114 = arith.constant 0 : index
    %416 = vector.load %arg4[%c8_113, %c0_114] : memref<9x256xf32, #tpu.memory_space<vmem>>, vector<1x256xf32>
    %417 = vector.broadcast %416 : vector<1x256xf32> to vector<8x256xf32>
    %418 = arith.mulf %415, %417 : vector<8x256xf32>
    %419 = vector.extract_strided_slice %418 {offsets = [0, 0], sizes = [1, 256], strides = [1, 1]} : vector<8x256xf32> to vector<1x256xf32>
    %c0_115 = arith.constant 0 : index
    %c32 = arith.constant 32 : index
    %420 = vector.load %arg2[%c0_115, %c32] : memref<8x36xf32, #tpu.memory_space<vmem>>, vector<8x1xf32>
    %421 = vector.broadcast %419 : vector<1x256xf32> to vector<8x256xf32>
    %422 = vector.broadcast %420 : vector<8x1xf32> to vector<8x256xf32>
    %423 = arith.mulf %421, %422 : vector<8x256xf32>
    %424 = arith.addf %390, %423 : vector<8x256xf32>
    %425 = vector.extract_strided_slice %418 {offsets = [1, 0], sizes = [1, 256], strides = [1, 1]} : vector<8x256xf32> to vector<1x256xf32>
    %c0_116 = arith.constant 0 : index
    %c33 = arith.constant 33 : index
    %426 = vector.load %arg2[%c0_116, %c33] : memref<8x36xf32, #tpu.memory_space<vmem>>, vector<8x1xf32>
    %427 = vector.broadcast %425 : vector<1x256xf32> to vector<8x256xf32>
    %428 = vector.broadcast %426 : vector<8x1xf32> to vector<8x256xf32>
    %429 = arith.mulf %427, %428 : vector<8x256xf32>
    %430 = arith.addf %424, %429 : vector<8x256xf32>
    %431 = vector.extract_strided_slice %418 {offsets = [2, 0], sizes = [1, 256], strides = [1, 1]} : vector<8x256xf32> to vector<1x256xf32>
    %c0_117 = arith.constant 0 : index
    %c34 = arith.constant 34 : index
    %432 = vector.load %arg2[%c0_117, %c34] : memref<8x36xf32, #tpu.memory_space<vmem>>, vector<8x1xf32>
    %433 = vector.broadcast %431 : vector<1x256xf32> to vector<8x256xf32>
    %434 = vector.broadcast %432 : vector<8x1xf32> to vector<8x256xf32>
    %435 = arith.mulf %433, %434 : vector<8x256xf32>
    %436 = arith.addf %430, %435 : vector<8x256xf32>
    %437 = vector.extract_strided_slice %418 {offsets = [3, 0], sizes = [1, 256], strides = [1, 1]} : vector<8x256xf32> to vector<1x256xf32>
    %c0_118 = arith.constant 0 : index
    %c35 = arith.constant 35 : index
    %438 = vector.load %arg2[%c0_118, %c35] : memref<8x36xf32, #tpu.memory_space<vmem>>, vector<8x1xf32>
    %439 = vector.broadcast %437 : vector<1x256xf32> to vector<8x256xf32>
    %440 = vector.broadcast %438 : vector<8x1xf32> to vector<8x256xf32>
    %441 = arith.mulf %439, %440 : vector<8x256xf32>
    %442 = arith.addf %436, %441 : vector<8x256xf32>
    %443 = vector.extract_strided_slice %418 {offsets = [4, 0], sizes = [1, 256], strides = [1, 1]} : vector<8x256xf32> to vector<1x256xf32>
    %c0_119 = arith.constant 0 : index
    %c32_120 = arith.constant 32 : index
    %444 = vector.load %arg2[%c0_119, %c32_120] : memref<8x36xf32, #tpu.memory_space<vmem>>, vector<8x1xf32>
    %445 = vector.broadcast %443 : vector<1x256xf32> to vector<8x256xf32>
    %446 = vector.broadcast %444 : vector<8x1xf32> to vector<8x256xf32>
    %447 = arith.mulf %445, %446 : vector<8x256xf32>
    %448 = arith.addf %414, %447 : vector<8x256xf32>
    %449 = vector.extract_strided_slice %418 {offsets = [5, 0], sizes = [1, 256], strides = [1, 1]} : vector<8x256xf32> to vector<1x256xf32>
    %c0_121 = arith.constant 0 : index
    %c33_122 = arith.constant 33 : index
    %450 = vector.load %arg2[%c0_121, %c33_122] : memref<8x36xf32, #tpu.memory_space<vmem>>, vector<8x1xf32>
    %451 = vector.broadcast %449 : vector<1x256xf32> to vector<8x256xf32>
    %452 = vector.broadcast %450 : vector<8x1xf32> to vector<8x256xf32>
    %453 = arith.mulf %451, %452 : vector<8x256xf32>
    %454 = arith.addf %448, %453 : vector<8x256xf32>
    %455 = vector.extract_strided_slice %418 {offsets = [6, 0], sizes = [1, 256], strides = [1, 1]} : vector<8x256xf32> to vector<1x256xf32>
    %c0_123 = arith.constant 0 : index
    %c34_124 = arith.constant 34 : index
    %456 = vector.load %arg2[%c0_123, %c34_124] : memref<8x36xf32, #tpu.memory_space<vmem>>, vector<8x1xf32>
    %457 = vector.broadcast %455 : vector<1x256xf32> to vector<8x256xf32>
    %458 = vector.broadcast %456 : vector<8x1xf32> to vector<8x256xf32>
    %459 = arith.mulf %457, %458 : vector<8x256xf32>
    %460 = arith.addf %454, %459 : vector<8x256xf32>
    %461 = vector.extract_strided_slice %418 {offsets = [7, 0], sizes = [1, 256], strides = [1, 1]} : vector<8x256xf32> to vector<1x256xf32>
    %c0_125 = arith.constant 0 : index
    %c35_126 = arith.constant 35 : index
    %462 = vector.load %arg2[%c0_125, %c35_126] : memref<8x36xf32, #tpu.memory_space<vmem>>, vector<8x1xf32>
    %463 = vector.broadcast %461 : vector<1x256xf32> to vector<8x256xf32>
    %464 = vector.broadcast %462 : vector<8x1xf32> to vector<8x256xf32>
    %465 = arith.mulf %463, %464 : vector<8x256xf32>
    %466 = arith.addf %460, %465 : vector<8x256xf32>
    %cst_127 = arith.constant dense<0.000000e+00> : vector<8xf32>
    %467 = vector.multi_reduction <add>, %442, %cst_127 [1] : vector<8x256xf32> to vector<8xf32>
    %468 = vector.shape_cast %467 : vector<8xf32> to vector<8x1xf32>
    %cst_128 = arith.constant dense<0.000000e+00> : vector<8xf32>
    %469 = vector.multi_reduction <add>, %466, %cst_128 [1] : vector<8x256xf32> to vector<8xf32>
    %470 = vector.shape_cast %469 : vector<8xf32> to vector<8x1xf32>
    %471 = arith.addf %468, %470 : vector<8x1xf32>
    %cst_129 = arith.constant 0.001953125 : f32
    %472 = vector.broadcast %cst_129 : f32 to vector<8x1xf32>
    %473 = arith.mulf %471, %472 : vector<8x1xf32>
    %474 = vector.broadcast %473 : vector<8x1xf32> to vector<8x256xf32>
    %475 = arith.subf %442, %474 : vector<8x256xf32>
    %476 = vector.broadcast %473 : vector<8x1xf32> to vector<8x256xf32>
    %477 = arith.subf %466, %476 : vector<8x256xf32>
    %cst_130 = arith.constant 0.000000e+00 : f32
    %478 = vector.broadcast %cst_130 : f32 to vector<8x1xf32>
    %479 = arith.mulf %475, %475 : vector<8x256xf32>
    %cst_131 = arith.constant dense<0.000000e+00> : vector<8xf32>
    %480 = vector.multi_reduction <add>, %479, %cst_131 [1] : vector<8x256xf32> to vector<8xf32>
    %481 = vector.shape_cast %480 : vector<8xf32> to vector<8x1xf32>
    %482 = arith.addf %478, %481 : vector<8x1xf32>
    %483 = arith.mulf %477, %477 : vector<8x256xf32>
    %cst_132 = arith.constant dense<0.000000e+00> : vector<8xf32>
    %484 = vector.multi_reduction <add>, %483, %cst_132 [1] : vector<8x256xf32> to vector<8xf32>
    %485 = vector.shape_cast %484 : vector<8xf32> to vector<8x1xf32>
    %486 = arith.addf %482, %485 : vector<8x1xf32>
    %cst_133 = arith.constant 0.001953125 : f32
    %487 = vector.broadcast %cst_133 : f32 to vector<8x1xf32>
    %488 = arith.mulf %486, %487 : vector<8x1xf32>
    %cst_134 = arith.constant 9.99999974E-6 : f32
    %489 = vector.broadcast %cst_134 : f32 to vector<8x1xf32>
    %490 = arith.addf %488, %489 : vector<8x1xf32>
    %491 = math.rsqrt %490 : vector<8x1xf32>
    %492 = vector.broadcast %491 : vector<8x1xf32> to vector<8x256xf32>
    %493 = arith.mulf %475, %492 : vector<8x256xf32>
    %cst_135 = arith.constant 0.000000e+00 : f32
    %494 = vector.broadcast %cst_135 : f32 to vector<8x256xf32>
    %495 = arith.maximumf %493, %494 : vector<8x256xf32>
    %496 = vector.broadcast %491 : vector<8x1xf32> to vector<8x256xf32>
    %497 = arith.mulf %477, %496 : vector<8x256xf32>
    %cst_136 = arith.constant 0.000000e+00 : f32
    %498 = vector.broadcast %cst_136 : f32 to vector<8x256xf32>
    %499 = arith.maximumf %497, %498 : vector<8x256xf32>
    %cst_137 = arith.constant 0.000000e+00 : f32
    %500 = vector.broadcast %cst_137 : f32 to vector<8x256xf32>
    %c17_i32_138 = arith.constant 17 : i32
    %501 = tpu.dynamic_rotate %495 by %c17_i32_138 dim 1 : vector<8x256xf32>, i32 -> vector<8x256xf32>
    %c0_139 = arith.constant 0 : index
    %c0_140 = arith.constant 0 : index
    %502 = vector.load %arg4[%c0_139, %c0_140] : memref<9x256xf32, #tpu.memory_space<vmem>>, vector<1x256xf32>
    %503 = vector.broadcast %502 : vector<1x256xf32> to vector<8x256xf32>
    %504 = arith.mulf %501, %503 : vector<8x256xf32>
    %505 = vector.extract_strided_slice %504 {offsets = [0, 0], sizes = [1, 256], strides = [1, 1]} : vector<8x256xf32> to vector<1x256xf32>
    %c0_141 = arith.constant 0 : index
    %c0_142 = arith.constant 0 : index
    %506 = vector.load %arg3[%c0_141, %c0_142] : memref<8x72xf32, #tpu.memory_space<vmem>>, vector<8x1xf32>
    %507 = vector.broadcast %505 : vector<1x256xf32> to vector<8x256xf32>
    %508 = vector.broadcast %506 : vector<8x1xf32> to vector<8x256xf32>
    %509 = arith.mulf %507, %508 : vector<8x256xf32>
    %510 = arith.addf %500, %509 : vector<8x256xf32>
    %511 = vector.extract_strided_slice %504 {offsets = [1, 0], sizes = [1, 256], strides = [1, 1]} : vector<8x256xf32> to vector<1x256xf32>
    %c0_143 = arith.constant 0 : index
    %c1_144 = arith.constant 1 : index
    %512 = vector.load %arg3[%c0_143, %c1_144] : memref<8x72xf32, #tpu.memory_space<vmem>>, vector<8x1xf32>
    %513 = vector.broadcast %511 : vector<1x256xf32> to vector<8x256xf32>
    %514 = vector.broadcast %512 : vector<8x1xf32> to vector<8x256xf32>
    %515 = arith.mulf %513, %514 : vector<8x256xf32>
    %516 = arith.addf %510, %515 : vector<8x256xf32>
    %517 = vector.extract_strided_slice %504 {offsets = [2, 0], sizes = [1, 256], strides = [1, 1]} : vector<8x256xf32> to vector<1x256xf32>
    %c0_145 = arith.constant 0 : index
    %c2_146 = arith.constant 2 : index
    %518 = vector.load %arg3[%c0_145, %c2_146] : memref<8x72xf32, #tpu.memory_space<vmem>>, vector<8x1xf32>
    %519 = vector.broadcast %517 : vector<1x256xf32> to vector<8x256xf32>
    %520 = vector.broadcast %518 : vector<8x1xf32> to vector<8x256xf32>
    %521 = arith.mulf %519, %520 : vector<8x256xf32>
    %522 = arith.addf %516, %521 : vector<8x256xf32>
    %523 = vector.extract_strided_slice %504 {offsets = [3, 0], sizes = [1, 256], strides = [1, 1]} : vector<8x256xf32> to vector<1x256xf32>
    %c0_147 = arith.constant 0 : index
    %c3_148 = arith.constant 3 : index
    %524 = vector.load %arg3[%c0_147, %c3_148] : memref<8x72xf32, #tpu.memory_space<vmem>>, vector<8x1xf32>
    %525 = vector.broadcast %523 : vector<1x256xf32> to vector<8x256xf32>
    %526 = vector.broadcast %524 : vector<8x1xf32> to vector<8x256xf32>
    %527 = arith.mulf %525, %526 : vector<8x256xf32>
    %528 = arith.addf %522, %527 : vector<8x256xf32>
    %529 = vector.extract_strided_slice %504 {offsets = [4, 0], sizes = [1, 256], strides = [1, 1]} : vector<8x256xf32> to vector<1x256xf32>
    %c0_149 = arith.constant 0 : index
    %c4_150 = arith.constant 4 : index
    %530 = vector.load %arg3[%c0_149, %c4_150] : memref<8x72xf32, #tpu.memory_space<vmem>>, vector<8x1xf32>
    %531 = vector.broadcast %529 : vector<1x256xf32> to vector<8x256xf32>
    %532 = vector.broadcast %530 : vector<8x1xf32> to vector<8x256xf32>
    %533 = arith.mulf %531, %532 : vector<8x256xf32>
    %534 = arith.addf %528, %533 : vector<8x256xf32>
    %535 = vector.extract_strided_slice %504 {offsets = [5, 0], sizes = [1, 256], strides = [1, 1]} : vector<8x256xf32> to vector<1x256xf32>
    %c0_151 = arith.constant 0 : index
    %c5_152 = arith.constant 5 : index
    %536 = vector.load %arg3[%c0_151, %c5_152] : memref<8x72xf32, #tpu.memory_space<vmem>>, vector<8x1xf32>
    %537 = vector.broadcast %535 : vector<1x256xf32> to vector<8x256xf32>
    %538 = vector.broadcast %536 : vector<8x1xf32> to vector<8x256xf32>
    %539 = arith.mulf %537, %538 : vector<8x256xf32>
    %540 = arith.addf %534, %539 : vector<8x256xf32>
    %541 = vector.extract_strided_slice %504 {offsets = [6, 0], sizes = [1, 256], strides = [1, 1]} : vector<8x256xf32> to vector<1x256xf32>
    %c0_153 = arith.constant 0 : index
    %c6_154 = arith.constant 6 : index
    %542 = vector.load %arg3[%c0_153, %c6_154] : memref<8x72xf32, #tpu.memory_space<vmem>>, vector<8x1xf32>
    %543 = vector.broadcast %541 : vector<1x256xf32> to vector<8x256xf32>
    %544 = vector.broadcast %542 : vector<8x1xf32> to vector<8x256xf32>
    %545 = arith.mulf %543, %544 : vector<8x256xf32>
    %546 = arith.addf %540, %545 : vector<8x256xf32>
    %547 = vector.extract_strided_slice %504 {offsets = [7, 0], sizes = [1, 256], strides = [1, 1]} : vector<8x256xf32> to vector<1x256xf32>
    %c0_155 = arith.constant 0 : index
    %c7_156 = arith.constant 7 : index
    %548 = vector.load %arg3[%c0_155, %c7_156] : memref<8x72xf32, #tpu.memory_space<vmem>>, vector<8x1xf32>
    %549 = vector.broadcast %547 : vector<1x256xf32> to vector<8x256xf32>
    %550 = vector.broadcast %548 : vector<8x1xf32> to vector<8x256xf32>
    %551 = arith.mulf %549, %550 : vector<8x256xf32>
    %552 = arith.addf %546, %551 : vector<8x256xf32>
    %c16_i32_157 = arith.constant 16 : i32
    %553 = tpu.dynamic_rotate %495 by %c16_i32_157 dim 1 : vector<8x256xf32>, i32 -> vector<8x256xf32>
    %c1_158 = arith.constant 1 : index
    %c0_159 = arith.constant 0 : index
    %554 = vector.load %arg4[%c1_158, %c0_159] : memref<9x256xf32, #tpu.memory_space<vmem>>, vector<1x256xf32>
    %555 = vector.broadcast %554 : vector<1x256xf32> to vector<8x256xf32>
    %556 = arith.mulf %553, %555 : vector<8x256xf32>
    %557 = vector.extract_strided_slice %556 {offsets = [0, 0], sizes = [1, 256], strides = [1, 1]} : vector<8x256xf32> to vector<1x256xf32>
    %c0_160 = arith.constant 0 : index
    %c8_161 = arith.constant 8 : index
    %558 = vector.load %arg3[%c0_160, %c8_161] : memref<8x72xf32, #tpu.memory_space<vmem>>, vector<8x1xf32>
    %559 = vector.broadcast %557 : vector<1x256xf32> to vector<8x256xf32>
    %560 = vector.broadcast %558 : vector<8x1xf32> to vector<8x256xf32>
    %561 = arith.mulf %559, %560 : vector<8x256xf32>
    %562 = arith.addf %552, %561 : vector<8x256xf32>
    %563 = vector.extract_strided_slice %556 {offsets = [1, 0], sizes = [1, 256], strides = [1, 1]} : vector<8x256xf32> to vector<1x256xf32>
    %c0_162 = arith.constant 0 : index
    %c9_163 = arith.constant 9 : index
    %564 = vector.load %arg3[%c0_162, %c9_163] : memref<8x72xf32, #tpu.memory_space<vmem>>, vector<8x1xf32>
    %565 = vector.broadcast %563 : vector<1x256xf32> to vector<8x256xf32>
    %566 = vector.broadcast %564 : vector<8x1xf32> to vector<8x256xf32>
    %567 = arith.mulf %565, %566 : vector<8x256xf32>
    %568 = arith.addf %562, %567 : vector<8x256xf32>
    %569 = vector.extract_strided_slice %556 {offsets = [2, 0], sizes = [1, 256], strides = [1, 1]} : vector<8x256xf32> to vector<1x256xf32>
    %c0_164 = arith.constant 0 : index
    %c10_165 = arith.constant 10 : index
    %570 = vector.load %arg3[%c0_164, %c10_165] : memref<8x72xf32, #tpu.memory_space<vmem>>, vector<8x1xf32>
    %571 = vector.broadcast %569 : vector<1x256xf32> to vector<8x256xf32>
    %572 = vector.broadcast %570 : vector<8x1xf32> to vector<8x256xf32>
    %573 = arith.mulf %571, %572 : vector<8x256xf32>
    %574 = arith.addf %568, %573 : vector<8x256xf32>
    %575 = vector.extract_strided_slice %556 {offsets = [3, 0], sizes = [1, 256], strides = [1, 1]} : vector<8x256xf32> to vector<1x256xf32>
    %c0_166 = arith.constant 0 : index
    %c11_167 = arith.constant 11 : index
    %576 = vector.load %arg3[%c0_166, %c11_167] : memref<8x72xf32, #tpu.memory_space<vmem>>, vector<8x1xf32>
    %577 = vector.broadcast %575 : vector<1x256xf32> to vector<8x256xf32>
    %578 = vector.broadcast %576 : vector<8x1xf32> to vector<8x256xf32>
    %579 = arith.mulf %577, %578 : vector<8x256xf32>
    %580 = arith.addf %574, %579 : vector<8x256xf32>
    %581 = vector.extract_strided_slice %556 {offsets = [4, 0], sizes = [1, 256], strides = [1, 1]} : vector<8x256xf32> to vector<1x256xf32>
    %c0_168 = arith.constant 0 : index
    %c12_169 = arith.constant 12 : index
    %582 = vector.load %arg3[%c0_168, %c12_169] : memref<8x72xf32, #tpu.memory_space<vmem>>, vector<8x1xf32>
    %583 = vector.broadcast %581 : vector<1x256xf32> to vector<8x256xf32>
    %584 = vector.broadcast %582 : vector<8x1xf32> to vector<8x256xf32>
    %585 = arith.mulf %583, %584 : vector<8x256xf32>
    %586 = arith.addf %580, %585 : vector<8x256xf32>
    %587 = vector.extract_strided_slice %556 {offsets = [5, 0], sizes = [1, 256], strides = [1, 1]} : vector<8x256xf32> to vector<1x256xf32>
    %c0_170 = arith.constant 0 : index
    %c13_171 = arith.constant 13 : index
    %588 = vector.load %arg3[%c0_170, %c13_171] : memref<8x72xf32, #tpu.memory_space<vmem>>, vector<8x1xf32>
    %589 = vector.broadcast %587 : vector<1x256xf32> to vector<8x256xf32>
    %590 = vector.broadcast %588 : vector<8x1xf32> to vector<8x256xf32>
    %591 = arith.mulf %589, %590 : vector<8x256xf32>
    %592 = arith.addf %586, %591 : vector<8x256xf32>
    %593 = vector.extract_strided_slice %556 {offsets = [6, 0], sizes = [1, 256], strides = [1, 1]} : vector<8x256xf32> to vector<1x256xf32>
    %c0_172 = arith.constant 0 : index
    %c14_173 = arith.constant 14 : index
    %594 = vector.load %arg3[%c0_172, %c14_173] : memref<8x72xf32, #tpu.memory_space<vmem>>, vector<8x1xf32>
    %595 = vector.broadcast %593 : vector<1x256xf32> to vector<8x256xf32>
    %596 = vector.broadcast %594 : vector<8x1xf32> to vector<8x256xf32>
    %597 = arith.mulf %595, %596 : vector<8x256xf32>
    %598 = arith.addf %592, %597 : vector<8x256xf32>
    %599 = vector.extract_strided_slice %556 {offsets = [7, 0], sizes = [1, 256], strides = [1, 1]} : vector<8x256xf32> to vector<1x256xf32>
    %c0_174 = arith.constant 0 : index
    %c15_175 = arith.constant 15 : index
    %600 = vector.load %arg3[%c0_174, %c15_175] : memref<8x72xf32, #tpu.memory_space<vmem>>, vector<8x1xf32>
    %601 = vector.broadcast %599 : vector<1x256xf32> to vector<8x256xf32>
    %602 = vector.broadcast %600 : vector<8x1xf32> to vector<8x256xf32>
    %603 = arith.mulf %601, %602 : vector<8x256xf32>
    %604 = arith.addf %598, %603 : vector<8x256xf32>
    %c15_i32_176 = arith.constant 15 : i32
    %605 = tpu.dynamic_rotate %495 by %c15_i32_176 dim 1 : vector<8x256xf32>, i32 -> vector<8x256xf32>
    %c2_177 = arith.constant 2 : index
    %c0_178 = arith.constant 0 : index
    %606 = vector.load %arg4[%c2_177, %c0_178] : memref<9x256xf32, #tpu.memory_space<vmem>>, vector<1x256xf32>
    %607 = vector.broadcast %606 : vector<1x256xf32> to vector<8x256xf32>
    %608 = arith.mulf %605, %607 : vector<8x256xf32>
    %609 = vector.extract_strided_slice %608 {offsets = [0, 0], sizes = [1, 256], strides = [1, 1]} : vector<8x256xf32> to vector<1x256xf32>
    %c0_179 = arith.constant 0 : index
    %c16_180 = arith.constant 16 : index
    %610 = vector.load %arg3[%c0_179, %c16_180] : memref<8x72xf32, #tpu.memory_space<vmem>>, vector<8x1xf32>
    %611 = vector.broadcast %609 : vector<1x256xf32> to vector<8x256xf32>
    %612 = vector.broadcast %610 : vector<8x1xf32> to vector<8x256xf32>
    %613 = arith.mulf %611, %612 : vector<8x256xf32>
    %614 = arith.addf %604, %613 : vector<8x256xf32>
    %615 = vector.extract_strided_slice %608 {offsets = [1, 0], sizes = [1, 256], strides = [1, 1]} : vector<8x256xf32> to vector<1x256xf32>
    %c0_181 = arith.constant 0 : index
    %c17_182 = arith.constant 17 : index
    %616 = vector.load %arg3[%c0_181, %c17_182] : memref<8x72xf32, #tpu.memory_space<vmem>>, vector<8x1xf32>
    %617 = vector.broadcast %615 : vector<1x256xf32> to vector<8x256xf32>
    %618 = vector.broadcast %616 : vector<8x1xf32> to vector<8x256xf32>
    %619 = arith.mulf %617, %618 : vector<8x256xf32>
    %620 = arith.addf %614, %619 : vector<8x256xf32>
    %621 = vector.extract_strided_slice %608 {offsets = [2, 0], sizes = [1, 256], strides = [1, 1]} : vector<8x256xf32> to vector<1x256xf32>
    %c0_183 = arith.constant 0 : index
    %c18_184 = arith.constant 18 : index
    %622 = vector.load %arg3[%c0_183, %c18_184] : memref<8x72xf32, #tpu.memory_space<vmem>>, vector<8x1xf32>
    %623 = vector.broadcast %621 : vector<1x256xf32> to vector<8x256xf32>
    %624 = vector.broadcast %622 : vector<8x1xf32> to vector<8x256xf32>
    %625 = arith.mulf %623, %624 : vector<8x256xf32>
    %626 = arith.addf %620, %625 : vector<8x256xf32>
    %627 = vector.extract_strided_slice %608 {offsets = [3, 0], sizes = [1, 256], strides = [1, 1]} : vector<8x256xf32> to vector<1x256xf32>
    %c0_185 = arith.constant 0 : index
    %c19_186 = arith.constant 19 : index
    %628 = vector.load %arg3[%c0_185, %c19_186] : memref<8x72xf32, #tpu.memory_space<vmem>>, vector<8x1xf32>
    %629 = vector.broadcast %627 : vector<1x256xf32> to vector<8x256xf32>
    %630 = vector.broadcast %628 : vector<8x1xf32> to vector<8x256xf32>
    %631 = arith.mulf %629, %630 : vector<8x256xf32>
    %632 = arith.addf %626, %631 : vector<8x256xf32>
    %633 = vector.extract_strided_slice %608 {offsets = [4, 0], sizes = [1, 256], strides = [1, 1]} : vector<8x256xf32> to vector<1x256xf32>
    %c0_187 = arith.constant 0 : index
    %c20_188 = arith.constant 20 : index
    %634 = vector.load %arg3[%c0_187, %c20_188] : memref<8x72xf32, #tpu.memory_space<vmem>>, vector<8x1xf32>
    %635 = vector.broadcast %633 : vector<1x256xf32> to vector<8x256xf32>
    %636 = vector.broadcast %634 : vector<8x1xf32> to vector<8x256xf32>
    %637 = arith.mulf %635, %636 : vector<8x256xf32>
    %638 = arith.addf %632, %637 : vector<8x256xf32>
    %639 = vector.extract_strided_slice %608 {offsets = [5, 0], sizes = [1, 256], strides = [1, 1]} : vector<8x256xf32> to vector<1x256xf32>
    %c0_189 = arith.constant 0 : index
    %c21_190 = arith.constant 21 : index
    %640 = vector.load %arg3[%c0_189, %c21_190] : memref<8x72xf32, #tpu.memory_space<vmem>>, vector<8x1xf32>
    %641 = vector.broadcast %639 : vector<1x256xf32> to vector<8x256xf32>
    %642 = vector.broadcast %640 : vector<8x1xf32> to vector<8x256xf32>
    %643 = arith.mulf %641, %642 : vector<8x256xf32>
    %644 = arith.addf %638, %643 : vector<8x256xf32>
    %645 = vector.extract_strided_slice %608 {offsets = [6, 0], sizes = [1, 256], strides = [1, 1]} : vector<8x256xf32> to vector<1x256xf32>
    %c0_191 = arith.constant 0 : index
    %c22_192 = arith.constant 22 : index
    %646 = vector.load %arg3[%c0_191, %c22_192] : memref<8x72xf32, #tpu.memory_space<vmem>>, vector<8x1xf32>
    %647 = vector.broadcast %645 : vector<1x256xf32> to vector<8x256xf32>
    %648 = vector.broadcast %646 : vector<8x1xf32> to vector<8x256xf32>
    %649 = arith.mulf %647, %648 : vector<8x256xf32>
    %650 = arith.addf %644, %649 : vector<8x256xf32>
    %651 = vector.extract_strided_slice %608 {offsets = [7, 0], sizes = [1, 256], strides = [1, 1]} : vector<8x256xf32> to vector<1x256xf32>
    %c0_193 = arith.constant 0 : index
    %c23_194 = arith.constant 23 : index
    %652 = vector.load %arg3[%c0_193, %c23_194] : memref<8x72xf32, #tpu.memory_space<vmem>>, vector<8x1xf32>
    %653 = vector.broadcast %651 : vector<1x256xf32> to vector<8x256xf32>
    %654 = vector.broadcast %652 : vector<8x1xf32> to vector<8x256xf32>
    %655 = arith.mulf %653, %654 : vector<8x256xf32>
    %656 = arith.addf %650, %655 : vector<8x256xf32>
    %c1_i32_195 = arith.constant 1 : i32
    %657 = tpu.dynamic_rotate %495 by %c1_i32_195 dim 1 : vector<8x256xf32>, i32 -> vector<8x256xf32>
    %c3_196 = arith.constant 3 : index
    %c0_197 = arith.constant 0 : index
    %658 = vector.load %arg4[%c3_196, %c0_197] : memref<9x256xf32, #tpu.memory_space<vmem>>, vector<1x256xf32>
    %659 = vector.broadcast %658 : vector<1x256xf32> to vector<8x256xf32>
    %660 = arith.mulf %657, %659 : vector<8x256xf32>
    %661 = vector.extract_strided_slice %660 {offsets = [0, 0], sizes = [1, 256], strides = [1, 1]} : vector<8x256xf32> to vector<1x256xf32>
    %c0_198 = arith.constant 0 : index
    %c24_199 = arith.constant 24 : index
    %662 = vector.load %arg3[%c0_198, %c24_199] : memref<8x72xf32, #tpu.memory_space<vmem>>, vector<8x1xf32>
    %663 = vector.broadcast %661 : vector<1x256xf32> to vector<8x256xf32>
    %664 = vector.broadcast %662 : vector<8x1xf32> to vector<8x256xf32>
    %665 = arith.mulf %663, %664 : vector<8x256xf32>
    %666 = arith.addf %656, %665 : vector<8x256xf32>
    %667 = vector.extract_strided_slice %660 {offsets = [1, 0], sizes = [1, 256], strides = [1, 1]} : vector<8x256xf32> to vector<1x256xf32>
    %c0_200 = arith.constant 0 : index
    %c25_201 = arith.constant 25 : index
    %668 = vector.load %arg3[%c0_200, %c25_201] : memref<8x72xf32, #tpu.memory_space<vmem>>, vector<8x1xf32>
    %669 = vector.broadcast %667 : vector<1x256xf32> to vector<8x256xf32>
    %670 = vector.broadcast %668 : vector<8x1xf32> to vector<8x256xf32>
    %671 = arith.mulf %669, %670 : vector<8x256xf32>
    %672 = arith.addf %666, %671 : vector<8x256xf32>
    %673 = vector.extract_strided_slice %660 {offsets = [2, 0], sizes = [1, 256], strides = [1, 1]} : vector<8x256xf32> to vector<1x256xf32>
    %c0_202 = arith.constant 0 : index
    %c26_203 = arith.constant 26 : index
    %674 = vector.load %arg3[%c0_202, %c26_203] : memref<8x72xf32, #tpu.memory_space<vmem>>, vector<8x1xf32>
    %675 = vector.broadcast %673 : vector<1x256xf32> to vector<8x256xf32>
    %676 = vector.broadcast %674 : vector<8x1xf32> to vector<8x256xf32>
    %677 = arith.mulf %675, %676 : vector<8x256xf32>
    %678 = arith.addf %672, %677 : vector<8x256xf32>
    %679 = vector.extract_strided_slice %660 {offsets = [3, 0], sizes = [1, 256], strides = [1, 1]} : vector<8x256xf32> to vector<1x256xf32>
    %c0_204 = arith.constant 0 : index
    %c27_205 = arith.constant 27 : index
    %680 = vector.load %arg3[%c0_204, %c27_205] : memref<8x72xf32, #tpu.memory_space<vmem>>, vector<8x1xf32>
    %681 = vector.broadcast %679 : vector<1x256xf32> to vector<8x256xf32>
    %682 = vector.broadcast %680 : vector<8x1xf32> to vector<8x256xf32>
    %683 = arith.mulf %681, %682 : vector<8x256xf32>
    %684 = arith.addf %678, %683 : vector<8x256xf32>
    %685 = vector.extract_strided_slice %660 {offsets = [4, 0], sizes = [1, 256], strides = [1, 1]} : vector<8x256xf32> to vector<1x256xf32>
    %c0_206 = arith.constant 0 : index
    %c28_207 = arith.constant 28 : index
    %686 = vector.load %arg3[%c0_206, %c28_207] : memref<8x72xf32, #tpu.memory_space<vmem>>, vector<8x1xf32>
    %687 = vector.broadcast %685 : vector<1x256xf32> to vector<8x256xf32>
    %688 = vector.broadcast %686 : vector<8x1xf32> to vector<8x256xf32>
    %689 = arith.mulf %687, %688 : vector<8x256xf32>
    %690 = arith.addf %684, %689 : vector<8x256xf32>
    %691 = vector.extract_strided_slice %660 {offsets = [5, 0], sizes = [1, 256], strides = [1, 1]} : vector<8x256xf32> to vector<1x256xf32>
    %c0_208 = arith.constant 0 : index
    %c29_209 = arith.constant 29 : index
    %692 = vector.load %arg3[%c0_208, %c29_209] : memref<8x72xf32, #tpu.memory_space<vmem>>, vector<8x1xf32>
    %693 = vector.broadcast %691 : vector<1x256xf32> to vector<8x256xf32>
    %694 = vector.broadcast %692 : vector<8x1xf32> to vector<8x256xf32>
    %695 = arith.mulf %693, %694 : vector<8x256xf32>
    %696 = arith.addf %690, %695 : vector<8x256xf32>
    %697 = vector.extract_strided_slice %660 {offsets = [6, 0], sizes = [1, 256], strides = [1, 1]} : vector<8x256xf32> to vector<1x256xf32>
    %c0_210 = arith.constant 0 : index
    %c30_211 = arith.constant 30 : index
    %698 = vector.load %arg3[%c0_210, %c30_211] : memref<8x72xf32, #tpu.memory_space<vmem>>, vector<8x1xf32>
    %699 = vector.broadcast %697 : vector<1x256xf32> to vector<8x256xf32>
    %700 = vector.broadcast %698 : vector<8x1xf32> to vector<8x256xf32>
    %701 = arith.mulf %699, %700 : vector<8x256xf32>
    %702 = arith.addf %696, %701 : vector<8x256xf32>
    %703 = vector.extract_strided_slice %660 {offsets = [7, 0], sizes = [1, 256], strides = [1, 1]} : vector<8x256xf32> to vector<1x256xf32>
    %c0_212 = arith.constant 0 : index
    %c31_213 = arith.constant 31 : index
    %704 = vector.load %arg3[%c0_212, %c31_213] : memref<8x72xf32, #tpu.memory_space<vmem>>, vector<8x1xf32>
    %705 = vector.broadcast %703 : vector<1x256xf32> to vector<8x256xf32>
    %706 = vector.broadcast %704 : vector<8x1xf32> to vector<8x256xf32>
    %707 = arith.mulf %705, %706 : vector<8x256xf32>
    %708 = arith.addf %702, %707 : vector<8x256xf32>
    %709 = vector.extract_strided_slice %495 {offsets = [0, 0], sizes = [1, 256], strides = [1, 1]} : vector<8x256xf32> to vector<1x256xf32>
    %c0_214 = arith.constant 0 : index
    %c32_215 = arith.constant 32 : index
    %710 = vector.load %arg3[%c0_214, %c32_215] : memref<8x72xf32, #tpu.memory_space<vmem>>, vector<8x1xf32>
    %711 = vector.broadcast %709 : vector<1x256xf32> to vector<8x256xf32>
    %712 = vector.broadcast %710 : vector<8x1xf32> to vector<8x256xf32>
    %713 = arith.mulf %711, %712 : vector<8x256xf32>
    %714 = arith.addf %708, %713 : vector<8x256xf32>
    %715 = vector.extract_strided_slice %495 {offsets = [1, 0], sizes = [1, 256], strides = [1, 1]} : vector<8x256xf32> to vector<1x256xf32>
    %c0_216 = arith.constant 0 : index
    %c33_217 = arith.constant 33 : index
    %716 = vector.load %arg3[%c0_216, %c33_217] : memref<8x72xf32, #tpu.memory_space<vmem>>, vector<8x1xf32>
    %717 = vector.broadcast %715 : vector<1x256xf32> to vector<8x256xf32>
    %718 = vector.broadcast %716 : vector<8x1xf32> to vector<8x256xf32>
    %719 = arith.mulf %717, %718 : vector<8x256xf32>
    %720 = arith.addf %714, %719 : vector<8x256xf32>
    %721 = vector.extract_strided_slice %495 {offsets = [2, 0], sizes = [1, 256], strides = [1, 1]} : vector<8x256xf32> to vector<1x256xf32>
    %c0_218 = arith.constant 0 : index
    %c34_219 = arith.constant 34 : index
    %722 = vector.load %arg3[%c0_218, %c34_219] : memref<8x72xf32, #tpu.memory_space<vmem>>, vector<8x1xf32>
    %723 = vector.broadcast %721 : vector<1x256xf32> to vector<8x256xf32>
    %724 = vector.broadcast %722 : vector<8x1xf32> to vector<8x256xf32>
    %725 = arith.mulf %723, %724 : vector<8x256xf32>
    %726 = arith.addf %720, %725 : vector<8x256xf32>
    %727 = vector.extract_strided_slice %495 {offsets = [3, 0], sizes = [1, 256], strides = [1, 1]} : vector<8x256xf32> to vector<1x256xf32>
    %c0_220 = arith.constant 0 : index
    %c35_221 = arith.constant 35 : index
    %728 = vector.load %arg3[%c0_220, %c35_221] : memref<8x72xf32, #tpu.memory_space<vmem>>, vector<8x1xf32>
    %729 = vector.broadcast %727 : vector<1x256xf32> to vector<8x256xf32>
    %730 = vector.broadcast %728 : vector<8x1xf32> to vector<8x256xf32>
    %731 = arith.mulf %729, %730 : vector<8x256xf32>
    %732 = arith.addf %726, %731 : vector<8x256xf32>
    %733 = vector.extract_strided_slice %495 {offsets = [4, 0], sizes = [1, 256], strides = [1, 1]} : vector<8x256xf32> to vector<1x256xf32>
    %c0_222 = arith.constant 0 : index
    %c36 = arith.constant 36 : index
    %734 = vector.load %arg3[%c0_222, %c36] : memref<8x72xf32, #tpu.memory_space<vmem>>, vector<8x1xf32>
    %735 = vector.broadcast %733 : vector<1x256xf32> to vector<8x256xf32>
    %736 = vector.broadcast %734 : vector<8x1xf32> to vector<8x256xf32>
    %737 = arith.mulf %735, %736 : vector<8x256xf32>
    %738 = arith.addf %732, %737 : vector<8x256xf32>
    %739 = vector.extract_strided_slice %495 {offsets = [5, 0], sizes = [1, 256], strides = [1, 1]} : vector<8x256xf32> to vector<1x256xf32>
    %c0_223 = arith.constant 0 : index
    %c37 = arith.constant 37 : index
    %740 = vector.load %arg3[%c0_223, %c37] : memref<8x72xf32, #tpu.memory_space<vmem>>, vector<8x1xf32>
    %741 = vector.broadcast %739 : vector<1x256xf32> to vector<8x256xf32>
    %742 = vector.broadcast %740 : vector<8x1xf32> to vector<8x256xf32>
    %743 = arith.mulf %741, %742 : vector<8x256xf32>
    %744 = arith.addf %738, %743 : vector<8x256xf32>
    %745 = vector.extract_strided_slice %495 {offsets = [6, 0], sizes = [1, 256], strides = [1, 1]} : vector<8x256xf32> to vector<1x256xf32>
    %c0_224 = arith.constant 0 : index
    %c38 = arith.constant 38 : index
    %746 = vector.load %arg3[%c0_224, %c38] : memref<8x72xf32, #tpu.memory_space<vmem>>, vector<8x1xf32>
    %747 = vector.broadcast %745 : vector<1x256xf32> to vector<8x256xf32>
    %748 = vector.broadcast %746 : vector<8x1xf32> to vector<8x256xf32>
    %749 = arith.mulf %747, %748 : vector<8x256xf32>
    %750 = arith.addf %744, %749 : vector<8x256xf32>
    %751 = vector.extract_strided_slice %495 {offsets = [7, 0], sizes = [1, 256], strides = [1, 1]} : vector<8x256xf32> to vector<1x256xf32>
    %c0_225 = arith.constant 0 : index
    %c39 = arith.constant 39 : index
    %752 = vector.load %arg3[%c0_225, %c39] : memref<8x72xf32, #tpu.memory_space<vmem>>, vector<8x1xf32>
    %753 = vector.broadcast %751 : vector<1x256xf32> to vector<8x256xf32>
    %754 = vector.broadcast %752 : vector<8x1xf32> to vector<8x256xf32>
    %755 = arith.mulf %753, %754 : vector<8x256xf32>
    %756 = arith.addf %750, %755 : vector<8x256xf32>
    %c255_i32_226 = arith.constant 255 : i32
    %757 = tpu.dynamic_rotate %495 by %c255_i32_226 dim 1 : vector<8x256xf32>, i32 -> vector<8x256xf32>
    %c5_227 = arith.constant 5 : index
    %c0_228 = arith.constant 0 : index
    %758 = vector.load %arg4[%c5_227, %c0_228] : memref<9x256xf32, #tpu.memory_space<vmem>>, vector<1x256xf32>
    %759 = vector.broadcast %758 : vector<1x256xf32> to vector<8x256xf32>
    %760 = arith.mulf %757, %759 : vector<8x256xf32>
    %761 = vector.extract_strided_slice %760 {offsets = [0, 0], sizes = [1, 256], strides = [1, 1]} : vector<8x256xf32> to vector<1x256xf32>
    %c0_229 = arith.constant 0 : index
    %c40 = arith.constant 40 : index
    %762 = vector.load %arg3[%c0_229, %c40] : memref<8x72xf32, #tpu.memory_space<vmem>>, vector<8x1xf32>
    %763 = vector.broadcast %761 : vector<1x256xf32> to vector<8x256xf32>
    %764 = vector.broadcast %762 : vector<8x1xf32> to vector<8x256xf32>
    %765 = arith.mulf %763, %764 : vector<8x256xf32>
    %766 = arith.addf %756, %765 : vector<8x256xf32>
    %767 = vector.extract_strided_slice %760 {offsets = [1, 0], sizes = [1, 256], strides = [1, 1]} : vector<8x256xf32> to vector<1x256xf32>
    %c0_230 = arith.constant 0 : index
    %c41 = arith.constant 41 : index
    %768 = vector.load %arg3[%c0_230, %c41] : memref<8x72xf32, #tpu.memory_space<vmem>>, vector<8x1xf32>
    %769 = vector.broadcast %767 : vector<1x256xf32> to vector<8x256xf32>
    %770 = vector.broadcast %768 : vector<8x1xf32> to vector<8x256xf32>
    %771 = arith.mulf %769, %770 : vector<8x256xf32>
    %772 = arith.addf %766, %771 : vector<8x256xf32>
    %773 = vector.extract_strided_slice %760 {offsets = [2, 0], sizes = [1, 256], strides = [1, 1]} : vector<8x256xf32> to vector<1x256xf32>
    %c0_231 = arith.constant 0 : index
    %c42 = arith.constant 42 : index
    %774 = vector.load %arg3[%c0_231, %c42] : memref<8x72xf32, #tpu.memory_space<vmem>>, vector<8x1xf32>
    %775 = vector.broadcast %773 : vector<1x256xf32> to vector<8x256xf32>
    %776 = vector.broadcast %774 : vector<8x1xf32> to vector<8x256xf32>
    %777 = arith.mulf %775, %776 : vector<8x256xf32>
    %778 = arith.addf %772, %777 : vector<8x256xf32>
    %779 = vector.extract_strided_slice %760 {offsets = [3, 0], sizes = [1, 256], strides = [1, 1]} : vector<8x256xf32> to vector<1x256xf32>
    %c0_232 = arith.constant 0 : index
    %c43 = arith.constant 43 : index
    %780 = vector.load %arg3[%c0_232, %c43] : memref<8x72xf32, #tpu.memory_space<vmem>>, vector<8x1xf32>
    %781 = vector.broadcast %779 : vector<1x256xf32> to vector<8x256xf32>
    %782 = vector.broadcast %780 : vector<8x1xf32> to vector<8x256xf32>
    %783 = arith.mulf %781, %782 : vector<8x256xf32>
    %784 = arith.addf %778, %783 : vector<8x256xf32>
    %785 = vector.extract_strided_slice %760 {offsets = [4, 0], sizes = [1, 256], strides = [1, 1]} : vector<8x256xf32> to vector<1x256xf32>
    %c0_233 = arith.constant 0 : index
    %c44 = arith.constant 44 : index
    %786 = vector.load %arg3[%c0_233, %c44] : memref<8x72xf32, #tpu.memory_space<vmem>>, vector<8x1xf32>
    %787 = vector.broadcast %785 : vector<1x256xf32> to vector<8x256xf32>
    %788 = vector.broadcast %786 : vector<8x1xf32> to vector<8x256xf32>
    %789 = arith.mulf %787, %788 : vector<8x256xf32>
    %790 = arith.addf %784, %789 : vector<8x256xf32>
    %791 = vector.extract_strided_slice %760 {offsets = [5, 0], sizes = [1, 256], strides = [1, 1]} : vector<8x256xf32> to vector<1x256xf32>
    %c0_234 = arith.constant 0 : index
    %c45 = arith.constant 45 : index
    %792 = vector.load %arg3[%c0_234, %c45] : memref<8x72xf32, #tpu.memory_space<vmem>>, vector<8x1xf32>
    %793 = vector.broadcast %791 : vector<1x256xf32> to vector<8x256xf32>
    %794 = vector.broadcast %792 : vector<8x1xf32> to vector<8x256xf32>
    %795 = arith.mulf %793, %794 : vector<8x256xf32>
    %796 = arith.addf %790, %795 : vector<8x256xf32>
    %797 = vector.extract_strided_slice %760 {offsets = [6, 0], sizes = [1, 256], strides = [1, 1]} : vector<8x256xf32> to vector<1x256xf32>
    %c0_235 = arith.constant 0 : index
    %c46 = arith.constant 46 : index
    %798 = vector.load %arg3[%c0_235, %c46] : memref<8x72xf32, #tpu.memory_space<vmem>>, vector<8x1xf32>
    %799 = vector.broadcast %797 : vector<1x256xf32> to vector<8x256xf32>
    %800 = vector.broadcast %798 : vector<8x1xf32> to vector<8x256xf32>
    %801 = arith.mulf %799, %800 : vector<8x256xf32>
    %802 = arith.addf %796, %801 : vector<8x256xf32>
    %803 = vector.extract_strided_slice %760 {offsets = [7, 0], sizes = [1, 256], strides = [1, 1]} : vector<8x256xf32> to vector<1x256xf32>
    %c0_236 = arith.constant 0 : index
    %c47 = arith.constant 47 : index
    %804 = vector.load %arg3[%c0_236, %c47] : memref<8x72xf32, #tpu.memory_space<vmem>>, vector<8x1xf32>
    %805 = vector.broadcast %803 : vector<1x256xf32> to vector<8x256xf32>
    %806 = vector.broadcast %804 : vector<8x1xf32> to vector<8x256xf32>
    %807 = arith.mulf %805, %806 : vector<8x256xf32>
    %808 = arith.addf %802, %807 : vector<8x256xf32>
    %c241_i32_237 = arith.constant 241 : i32
    %809 = tpu.dynamic_rotate %495 by %c241_i32_237 dim 1 : vector<8x256xf32>, i32 -> vector<8x256xf32>
    %c6_238 = arith.constant 6 : index
    %c0_239 = arith.constant 0 : index
    %810 = vector.load %arg4[%c6_238, %c0_239] : memref<9x256xf32, #tpu.memory_space<vmem>>, vector<1x256xf32>
    %811 = vector.broadcast %810 : vector<1x256xf32> to vector<8x256xf32>
    %812 = arith.mulf %809, %811 : vector<8x256xf32>
    %813 = vector.extract_strided_slice %812 {offsets = [0, 0], sizes = [1, 256], strides = [1, 1]} : vector<8x256xf32> to vector<1x256xf32>
    %c0_240 = arith.constant 0 : index
    %c48 = arith.constant 48 : index
    %814 = vector.load %arg3[%c0_240, %c48] : memref<8x72xf32, #tpu.memory_space<vmem>>, vector<8x1xf32>
    %815 = vector.broadcast %813 : vector<1x256xf32> to vector<8x256xf32>
    %816 = vector.broadcast %814 : vector<8x1xf32> to vector<8x256xf32>
    %817 = arith.mulf %815, %816 : vector<8x256xf32>
    %818 = arith.addf %808, %817 : vector<8x256xf32>
    %819 = vector.extract_strided_slice %812 {offsets = [1, 0], sizes = [1, 256], strides = [1, 1]} : vector<8x256xf32> to vector<1x256xf32>
    %c0_241 = arith.constant 0 : index
    %c49 = arith.constant 49 : index
    %820 = vector.load %arg3[%c0_241, %c49] : memref<8x72xf32, #tpu.memory_space<vmem>>, vector<8x1xf32>
    %821 = vector.broadcast %819 : vector<1x256xf32> to vector<8x256xf32>
    %822 = vector.broadcast %820 : vector<8x1xf32> to vector<8x256xf32>
    %823 = arith.mulf %821, %822 : vector<8x256xf32>
    %824 = arith.addf %818, %823 : vector<8x256xf32>
    %825 = vector.extract_strided_slice %812 {offsets = [2, 0], sizes = [1, 256], strides = [1, 1]} : vector<8x256xf32> to vector<1x256xf32>
    %c0_242 = arith.constant 0 : index
    %c50 = arith.constant 50 : index
    %826 = vector.load %arg3[%c0_242, %c50] : memref<8x72xf32, #tpu.memory_space<vmem>>, vector<8x1xf32>
    %827 = vector.broadcast %825 : vector<1x256xf32> to vector<8x256xf32>
    %828 = vector.broadcast %826 : vector<8x1xf32> to vector<8x256xf32>
    %829 = arith.mulf %827, %828 : vector<8x256xf32>
    %830 = arith.addf %824, %829 : vector<8x256xf32>
    %831 = vector.extract_strided_slice %812 {offsets = [3, 0], sizes = [1, 256], strides = [1, 1]} : vector<8x256xf32> to vector<1x256xf32>
    %c0_243 = arith.constant 0 : index
    %c51 = arith.constant 51 : index
    %832 = vector.load %arg3[%c0_243, %c51] : memref<8x72xf32, #tpu.memory_space<vmem>>, vector<8x1xf32>
    %833 = vector.broadcast %831 : vector<1x256xf32> to vector<8x256xf32>
    %834 = vector.broadcast %832 : vector<8x1xf32> to vector<8x256xf32>
    %835 = arith.mulf %833, %834 : vector<8x256xf32>
    %836 = arith.addf %830, %835 : vector<8x256xf32>
    %837 = vector.extract_strided_slice %812 {offsets = [4, 0], sizes = [1, 256], strides = [1, 1]} : vector<8x256xf32> to vector<1x256xf32>
    %c0_244 = arith.constant 0 : index
    %c52 = arith.constant 52 : index
    %838 = vector.load %arg3[%c0_244, %c52] : memref<8x72xf32, #tpu.memory_space<vmem>>, vector<8x1xf32>
    %839 = vector.broadcast %837 : vector<1x256xf32> to vector<8x256xf32>
    %840 = vector.broadcast %838 : vector<8x1xf32> to vector<8x256xf32>
    %841 = arith.mulf %839, %840 : vector<8x256xf32>
    %842 = arith.addf %836, %841 : vector<8x256xf32>
    %843 = vector.extract_strided_slice %812 {offsets = [5, 0], sizes = [1, 256], strides = [1, 1]} : vector<8x256xf32> to vector<1x256xf32>
    %c0_245 = arith.constant 0 : index
    %c53 = arith.constant 53 : index
    %844 = vector.load %arg3[%c0_245, %c53] : memref<8x72xf32, #tpu.memory_space<vmem>>, vector<8x1xf32>
    %845 = vector.broadcast %843 : vector<1x256xf32> to vector<8x256xf32>
    %846 = vector.broadcast %844 : vector<8x1xf32> to vector<8x256xf32>
    %847 = arith.mulf %845, %846 : vector<8x256xf32>
    %848 = arith.addf %842, %847 : vector<8x256xf32>
    %849 = vector.extract_strided_slice %812 {offsets = [6, 0], sizes = [1, 256], strides = [1, 1]} : vector<8x256xf32> to vector<1x256xf32>
    %c0_246 = arith.constant 0 : index
    %c54 = arith.constant 54 : index
    %850 = vector.load %arg3[%c0_246, %c54] : memref<8x72xf32, #tpu.memory_space<vmem>>, vector<8x1xf32>
    %851 = vector.broadcast %849 : vector<1x256xf32> to vector<8x256xf32>
    %852 = vector.broadcast %850 : vector<8x1xf32> to vector<8x256xf32>
    %853 = arith.mulf %851, %852 : vector<8x256xf32>
    %854 = arith.addf %848, %853 : vector<8x256xf32>
    %855 = vector.extract_strided_slice %812 {offsets = [7, 0], sizes = [1, 256], strides = [1, 1]} : vector<8x256xf32> to vector<1x256xf32>
    %c0_247 = arith.constant 0 : index
    %c55 = arith.constant 55 : index
    %856 = vector.load %arg3[%c0_247, %c55] : memref<8x72xf32, #tpu.memory_space<vmem>>, vector<8x1xf32>
    %857 = vector.broadcast %855 : vector<1x256xf32> to vector<8x256xf32>
    %858 = vector.broadcast %856 : vector<8x1xf32> to vector<8x256xf32>
    %859 = arith.mulf %857, %858 : vector<8x256xf32>
    %860 = arith.addf %854, %859 : vector<8x256xf32>
    %c240_i32_248 = arith.constant 240 : i32
    %861 = tpu.dynamic_rotate %495 by %c240_i32_248 dim 1 : vector<8x256xf32>, i32 -> vector<8x256xf32>
    %c7_249 = arith.constant 7 : index
    %c0_250 = arith.constant 0 : index
    %862 = vector.load %arg4[%c7_249, %c0_250] : memref<9x256xf32, #tpu.memory_space<vmem>>, vector<1x256xf32>
    %863 = vector.broadcast %862 : vector<1x256xf32> to vector<8x256xf32>
    %864 = arith.mulf %861, %863 : vector<8x256xf32>
    %865 = vector.extract_strided_slice %864 {offsets = [0, 0], sizes = [1, 256], strides = [1, 1]} : vector<8x256xf32> to vector<1x256xf32>
    %c0_251 = arith.constant 0 : index
    %c56 = arith.constant 56 : index
    %866 = vector.load %arg3[%c0_251, %c56] : memref<8x72xf32, #tpu.memory_space<vmem>>, vector<8x1xf32>
    %867 = vector.broadcast %865 : vector<1x256xf32> to vector<8x256xf32>
    %868 = vector.broadcast %866 : vector<8x1xf32> to vector<8x256xf32>
    %869 = arith.mulf %867, %868 : vector<8x256xf32>
    %870 = arith.addf %860, %869 : vector<8x256xf32>
    %871 = vector.extract_strided_slice %864 {offsets = [1, 0], sizes = [1, 256], strides = [1, 1]} : vector<8x256xf32> to vector<1x256xf32>
    %c0_252 = arith.constant 0 : index
    %c57 = arith.constant 57 : index
    %872 = vector.load %arg3[%c0_252, %c57] : memref<8x72xf32, #tpu.memory_space<vmem>>, vector<8x1xf32>
    %873 = vector.broadcast %871 : vector<1x256xf32> to vector<8x256xf32>
    %874 = vector.broadcast %872 : vector<8x1xf32> to vector<8x256xf32>
    %875 = arith.mulf %873, %874 : vector<8x256xf32>
    %876 = arith.addf %870, %875 : vector<8x256xf32>
    %877 = vector.extract_strided_slice %864 {offsets = [2, 0], sizes = [1, 256], strides = [1, 1]} : vector<8x256xf32> to vector<1x256xf32>
    %c0_253 = arith.constant 0 : index
    %c58 = arith.constant 58 : index
    %878 = vector.load %arg3[%c0_253, %c58] : memref<8x72xf32, #tpu.memory_space<vmem>>, vector<8x1xf32>
    %879 = vector.broadcast %877 : vector<1x256xf32> to vector<8x256xf32>
    %880 = vector.broadcast %878 : vector<8x1xf32> to vector<8x256xf32>
    %881 = arith.mulf %879, %880 : vector<8x256xf32>
    %882 = arith.addf %876, %881 : vector<8x256xf32>
    %883 = vector.extract_strided_slice %864 {offsets = [3, 0], sizes = [1, 256], strides = [1, 1]} : vector<8x256xf32> to vector<1x256xf32>
    %c0_254 = arith.constant 0 : index
    %c59 = arith.constant 59 : index
    %884 = vector.load %arg3[%c0_254, %c59] : memref<8x72xf32, #tpu.memory_space<vmem>>, vector<8x1xf32>
    %885 = vector.broadcast %883 : vector<1x256xf32> to vector<8x256xf32>
    %886 = vector.broadcast %884 : vector<8x1xf32> to vector<8x256xf32>
    %887 = arith.mulf %885, %886 : vector<8x256xf32>
    %888 = arith.addf %882, %887 : vector<8x256xf32>
    %889 = vector.extract_strided_slice %864 {offsets = [4, 0], sizes = [1, 256], strides = [1, 1]} : vector<8x256xf32> to vector<1x256xf32>
    %c0_255 = arith.constant 0 : index
    %c60 = arith.constant 60 : index
    %890 = vector.load %arg3[%c0_255, %c60] : memref<8x72xf32, #tpu.memory_space<vmem>>, vector<8x1xf32>
    %891 = vector.broadcast %889 : vector<1x256xf32> to vector<8x256xf32>
    %892 = vector.broadcast %890 : vector<8x1xf32> to vector<8x256xf32>
    %893 = arith.mulf %891, %892 : vector<8x256xf32>
    %894 = arith.addf %888, %893 : vector<8x256xf32>
    %895 = vector.extract_strided_slice %864 {offsets = [5, 0], sizes = [1, 256], strides = [1, 1]} : vector<8x256xf32> to vector<1x256xf32>
    %c0_256 = arith.constant 0 : index
    %c61 = arith.constant 61 : index
    %896 = vector.load %arg3[%c0_256, %c61] : memref<8x72xf32, #tpu.memory_space<vmem>>, vector<8x1xf32>
    %897 = vector.broadcast %895 : vector<1x256xf32> to vector<8x256xf32>
    %898 = vector.broadcast %896 : vector<8x1xf32> to vector<8x256xf32>
    %899 = arith.mulf %897, %898 : vector<8x256xf32>
    %900 = arith.addf %894, %899 : vector<8x256xf32>
    %901 = vector.extract_strided_slice %864 {offsets = [6, 0], sizes = [1, 256], strides = [1, 1]} : vector<8x256xf32> to vector<1x256xf32>
    %c0_257 = arith.constant 0 : index
    %c62 = arith.constant 62 : index
    %902 = vector.load %arg3[%c0_257, %c62] : memref<8x72xf32, #tpu.memory_space<vmem>>, vector<8x1xf32>
    %903 = vector.broadcast %901 : vector<1x256xf32> to vector<8x256xf32>
    %904 = vector.broadcast %902 : vector<8x1xf32> to vector<8x256xf32>
    %905 = arith.mulf %903, %904 : vector<8x256xf32>
    %906 = arith.addf %900, %905 : vector<8x256xf32>
    %907 = vector.extract_strided_slice %864 {offsets = [7, 0], sizes = [1, 256], strides = [1, 1]} : vector<8x256xf32> to vector<1x256xf32>
    %c0_258 = arith.constant 0 : index
    %c63 = arith.constant 63 : index
    %908 = vector.load %arg3[%c0_258, %c63] : memref<8x72xf32, #tpu.memory_space<vmem>>, vector<8x1xf32>
    %909 = vector.broadcast %907 : vector<1x256xf32> to vector<8x256xf32>
    %910 = vector.broadcast %908 : vector<8x1xf32> to vector<8x256xf32>
    %911 = arith.mulf %909, %910 : vector<8x256xf32>
    %912 = arith.addf %906, %911 : vector<8x256xf32>
    %c239_i32_259 = arith.constant 239 : i32
    %913 = tpu.dynamic_rotate %495 by %c239_i32_259 dim 1 : vector<8x256xf32>, i32 -> vector<8x256xf32>
    %c8_260 = arith.constant 8 : index
    %c0_261 = arith.constant 0 : index
    %914 = vector.load %arg4[%c8_260, %c0_261] : memref<9x256xf32, #tpu.memory_space<vmem>>, vector<1x256xf32>
    %915 = vector.broadcast %914 : vector<1x256xf32> to vector<8x256xf32>
    %916 = arith.mulf %913, %915 : vector<8x256xf32>
    %917 = vector.extract_strided_slice %916 {offsets = [0, 0], sizes = [1, 256], strides = [1, 1]} : vector<8x256xf32> to vector<1x256xf32>
    %c0_262 = arith.constant 0 : index
    %c64 = arith.constant 64 : index
    %918 = vector.load %arg3[%c0_262, %c64] : memref<8x72xf32, #tpu.memory_space<vmem>>, vector<8x1xf32>
    %919 = vector.broadcast %917 : vector<1x256xf32> to vector<8x256xf32>
    %920 = vector.broadcast %918 : vector<8x1xf32> to vector<8x256xf32>
    %921 = arith.mulf %919, %920 : vector<8x256xf32>
    %922 = arith.addf %912, %921 : vector<8x256xf32>
    %923 = vector.extract_strided_slice %916 {offsets = [1, 0], sizes = [1, 256], strides = [1, 1]} : vector<8x256xf32> to vector<1x256xf32>
    %c0_263 = arith.constant 0 : index
    %c65 = arith.constant 65 : index
    %924 = vector.load %arg3[%c0_263, %c65] : memref<8x72xf32, #tpu.memory_space<vmem>>, vector<8x1xf32>
    %925 = vector.broadcast %923 : vector<1x256xf32> to vector<8x256xf32>
    %926 = vector.broadcast %924 : vector<8x1xf32> to vector<8x256xf32>
    %927 = arith.mulf %925, %926 : vector<8x256xf32>
    %928 = arith.addf %922, %927 : vector<8x256xf32>
    %929 = vector.extract_strided_slice %916 {offsets = [2, 0], sizes = [1, 256], strides = [1, 1]} : vector<8x256xf32> to vector<1x256xf32>
    %c0_264 = arith.constant 0 : index
    %c66 = arith.constant 66 : index
    %930 = vector.load %arg3[%c0_264, %c66] : memref<8x72xf32, #tpu.memory_space<vmem>>, vector<8x1xf32>
    %931 = vector.broadcast %929 : vector<1x256xf32> to vector<8x256xf32>
    %932 = vector.broadcast %930 : vector<8x1xf32> to vector<8x256xf32>
    %933 = arith.mulf %931, %932 : vector<8x256xf32>
    %934 = arith.addf %928, %933 : vector<8x256xf32>
    %935 = vector.extract_strided_slice %916 {offsets = [3, 0], sizes = [1, 256], strides = [1, 1]} : vector<8x256xf32> to vector<1x256xf32>
    %c0_265 = arith.constant 0 : index
    %c67 = arith.constant 67 : index
    %936 = vector.load %arg3[%c0_265, %c67] : memref<8x72xf32, #tpu.memory_space<vmem>>, vector<8x1xf32>
    %937 = vector.broadcast %935 : vector<1x256xf32> to vector<8x256xf32>
    %938 = vector.broadcast %936 : vector<8x1xf32> to vector<8x256xf32>
    %939 = arith.mulf %937, %938 : vector<8x256xf32>
    %940 = arith.addf %934, %939 : vector<8x256xf32>
    %941 = vector.extract_strided_slice %916 {offsets = [4, 0], sizes = [1, 256], strides = [1, 1]} : vector<8x256xf32> to vector<1x256xf32>
    %c0_266 = arith.constant 0 : index
    %c68 = arith.constant 68 : index
    %942 = vector.load %arg3[%c0_266, %c68] : memref<8x72xf32, #tpu.memory_space<vmem>>, vector<8x1xf32>
    %943 = vector.broadcast %941 : vector<1x256xf32> to vector<8x256xf32>
    %944 = vector.broadcast %942 : vector<8x1xf32> to vector<8x256xf32>
    %945 = arith.mulf %943, %944 : vector<8x256xf32>
    %946 = arith.addf %940, %945 : vector<8x256xf32>
    %947 = vector.extract_strided_slice %916 {offsets = [5, 0], sizes = [1, 256], strides = [1, 1]} : vector<8x256xf32> to vector<1x256xf32>
    %c0_267 = arith.constant 0 : index
    %c69 = arith.constant 69 : index
    %948 = vector.load %arg3[%c0_267, %c69] : memref<8x72xf32, #tpu.memory_space<vmem>>, vector<8x1xf32>
    %949 = vector.broadcast %947 : vector<1x256xf32> to vector<8x256xf32>
    %950 = vector.broadcast %948 : vector<8x1xf32> to vector<8x256xf32>
    %951 = arith.mulf %949, %950 : vector<8x256xf32>
    %952 = arith.addf %946, %951 : vector<8x256xf32>
    %953 = vector.extract_strided_slice %916 {offsets = [6, 0], sizes = [1, 256], strides = [1, 1]} : vector<8x256xf32> to vector<1x256xf32>
    %c0_268 = arith.constant 0 : index
    %c70 = arith.constant 70 : index
    %954 = vector.load %arg3[%c0_268, %c70] : memref<8x72xf32, #tpu.memory_space<vmem>>, vector<8x1xf32>
    %955 = vector.broadcast %953 : vector<1x256xf32> to vector<8x256xf32>
    %956 = vector.broadcast %954 : vector<8x1xf32> to vector<8x256xf32>
    %957 = arith.mulf %955, %956 : vector<8x256xf32>
    %958 = arith.addf %952, %957 : vector<8x256xf32>
    %959 = vector.extract_strided_slice %916 {offsets = [7, 0], sizes = [1, 256], strides = [1, 1]} : vector<8x256xf32> to vector<1x256xf32>
    %c0_269 = arith.constant 0 : index
    %c71 = arith.constant 71 : index
    %960 = vector.load %arg3[%c0_269, %c71] : memref<8x72xf32, #tpu.memory_space<vmem>>, vector<8x1xf32>
    %961 = vector.broadcast %959 : vector<1x256xf32> to vector<8x256xf32>
    %962 = vector.broadcast %960 : vector<8x1xf32> to vector<8x256xf32>
    %963 = arith.mulf %961, %962 : vector<8x256xf32>
    %964 = arith.addf %958, %963 : vector<8x256xf32>
    %cst_270 = arith.constant 0.000000e+00 : f32
    %965 = vector.broadcast %cst_270 : f32 to vector<8x256xf32>
    %c17_i32_271 = arith.constant 17 : i32
    %966 = tpu.dynamic_rotate %499 by %c17_i32_271 dim 1 : vector<8x256xf32>, i32 -> vector<8x256xf32>
    %c0_272 = arith.constant 0 : index
    %c0_273 = arith.constant 0 : index
    %967 = vector.load %arg4[%c0_272, %c0_273] : memref<9x256xf32, #tpu.memory_space<vmem>>, vector<1x256xf32>
    %968 = vector.broadcast %967 : vector<1x256xf32> to vector<8x256xf32>
    %969 = arith.mulf %966, %968 : vector<8x256xf32>
    %970 = vector.extract_strided_slice %969 {offsets = [0, 0], sizes = [1, 256], strides = [1, 1]} : vector<8x256xf32> to vector<1x256xf32>
    %c0_274 = arith.constant 0 : index
    %c0_275 = arith.constant 0 : index
    %971 = vector.load %arg3[%c0_274, %c0_275] : memref<8x72xf32, #tpu.memory_space<vmem>>, vector<8x1xf32>
    %972 = vector.broadcast %970 : vector<1x256xf32> to vector<8x256xf32>
    %973 = vector.broadcast %971 : vector<8x1xf32> to vector<8x256xf32>
    %974 = arith.mulf %972, %973 : vector<8x256xf32>
    %975 = arith.addf %965, %974 : vector<8x256xf32>
    %976 = vector.extract_strided_slice %969 {offsets = [1, 0], sizes = [1, 256], strides = [1, 1]} : vector<8x256xf32> to vector<1x256xf32>
    %c0_276 = arith.constant 0 : index
    %c1_277 = arith.constant 1 : index
    %977 = vector.load %arg3[%c0_276, %c1_277] : memref<8x72xf32, #tpu.memory_space<vmem>>, vector<8x1xf32>
    %978 = vector.broadcast %976 : vector<1x256xf32> to vector<8x256xf32>
    %979 = vector.broadcast %977 : vector<8x1xf32> to vector<8x256xf32>
    %980 = arith.mulf %978, %979 : vector<8x256xf32>
    %981 = arith.addf %975, %980 : vector<8x256xf32>
    %982 = vector.extract_strided_slice %969 {offsets = [2, 0], sizes = [1, 256], strides = [1, 1]} : vector<8x256xf32> to vector<1x256xf32>
    %c0_278 = arith.constant 0 : index
    %c2_279 = arith.constant 2 : index
    %983 = vector.load %arg3[%c0_278, %c2_279] : memref<8x72xf32, #tpu.memory_space<vmem>>, vector<8x1xf32>
    %984 = vector.broadcast %982 : vector<1x256xf32> to vector<8x256xf32>
    %985 = vector.broadcast %983 : vector<8x1xf32> to vector<8x256xf32>
    %986 = arith.mulf %984, %985 : vector<8x256xf32>
    %987 = arith.addf %981, %986 : vector<8x256xf32>
    %988 = vector.extract_strided_slice %969 {offsets = [3, 0], sizes = [1, 256], strides = [1, 1]} : vector<8x256xf32> to vector<1x256xf32>
    %c0_280 = arith.constant 0 : index
    %c3_281 = arith.constant 3 : index
    %989 = vector.load %arg3[%c0_280, %c3_281] : memref<8x72xf32, #tpu.memory_space<vmem>>, vector<8x1xf32>
    %990 = vector.broadcast %988 : vector<1x256xf32> to vector<8x256xf32>
    %991 = vector.broadcast %989 : vector<8x1xf32> to vector<8x256xf32>
    %992 = arith.mulf %990, %991 : vector<8x256xf32>
    %993 = arith.addf %987, %992 : vector<8x256xf32>
    %994 = vector.extract_strided_slice %969 {offsets = [4, 0], sizes = [1, 256], strides = [1, 1]} : vector<8x256xf32> to vector<1x256xf32>
    %c0_282 = arith.constant 0 : index
    %c4_283 = arith.constant 4 : index
    %995 = vector.load %arg3[%c0_282, %c4_283] : memref<8x72xf32, #tpu.memory_space<vmem>>, vector<8x1xf32>
    %996 = vector.broadcast %994 : vector<1x256xf32> to vector<8x256xf32>
    %997 = vector.broadcast %995 : vector<8x1xf32> to vector<8x256xf32>
    %998 = arith.mulf %996, %997 : vector<8x256xf32>
    %999 = arith.addf %993, %998 : vector<8x256xf32>
    %1000 = vector.extract_strided_slice %969 {offsets = [5, 0], sizes = [1, 256], strides = [1, 1]} : vector<8x256xf32> to vector<1x256xf32>
    %c0_284 = arith.constant 0 : index
    %c5_285 = arith.constant 5 : index
    %1001 = vector.load %arg3[%c0_284, %c5_285] : memref<8x72xf32, #tpu.memory_space<vmem>>, vector<8x1xf32>
    %1002 = vector.broadcast %1000 : vector<1x256xf32> to vector<8x256xf32>
    %1003 = vector.broadcast %1001 : vector<8x1xf32> to vector<8x256xf32>
    %1004 = arith.mulf %1002, %1003 : vector<8x256xf32>
    %1005 = arith.addf %999, %1004 : vector<8x256xf32>
    %1006 = vector.extract_strided_slice %969 {offsets = [6, 0], sizes = [1, 256], strides = [1, 1]} : vector<8x256xf32> to vector<1x256xf32>
    %c0_286 = arith.constant 0 : index
    %c6_287 = arith.constant 6 : index
    %1007 = vector.load %arg3[%c0_286, %c6_287] : memref<8x72xf32, #tpu.memory_space<vmem>>, vector<8x1xf32>
    %1008 = vector.broadcast %1006 : vector<1x256xf32> to vector<8x256xf32>
    %1009 = vector.broadcast %1007 : vector<8x1xf32> to vector<8x256xf32>
    %1010 = arith.mulf %1008, %1009 : vector<8x256xf32>
    %1011 = arith.addf %1005, %1010 : vector<8x256xf32>
    %1012 = vector.extract_strided_slice %969 {offsets = [7, 0], sizes = [1, 256], strides = [1, 1]} : vector<8x256xf32> to vector<1x256xf32>
    %c0_288 = arith.constant 0 : index
    %c7_289 = arith.constant 7 : index
    %1013 = vector.load %arg3[%c0_288, %c7_289] : memref<8x72xf32, #tpu.memory_space<vmem>>, vector<8x1xf32>
    %1014 = vector.broadcast %1012 : vector<1x256xf32> to vector<8x256xf32>
    %1015 = vector.broadcast %1013 : vector<8x1xf32> to vector<8x256xf32>
    %1016 = arith.mulf %1014, %1015 : vector<8x256xf32>
    %1017 = arith.addf %1011, %1016 : vector<8x256xf32>
    %c16_i32_290 = arith.constant 16 : i32
    %1018 = tpu.dynamic_rotate %499 by %c16_i32_290 dim 1 : vector<8x256xf32>, i32 -> vector<8x256xf32>
    %c1_291 = arith.constant 1 : index
    %c0_292 = arith.constant 0 : index
    %1019 = vector.load %arg4[%c1_291, %c0_292] : memref<9x256xf32, #tpu.memory_space<vmem>>, vector<1x256xf32>
    %1020 = vector.broadcast %1019 : vector<1x256xf32> to vector<8x256xf32>
    %1021 = arith.mulf %1018, %1020 : vector<8x256xf32>
    %1022 = vector.extract_strided_slice %1021 {offsets = [0, 0], sizes = [1, 256], strides = [1, 1]} : vector<8x256xf32> to vector<1x256xf32>
    %c0_293 = arith.constant 0 : index
    %c8_294 = arith.constant 8 : index
    %1023 = vector.load %arg3[%c0_293, %c8_294] : memref<8x72xf32, #tpu.memory_space<vmem>>, vector<8x1xf32>
    %1024 = vector.broadcast %1022 : vector<1x256xf32> to vector<8x256xf32>
    %1025 = vector.broadcast %1023 : vector<8x1xf32> to vector<8x256xf32>
    %1026 = arith.mulf %1024, %1025 : vector<8x256xf32>
    %1027 = arith.addf %1017, %1026 : vector<8x256xf32>
    %1028 = vector.extract_strided_slice %1021 {offsets = [1, 0], sizes = [1, 256], strides = [1, 1]} : vector<8x256xf32> to vector<1x256xf32>
    %c0_295 = arith.constant 0 : index
    %c9_296 = arith.constant 9 : index
    %1029 = vector.load %arg3[%c0_295, %c9_296] : memref<8x72xf32, #tpu.memory_space<vmem>>, vector<8x1xf32>
    %1030 = vector.broadcast %1028 : vector<1x256xf32> to vector<8x256xf32>
    %1031 = vector.broadcast %1029 : vector<8x1xf32> to vector<8x256xf32>
    %1032 = arith.mulf %1030, %1031 : vector<8x256xf32>
    %1033 = arith.addf %1027, %1032 : vector<8x256xf32>
    %1034 = vector.extract_strided_slice %1021 {offsets = [2, 0], sizes = [1, 256], strides = [1, 1]} : vector<8x256xf32> to vector<1x256xf32>
    %c0_297 = arith.constant 0 : index
    %c10_298 = arith.constant 10 : index
    %1035 = vector.load %arg3[%c0_297, %c10_298] : memref<8x72xf32, #tpu.memory_space<vmem>>, vector<8x1xf32>
    %1036 = vector.broadcast %1034 : vector<1x256xf32> to vector<8x256xf32>
    %1037 = vector.broadcast %1035 : vector<8x1xf32> to vector<8x256xf32>
    %1038 = arith.mulf %1036, %1037 : vector<8x256xf32>
    %1039 = arith.addf %1033, %1038 : vector<8x256xf32>
    %1040 = vector.extract_strided_slice %1021 {offsets = [3, 0], sizes = [1, 256], strides = [1, 1]} : vector<8x256xf32> to vector<1x256xf32>
    %c0_299 = arith.constant 0 : index
    %c11_300 = arith.constant 11 : index
    %1041 = vector.load %arg3[%c0_299, %c11_300] : memref<8x72xf32, #tpu.memory_space<vmem>>, vector<8x1xf32>
    %1042 = vector.broadcast %1040 : vector<1x256xf32> to vector<8x256xf32>
    %1043 = vector.broadcast %1041 : vector<8x1xf32> to vector<8x256xf32>
    %1044 = arith.mulf %1042, %1043 : vector<8x256xf32>
    %1045 = arith.addf %1039, %1044 : vector<8x256xf32>
    %1046 = vector.extract_strided_slice %1021 {offsets = [4, 0], sizes = [1, 256], strides = [1, 1]} : vector<8x256xf32> to vector<1x256xf32>
    %c0_301 = arith.constant 0 : index
    %c12_302 = arith.constant 12 : index
    %1047 = vector.load %arg3[%c0_301, %c12_302] : memref<8x72xf32, #tpu.memory_space<vmem>>, vector<8x1xf32>
    %1048 = vector.broadcast %1046 : vector<1x256xf32> to vector<8x256xf32>
    %1049 = vector.broadcast %1047 : vector<8x1xf32> to vector<8x256xf32>
    %1050 = arith.mulf %1048, %1049 : vector<8x256xf32>
    %1051 = arith.addf %1045, %1050 : vector<8x256xf32>
    %1052 = vector.extract_strided_slice %1021 {offsets = [5, 0], sizes = [1, 256], strides = [1, 1]} : vector<8x256xf32> to vector<1x256xf32>
    %c0_303 = arith.constant 0 : index
    %c13_304 = arith.constant 13 : index
    %1053 = vector.load %arg3[%c0_303, %c13_304] : memref<8x72xf32, #tpu.memory_space<vmem>>, vector<8x1xf32>
    %1054 = vector.broadcast %1052 : vector<1x256xf32> to vector<8x256xf32>
    %1055 = vector.broadcast %1053 : vector<8x1xf32> to vector<8x256xf32>
    %1056 = arith.mulf %1054, %1055 : vector<8x256xf32>
    %1057 = arith.addf %1051, %1056 : vector<8x256xf32>
    %1058 = vector.extract_strided_slice %1021 {offsets = [6, 0], sizes = [1, 256], strides = [1, 1]} : vector<8x256xf32> to vector<1x256xf32>
    %c0_305 = arith.constant 0 : index
    %c14_306 = arith.constant 14 : index
    %1059 = vector.load %arg3[%c0_305, %c14_306] : memref<8x72xf32, #tpu.memory_space<vmem>>, vector<8x1xf32>
    %1060 = vector.broadcast %1058 : vector<1x256xf32> to vector<8x256xf32>
    %1061 = vector.broadcast %1059 : vector<8x1xf32> to vector<8x256xf32>
    %1062 = arith.mulf %1060, %1061 : vector<8x256xf32>
    %1063 = arith.addf %1057, %1062 : vector<8x256xf32>
    %1064 = vector.extract_strided_slice %1021 {offsets = [7, 0], sizes = [1, 256], strides = [1, 1]} : vector<8x256xf32> to vector<1x256xf32>
    %c0_307 = arith.constant 0 : index
    %c15_308 = arith.constant 15 : index
    %1065 = vector.load %arg3[%c0_307, %c15_308] : memref<8x72xf32, #tpu.memory_space<vmem>>, vector<8x1xf32>
    %1066 = vector.broadcast %1064 : vector<1x256xf32> to vector<8x256xf32>
    %1067 = vector.broadcast %1065 : vector<8x1xf32> to vector<8x256xf32>
    %1068 = arith.mulf %1066, %1067 : vector<8x256xf32>
    %1069 = arith.addf %1063, %1068 : vector<8x256xf32>
    %c15_i32_309 = arith.constant 15 : i32
    %1070 = tpu.dynamic_rotate %499 by %c15_i32_309 dim 1 : vector<8x256xf32>, i32 -> vector<8x256xf32>
    %c2_310 = arith.constant 2 : index
    %c0_311 = arith.constant 0 : index
    %1071 = vector.load %arg4[%c2_310, %c0_311] : memref<9x256xf32, #tpu.memory_space<vmem>>, vector<1x256xf32>
    %1072 = vector.broadcast %1071 : vector<1x256xf32> to vector<8x256xf32>
    %1073 = arith.mulf %1070, %1072 : vector<8x256xf32>
    %1074 = vector.extract_strided_slice %1073 {offsets = [0, 0], sizes = [1, 256], strides = [1, 1]} : vector<8x256xf32> to vector<1x256xf32>
    %c0_312 = arith.constant 0 : index
    %c16_313 = arith.constant 16 : index
    %1075 = vector.load %arg3[%c0_312, %c16_313] : memref<8x72xf32, #tpu.memory_space<vmem>>, vector<8x1xf32>
    %1076 = vector.broadcast %1074 : vector<1x256xf32> to vector<8x256xf32>
    %1077 = vector.broadcast %1075 : vector<8x1xf32> to vector<8x256xf32>
    %1078 = arith.mulf %1076, %1077 : vector<8x256xf32>
    %1079 = arith.addf %1069, %1078 : vector<8x256xf32>
    %1080 = vector.extract_strided_slice %1073 {offsets = [1, 0], sizes = [1, 256], strides = [1, 1]} : vector<8x256xf32> to vector<1x256xf32>
    %c0_314 = arith.constant 0 : index
    %c17_315 = arith.constant 17 : index
    %1081 = vector.load %arg3[%c0_314, %c17_315] : memref<8x72xf32, #tpu.memory_space<vmem>>, vector<8x1xf32>
    %1082 = vector.broadcast %1080 : vector<1x256xf32> to vector<8x256xf32>
    %1083 = vector.broadcast %1081 : vector<8x1xf32> to vector<8x256xf32>
    %1084 = arith.mulf %1082, %1083 : vector<8x256xf32>
    %1085 = arith.addf %1079, %1084 : vector<8x256xf32>
    %1086 = vector.extract_strided_slice %1073 {offsets = [2, 0], sizes = [1, 256], strides = [1, 1]} : vector<8x256xf32> to vector<1x256xf32>
    %c0_316 = arith.constant 0 : index
    %c18_317 = arith.constant 18 : index
    %1087 = vector.load %arg3[%c0_316, %c18_317] : memref<8x72xf32, #tpu.memory_space<vmem>>, vector<8x1xf32>
    %1088 = vector.broadcast %1086 : vector<1x256xf32> to vector<8x256xf32>
    %1089 = vector.broadcast %1087 : vector<8x1xf32> to vector<8x256xf32>
    %1090 = arith.mulf %1088, %1089 : vector<8x256xf32>
    %1091 = arith.addf %1085, %1090 : vector<8x256xf32>
    %1092 = vector.extract_strided_slice %1073 {offsets = [3, 0], sizes = [1, 256], strides = [1, 1]} : vector<8x256xf32> to vector<1x256xf32>
    %c0_318 = arith.constant 0 : index
    %c19_319 = arith.constant 19 : index
    %1093 = vector.load %arg3[%c0_318, %c19_319] : memref<8x72xf32, #tpu.memory_space<vmem>>, vector<8x1xf32>
    %1094 = vector.broadcast %1092 : vector<1x256xf32> to vector<8x256xf32>
    %1095 = vector.broadcast %1093 : vector<8x1xf32> to vector<8x256xf32>
    %1096 = arith.mulf %1094, %1095 : vector<8x256xf32>
    %1097 = arith.addf %1091, %1096 : vector<8x256xf32>
    %1098 = vector.extract_strided_slice %1073 {offsets = [4, 0], sizes = [1, 256], strides = [1, 1]} : vector<8x256xf32> to vector<1x256xf32>
    %c0_320 = arith.constant 0 : index
    %c20_321 = arith.constant 20 : index
    %1099 = vector.load %arg3[%c0_320, %c20_321] : memref<8x72xf32, #tpu.memory_space<vmem>>, vector<8x1xf32>
    %1100 = vector.broadcast %1098 : vector<1x256xf32> to vector<8x256xf32>
    %1101 = vector.broadcast %1099 : vector<8x1xf32> to vector<8x256xf32>
    %1102 = arith.mulf %1100, %1101 : vector<8x256xf32>
    %1103 = arith.addf %1097, %1102 : vector<8x256xf32>
    %1104 = vector.extract_strided_slice %1073 {offsets = [5, 0], sizes = [1, 256], strides = [1, 1]} : vector<8x256xf32> to vector<1x256xf32>
    %c0_322 = arith.constant 0 : index
    %c21_323 = arith.constant 21 : index
    %1105 = vector.load %arg3[%c0_322, %c21_323] : memref<8x72xf32, #tpu.memory_space<vmem>>, vector<8x1xf32>
    %1106 = vector.broadcast %1104 : vector<1x256xf32> to vector<8x256xf32>
    %1107 = vector.broadcast %1105 : vector<8x1xf32> to vector<8x256xf32>
    %1108 = arith.mulf %1106, %1107 : vector<8x256xf32>
    %1109 = arith.addf %1103, %1108 : vector<8x256xf32>
    %1110 = vector.extract_strided_slice %1073 {offsets = [6, 0], sizes = [1, 256], strides = [1, 1]} : vector<8x256xf32> to vector<1x256xf32>
    %c0_324 = arith.constant 0 : index
    %c22_325 = arith.constant 22 : index
    %1111 = vector.load %arg3[%c0_324, %c22_325] : memref<8x72xf32, #tpu.memory_space<vmem>>, vector<8x1xf32>
    %1112 = vector.broadcast %1110 : vector<1x256xf32> to vector<8x256xf32>
    %1113 = vector.broadcast %1111 : vector<8x1xf32> to vector<8x256xf32>
    %1114 = arith.mulf %1112, %1113 : vector<8x256xf32>
    %1115 = arith.addf %1109, %1114 : vector<8x256xf32>
    %1116 = vector.extract_strided_slice %1073 {offsets = [7, 0], sizes = [1, 256], strides = [1, 1]} : vector<8x256xf32> to vector<1x256xf32>
    %c0_326 = arith.constant 0 : index
    %c23_327 = arith.constant 23 : index
    %1117 = vector.load %arg3[%c0_326, %c23_327] : memref<8x72xf32, #tpu.memory_space<vmem>>, vector<8x1xf32>
    %1118 = vector.broadcast %1116 : vector<1x256xf32> to vector<8x256xf32>
    %1119 = vector.broadcast %1117 : vector<8x1xf32> to vector<8x256xf32>
    %1120 = arith.mulf %1118, %1119 : vector<8x256xf32>
    %1121 = arith.addf %1115, %1120 : vector<8x256xf32>
    %c1_i32_328 = arith.constant 1 : i32
    %1122 = tpu.dynamic_rotate %499 by %c1_i32_328 dim 1 : vector<8x256xf32>, i32 -> vector<8x256xf32>
    %c3_329 = arith.constant 3 : index
    %c0_330 = arith.constant 0 : index
    %1123 = vector.load %arg4[%c3_329, %c0_330] : memref<9x256xf32, #tpu.memory_space<vmem>>, vector<1x256xf32>
    %1124 = vector.broadcast %1123 : vector<1x256xf32> to vector<8x256xf32>
    %1125 = arith.mulf %1122, %1124 : vector<8x256xf32>
    %1126 = vector.extract_strided_slice %1125 {offsets = [0, 0], sizes = [1, 256], strides = [1, 1]} : vector<8x256xf32> to vector<1x256xf32>
    %c0_331 = arith.constant 0 : index
    %c24_332 = arith.constant 24 : index
    %1127 = vector.load %arg3[%c0_331, %c24_332] : memref<8x72xf32, #tpu.memory_space<vmem>>, vector<8x1xf32>
    %1128 = vector.broadcast %1126 : vector<1x256xf32> to vector<8x256xf32>
    %1129 = vector.broadcast %1127 : vector<8x1xf32> to vector<8x256xf32>
    %1130 = arith.mulf %1128, %1129 : vector<8x256xf32>
    %1131 = arith.addf %1121, %1130 : vector<8x256xf32>
    %1132 = vector.extract_strided_slice %1125 {offsets = [1, 0], sizes = [1, 256], strides = [1, 1]} : vector<8x256xf32> to vector<1x256xf32>
    %c0_333 = arith.constant 0 : index
    %c25_334 = arith.constant 25 : index
    %1133 = vector.load %arg3[%c0_333, %c25_334] : memref<8x72xf32, #tpu.memory_space<vmem>>, vector<8x1xf32>
    %1134 = vector.broadcast %1132 : vector<1x256xf32> to vector<8x256xf32>
    %1135 = vector.broadcast %1133 : vector<8x1xf32> to vector<8x256xf32>
    %1136 = arith.mulf %1134, %1135 : vector<8x256xf32>
    %1137 = arith.addf %1131, %1136 : vector<8x256xf32>
    %1138 = vector.extract_strided_slice %1125 {offsets = [2, 0], sizes = [1, 256], strides = [1, 1]} : vector<8x256xf32> to vector<1x256xf32>
    %c0_335 = arith.constant 0 : index
    %c26_336 = arith.constant 26 : index
    %1139 = vector.load %arg3[%c0_335, %c26_336] : memref<8x72xf32, #tpu.memory_space<vmem>>, vector<8x1xf32>
    %1140 = vector.broadcast %1138 : vector<1x256xf32> to vector<8x256xf32>
    %1141 = vector.broadcast %1139 : vector<8x1xf32> to vector<8x256xf32>
    %1142 = arith.mulf %1140, %1141 : vector<8x256xf32>
    %1143 = arith.addf %1137, %1142 : vector<8x256xf32>
    %1144 = vector.extract_strided_slice %1125 {offsets = [3, 0], sizes = [1, 256], strides = [1, 1]} : vector<8x256xf32> to vector<1x256xf32>
    %c0_337 = arith.constant 0 : index
    %c27_338 = arith.constant 27 : index
    %1145 = vector.load %arg3[%c0_337, %c27_338] : memref<8x72xf32, #tpu.memory_space<vmem>>, vector<8x1xf32>
    %1146 = vector.broadcast %1144 : vector<1x256xf32> to vector<8x256xf32>
    %1147 = vector.broadcast %1145 : vector<8x1xf32> to vector<8x256xf32>
    %1148 = arith.mulf %1146, %1147 : vector<8x256xf32>
    %1149 = arith.addf %1143, %1148 : vector<8x256xf32>
    %1150 = vector.extract_strided_slice %1125 {offsets = [4, 0], sizes = [1, 256], strides = [1, 1]} : vector<8x256xf32> to vector<1x256xf32>
    %c0_339 = arith.constant 0 : index
    %c28_340 = arith.constant 28 : index
    %1151 = vector.load %arg3[%c0_339, %c28_340] : memref<8x72xf32, #tpu.memory_space<vmem>>, vector<8x1xf32>
    %1152 = vector.broadcast %1150 : vector<1x256xf32> to vector<8x256xf32>
    %1153 = vector.broadcast %1151 : vector<8x1xf32> to vector<8x256xf32>
    %1154 = arith.mulf %1152, %1153 : vector<8x256xf32>
    %1155 = arith.addf %1149, %1154 : vector<8x256xf32>
    %1156 = vector.extract_strided_slice %1125 {offsets = [5, 0], sizes = [1, 256], strides = [1, 1]} : vector<8x256xf32> to vector<1x256xf32>
    %c0_341 = arith.constant 0 : index
    %c29_342 = arith.constant 29 : index
    %1157 = vector.load %arg3[%c0_341, %c29_342] : memref<8x72xf32, #tpu.memory_space<vmem>>, vector<8x1xf32>
    %1158 = vector.broadcast %1156 : vector<1x256xf32> to vector<8x256xf32>
    %1159 = vector.broadcast %1157 : vector<8x1xf32> to vector<8x256xf32>
    %1160 = arith.mulf %1158, %1159 : vector<8x256xf32>
    %1161 = arith.addf %1155, %1160 : vector<8x256xf32>
    %1162 = vector.extract_strided_slice %1125 {offsets = [6, 0], sizes = [1, 256], strides = [1, 1]} : vector<8x256xf32> to vector<1x256xf32>
    %c0_343 = arith.constant 0 : index
    %c30_344 = arith.constant 30 : index
    %1163 = vector.load %arg3[%c0_343, %c30_344] : memref<8x72xf32, #tpu.memory_space<vmem>>, vector<8x1xf32>
    %1164 = vector.broadcast %1162 : vector<1x256xf32> to vector<8x256xf32>
    %1165 = vector.broadcast %1163 : vector<8x1xf32> to vector<8x256xf32>
    %1166 = arith.mulf %1164, %1165 : vector<8x256xf32>
    %1167 = arith.addf %1161, %1166 : vector<8x256xf32>
    %1168 = vector.extract_strided_slice %1125 {offsets = [7, 0], sizes = [1, 256], strides = [1, 1]} : vector<8x256xf32> to vector<1x256xf32>
    %c0_345 = arith.constant 0 : index
    %c31_346 = arith.constant 31 : index
    %1169 = vector.load %arg3[%c0_345, %c31_346] : memref<8x72xf32, #tpu.memory_space<vmem>>, vector<8x1xf32>
    %1170 = vector.broadcast %1168 : vector<1x256xf32> to vector<8x256xf32>
    %1171 = vector.broadcast %1169 : vector<8x1xf32> to vector<8x256xf32>
    %1172 = arith.mulf %1170, %1171 : vector<8x256xf32>
    %1173 = arith.addf %1167, %1172 : vector<8x256xf32>
    %1174 = vector.extract_strided_slice %499 {offsets = [0, 0], sizes = [1, 256], strides = [1, 1]} : vector<8x256xf32> to vector<1x256xf32>
    %c0_347 = arith.constant 0 : index
    %c32_348 = arith.constant 32 : index
    %1175 = vector.load %arg3[%c0_347, %c32_348] : memref<8x72xf32, #tpu.memory_space<vmem>>, vector<8x1xf32>
    %1176 = vector.broadcast %1174 : vector<1x256xf32> to vector<8x256xf32>
    %1177 = vector.broadcast %1175 : vector<8x1xf32> to vector<8x256xf32>
    %1178 = arith.mulf %1176, %1177 : vector<8x256xf32>
    %1179 = arith.addf %1173, %1178 : vector<8x256xf32>
    %1180 = vector.extract_strided_slice %499 {offsets = [1, 0], sizes = [1, 256], strides = [1, 1]} : vector<8x256xf32> to vector<1x256xf32>
    %c0_349 = arith.constant 0 : index
    %c33_350 = arith.constant 33 : index
    %1181 = vector.load %arg3[%c0_349, %c33_350] : memref<8x72xf32, #tpu.memory_space<vmem>>, vector<8x1xf32>
    %1182 = vector.broadcast %1180 : vector<1x256xf32> to vector<8x256xf32>
    %1183 = vector.broadcast %1181 : vector<8x1xf32> to vector<8x256xf32>
    %1184 = arith.mulf %1182, %1183 : vector<8x256xf32>
    %1185 = arith.addf %1179, %1184 : vector<8x256xf32>
    %1186 = vector.extract_strided_slice %499 {offsets = [2, 0], sizes = [1, 256], strides = [1, 1]} : vector<8x256xf32> to vector<1x256xf32>
    %c0_351 = arith.constant 0 : index
    %c34_352 = arith.constant 34 : index
    %1187 = vector.load %arg3[%c0_351, %c34_352] : memref<8x72xf32, #tpu.memory_space<vmem>>, vector<8x1xf32>
    %1188 = vector.broadcast %1186 : vector<1x256xf32> to vector<8x256xf32>
    %1189 = vector.broadcast %1187 : vector<8x1xf32> to vector<8x256xf32>
    %1190 = arith.mulf %1188, %1189 : vector<8x256xf32>
    %1191 = arith.addf %1185, %1190 : vector<8x256xf32>
    %1192 = vector.extract_strided_slice %499 {offsets = [3, 0], sizes = [1, 256], strides = [1, 1]} : vector<8x256xf32> to vector<1x256xf32>
    %c0_353 = arith.constant 0 : index
    %c35_354 = arith.constant 35 : index
    %1193 = vector.load %arg3[%c0_353, %c35_354] : memref<8x72xf32, #tpu.memory_space<vmem>>, vector<8x1xf32>
    %1194 = vector.broadcast %1192 : vector<1x256xf32> to vector<8x256xf32>
    %1195 = vector.broadcast %1193 : vector<8x1xf32> to vector<8x256xf32>
    %1196 = arith.mulf %1194, %1195 : vector<8x256xf32>
    %1197 = arith.addf %1191, %1196 : vector<8x256xf32>
    %1198 = vector.extract_strided_slice %499 {offsets = [4, 0], sizes = [1, 256], strides = [1, 1]} : vector<8x256xf32> to vector<1x256xf32>
    %c0_355 = arith.constant 0 : index
    %c36_356 = arith.constant 36 : index
    %1199 = vector.load %arg3[%c0_355, %c36_356] : memref<8x72xf32, #tpu.memory_space<vmem>>, vector<8x1xf32>
    %1200 = vector.broadcast %1198 : vector<1x256xf32> to vector<8x256xf32>
    %1201 = vector.broadcast %1199 : vector<8x1xf32> to vector<8x256xf32>
    %1202 = arith.mulf %1200, %1201 : vector<8x256xf32>
    %1203 = arith.addf %1197, %1202 : vector<8x256xf32>
    %1204 = vector.extract_strided_slice %499 {offsets = [5, 0], sizes = [1, 256], strides = [1, 1]} : vector<8x256xf32> to vector<1x256xf32>
    %c0_357 = arith.constant 0 : index
    %c37_358 = arith.constant 37 : index
    %1205 = vector.load %arg3[%c0_357, %c37_358] : memref<8x72xf32, #tpu.memory_space<vmem>>, vector<8x1xf32>
    %1206 = vector.broadcast %1204 : vector<1x256xf32> to vector<8x256xf32>
    %1207 = vector.broadcast %1205 : vector<8x1xf32> to vector<8x256xf32>
    %1208 = arith.mulf %1206, %1207 : vector<8x256xf32>
    %1209 = arith.addf %1203, %1208 : vector<8x256xf32>
    %1210 = vector.extract_strided_slice %499 {offsets = [6, 0], sizes = [1, 256], strides = [1, 1]} : vector<8x256xf32> to vector<1x256xf32>
    %c0_359 = arith.constant 0 : index
    %c38_360 = arith.constant 38 : index
    %1211 = vector.load %arg3[%c0_359, %c38_360] : memref<8x72xf32, #tpu.memory_space<vmem>>, vector<8x1xf32>
    %1212 = vector.broadcast %1210 : vector<1x256xf32> to vector<8x256xf32>
    %1213 = vector.broadcast %1211 : vector<8x1xf32> to vector<8x256xf32>
    %1214 = arith.mulf %1212, %1213 : vector<8x256xf32>
    %1215 = arith.addf %1209, %1214 : vector<8x256xf32>
    %1216 = vector.extract_strided_slice %499 {offsets = [7, 0], sizes = [1, 256], strides = [1, 1]} : vector<8x256xf32> to vector<1x256xf32>
    %c0_361 = arith.constant 0 : index
    %c39_362 = arith.constant 39 : index
    %1217 = vector.load %arg3[%c0_361, %c39_362] : memref<8x72xf32, #tpu.memory_space<vmem>>, vector<8x1xf32>
    %1218 = vector.broadcast %1216 : vector<1x256xf32> to vector<8x256xf32>
    %1219 = vector.broadcast %1217 : vector<8x1xf32> to vector<8x256xf32>
    %1220 = arith.mulf %1218, %1219 : vector<8x256xf32>
    %1221 = arith.addf %1215, %1220 : vector<8x256xf32>
    %c255_i32_363 = arith.constant 255 : i32
    %1222 = tpu.dynamic_rotate %499 by %c255_i32_363 dim 1 : vector<8x256xf32>, i32 -> vector<8x256xf32>
    %c5_364 = arith.constant 5 : index
    %c0_365 = arith.constant 0 : index
    %1223 = vector.load %arg4[%c5_364, %c0_365] : memref<9x256xf32, #tpu.memory_space<vmem>>, vector<1x256xf32>
    %1224 = vector.broadcast %1223 : vector<1x256xf32> to vector<8x256xf32>
    %1225 = arith.mulf %1222, %1224 : vector<8x256xf32>
    %1226 = vector.extract_strided_slice %1225 {offsets = [0, 0], sizes = [1, 256], strides = [1, 1]} : vector<8x256xf32> to vector<1x256xf32>
    %c0_366 = arith.constant 0 : index
    %c40_367 = arith.constant 40 : index
    %1227 = vector.load %arg3[%c0_366, %c40_367] : memref<8x72xf32, #tpu.memory_space<vmem>>, vector<8x1xf32>
    %1228 = vector.broadcast %1226 : vector<1x256xf32> to vector<8x256xf32>
    %1229 = vector.broadcast %1227 : vector<8x1xf32> to vector<8x256xf32>
    %1230 = arith.mulf %1228, %1229 : vector<8x256xf32>
    %1231 = arith.addf %1221, %1230 : vector<8x256xf32>
    %1232 = vector.extract_strided_slice %1225 {offsets = [1, 0], sizes = [1, 256], strides = [1, 1]} : vector<8x256xf32> to vector<1x256xf32>
    %c0_368 = arith.constant 0 : index
    %c41_369 = arith.constant 41 : index
    %1233 = vector.load %arg3[%c0_368, %c41_369] : memref<8x72xf32, #tpu.memory_space<vmem>>, vector<8x1xf32>
    %1234 = vector.broadcast %1232 : vector<1x256xf32> to vector<8x256xf32>
    %1235 = vector.broadcast %1233 : vector<8x1xf32> to vector<8x256xf32>
    %1236 = arith.mulf %1234, %1235 : vector<8x256xf32>
    %1237 = arith.addf %1231, %1236 : vector<8x256xf32>
    %1238 = vector.extract_strided_slice %1225 {offsets = [2, 0], sizes = [1, 256], strides = [1, 1]} : vector<8x256xf32> to vector<1x256xf32>
    %c0_370 = arith.constant 0 : index
    %c42_371 = arith.constant 42 : index
    %1239 = vector.load %arg3[%c0_370, %c42_371] : memref<8x72xf32, #tpu.memory_space<vmem>>, vector<8x1xf32>
    %1240 = vector.broadcast %1238 : vector<1x256xf32> to vector<8x256xf32>
    %1241 = vector.broadcast %1239 : vector<8x1xf32> to vector<8x256xf32>
    %1242 = arith.mulf %1240, %1241 : vector<8x256xf32>
    %1243 = arith.addf %1237, %1242 : vector<8x256xf32>
    %1244 = vector.extract_strided_slice %1225 {offsets = [3, 0], sizes = [1, 256], strides = [1, 1]} : vector<8x256xf32> to vector<1x256xf32>
    %c0_372 = arith.constant 0 : index
    %c43_373 = arith.constant 43 : index
    %1245 = vector.load %arg3[%c0_372, %c43_373] : memref<8x72xf32, #tpu.memory_space<vmem>>, vector<8x1xf32>
    %1246 = vector.broadcast %1244 : vector<1x256xf32> to vector<8x256xf32>
    %1247 = vector.broadcast %1245 : vector<8x1xf32> to vector<8x256xf32>
    %1248 = arith.mulf %1246, %1247 : vector<8x256xf32>
    %1249 = arith.addf %1243, %1248 : vector<8x256xf32>
    %1250 = vector.extract_strided_slice %1225 {offsets = [4, 0], sizes = [1, 256], strides = [1, 1]} : vector<8x256xf32> to vector<1x256xf32>
    %c0_374 = arith.constant 0 : index
    %c44_375 = arith.constant 44 : index
    %1251 = vector.load %arg3[%c0_374, %c44_375] : memref<8x72xf32, #tpu.memory_space<vmem>>, vector<8x1xf32>
    %1252 = vector.broadcast %1250 : vector<1x256xf32> to vector<8x256xf32>
    %1253 = vector.broadcast %1251 : vector<8x1xf32> to vector<8x256xf32>
    %1254 = arith.mulf %1252, %1253 : vector<8x256xf32>
    %1255 = arith.addf %1249, %1254 : vector<8x256xf32>
    %1256 = vector.extract_strided_slice %1225 {offsets = [5, 0], sizes = [1, 256], strides = [1, 1]} : vector<8x256xf32> to vector<1x256xf32>
    %c0_376 = arith.constant 0 : index
    %c45_377 = arith.constant 45 : index
    %1257 = vector.load %arg3[%c0_376, %c45_377] : memref<8x72xf32, #tpu.memory_space<vmem>>, vector<8x1xf32>
    %1258 = vector.broadcast %1256 : vector<1x256xf32> to vector<8x256xf32>
    %1259 = vector.broadcast %1257 : vector<8x1xf32> to vector<8x256xf32>
    %1260 = arith.mulf %1258, %1259 : vector<8x256xf32>
    %1261 = arith.addf %1255, %1260 : vector<8x256xf32>
    %1262 = vector.extract_strided_slice %1225 {offsets = [6, 0], sizes = [1, 256], strides = [1, 1]} : vector<8x256xf32> to vector<1x256xf32>
    %c0_378 = arith.constant 0 : index
    %c46_379 = arith.constant 46 : index
    %1263 = vector.load %arg3[%c0_378, %c46_379] : memref<8x72xf32, #tpu.memory_space<vmem>>, vector<8x1xf32>
    %1264 = vector.broadcast %1262 : vector<1x256xf32> to vector<8x256xf32>
    %1265 = vector.broadcast %1263 : vector<8x1xf32> to vector<8x256xf32>
    %1266 = arith.mulf %1264, %1265 : vector<8x256xf32>
    %1267 = arith.addf %1261, %1266 : vector<8x256xf32>
    %1268 = vector.extract_strided_slice %1225 {offsets = [7, 0], sizes = [1, 256], strides = [1, 1]} : vector<8x256xf32> to vector<1x256xf32>
    %c0_380 = arith.constant 0 : index
    %c47_381 = arith.constant 47 : index
    %1269 = vector.load %arg3[%c0_380, %c47_381] : memref<8x72xf32, #tpu.memory_space<vmem>>, vector<8x1xf32>
    %1270 = vector.broadcast %1268 : vector<1x256xf32> to vector<8x256xf32>
    %1271 = vector.broadcast %1269 : vector<8x1xf32> to vector<8x256xf32>
    %1272 = arith.mulf %1270, %1271 : vector<8x256xf32>
    %1273 = arith.addf %1267, %1272 : vector<8x256xf32>
    %c241_i32_382 = arith.constant 241 : i32
    %1274 = tpu.dynamic_rotate %499 by %c241_i32_382 dim 1 : vector<8x256xf32>, i32 -> vector<8x256xf32>
    %c6_383 = arith.constant 6 : index
    %c0_384 = arith.constant 0 : index
    %1275 = vector.load %arg4[%c6_383, %c0_384] : memref<9x256xf32, #tpu.memory_space<vmem>>, vector<1x256xf32>
    %1276 = vector.broadcast %1275 : vector<1x256xf32> to vector<8x256xf32>
    %1277 = arith.mulf %1274, %1276 : vector<8x256xf32>
    %1278 = vector.extract_strided_slice %1277 {offsets = [0, 0], sizes = [1, 256], strides = [1, 1]} : vector<8x256xf32> to vector<1x256xf32>
    %c0_385 = arith.constant 0 : index
    %c48_386 = arith.constant 48 : index
    %1279 = vector.load %arg3[%c0_385, %c48_386] : memref<8x72xf32, #tpu.memory_space<vmem>>, vector<8x1xf32>
    %1280 = vector.broadcast %1278 : vector<1x256xf32> to vector<8x256xf32>
    %1281 = vector.broadcast %1279 : vector<8x1xf32> to vector<8x256xf32>
    %1282 = arith.mulf %1280, %1281 : vector<8x256xf32>
    %1283 = arith.addf %1273, %1282 : vector<8x256xf32>
    %1284 = vector.extract_strided_slice %1277 {offsets = [1, 0], sizes = [1, 256], strides = [1, 1]} : vector<8x256xf32> to vector<1x256xf32>
    %c0_387 = arith.constant 0 : index
    %c49_388 = arith.constant 49 : index
    %1285 = vector.load %arg3[%c0_387, %c49_388] : memref<8x72xf32, #tpu.memory_space<vmem>>, vector<8x1xf32>
    %1286 = vector.broadcast %1284 : vector<1x256xf32> to vector<8x256xf32>
    %1287 = vector.broadcast %1285 : vector<8x1xf32> to vector<8x256xf32>
    %1288 = arith.mulf %1286, %1287 : vector<8x256xf32>
    %1289 = arith.addf %1283, %1288 : vector<8x256xf32>
    %1290 = vector.extract_strided_slice %1277 {offsets = [2, 0], sizes = [1, 256], strides = [1, 1]} : vector<8x256xf32> to vector<1x256xf32>
    %c0_389 = arith.constant 0 : index
    %c50_390 = arith.constant 50 : index
    %1291 = vector.load %arg3[%c0_389, %c50_390] : memref<8x72xf32, #tpu.memory_space<vmem>>, vector<8x1xf32>
    %1292 = vector.broadcast %1290 : vector<1x256xf32> to vector<8x256xf32>
    %1293 = vector.broadcast %1291 : vector<8x1xf32> to vector<8x256xf32>
    %1294 = arith.mulf %1292, %1293 : vector<8x256xf32>
    %1295 = arith.addf %1289, %1294 : vector<8x256xf32>
    %1296 = vector.extract_strided_slice %1277 {offsets = [3, 0], sizes = [1, 256], strides = [1, 1]} : vector<8x256xf32> to vector<1x256xf32>
    %c0_391 = arith.constant 0 : index
    %c51_392 = arith.constant 51 : index
    %1297 = vector.load %arg3[%c0_391, %c51_392] : memref<8x72xf32, #tpu.memory_space<vmem>>, vector<8x1xf32>
    %1298 = vector.broadcast %1296 : vector<1x256xf32> to vector<8x256xf32>
    %1299 = vector.broadcast %1297 : vector<8x1xf32> to vector<8x256xf32>
    %1300 = arith.mulf %1298, %1299 : vector<8x256xf32>
    %1301 = arith.addf %1295, %1300 : vector<8x256xf32>
    %1302 = vector.extract_strided_slice %1277 {offsets = [4, 0], sizes = [1, 256], strides = [1, 1]} : vector<8x256xf32> to vector<1x256xf32>
    %c0_393 = arith.constant 0 : index
    %c52_394 = arith.constant 52 : index
    %1303 = vector.load %arg3[%c0_393, %c52_394] : memref<8x72xf32, #tpu.memory_space<vmem>>, vector<8x1xf32>
    %1304 = vector.broadcast %1302 : vector<1x256xf32> to vector<8x256xf32>
    %1305 = vector.broadcast %1303 : vector<8x1xf32> to vector<8x256xf32>
    %1306 = arith.mulf %1304, %1305 : vector<8x256xf32>
    %1307 = arith.addf %1301, %1306 : vector<8x256xf32>
    %1308 = vector.extract_strided_slice %1277 {offsets = [5, 0], sizes = [1, 256], strides = [1, 1]} : vector<8x256xf32> to vector<1x256xf32>
    %c0_395 = arith.constant 0 : index
    %c53_396 = arith.constant 53 : index
    %1309 = vector.load %arg3[%c0_395, %c53_396] : memref<8x72xf32, #tpu.memory_space<vmem>>, vector<8x1xf32>
    %1310 = vector.broadcast %1308 : vector<1x256xf32> to vector<8x256xf32>
    %1311 = vector.broadcast %1309 : vector<8x1xf32> to vector<8x256xf32>
    %1312 = arith.mulf %1310, %1311 : vector<8x256xf32>
    %1313 = arith.addf %1307, %1312 : vector<8x256xf32>
    %1314 = vector.extract_strided_slice %1277 {offsets = [6, 0], sizes = [1, 256], strides = [1, 1]} : vector<8x256xf32> to vector<1x256xf32>
    %c0_397 = arith.constant 0 : index
    %c54_398 = arith.constant 54 : index
    %1315 = vector.load %arg3[%c0_397, %c54_398] : memref<8x72xf32, #tpu.memory_space<vmem>>, vector<8x1xf32>
    %1316 = vector.broadcast %1314 : vector<1x256xf32> to vector<8x256xf32>
    %1317 = vector.broadcast %1315 : vector<8x1xf32> to vector<8x256xf32>
    %1318 = arith.mulf %1316, %1317 : vector<8x256xf32>
    %1319 = arith.addf %1313, %1318 : vector<8x256xf32>
    %1320 = vector.extract_strided_slice %1277 {offsets = [7, 0], sizes = [1, 256], strides = [1, 1]} : vector<8x256xf32> to vector<1x256xf32>
    %c0_399 = arith.constant 0 : index
    %c55_400 = arith.constant 55 : index
    %1321 = vector.load %arg3[%c0_399, %c55_400] : memref<8x72xf32, #tpu.memory_space<vmem>>, vector<8x1xf32>
    %1322 = vector.broadcast %1320 : vector<1x256xf32> to vector<8x256xf32>
    %1323 = vector.broadcast %1321 : vector<8x1xf32> to vector<8x256xf32>
    %1324 = arith.mulf %1322, %1323 : vector<8x256xf32>
    %1325 = arith.addf %1319, %1324 : vector<8x256xf32>
    %c240_i32_401 = arith.constant 240 : i32
    %1326 = tpu.dynamic_rotate %499 by %c240_i32_401 dim 1 : vector<8x256xf32>, i32 -> vector<8x256xf32>
    %c7_402 = arith.constant 7 : index
    %c0_403 = arith.constant 0 : index
    %1327 = vector.load %arg4[%c7_402, %c0_403] : memref<9x256xf32, #tpu.memory_space<vmem>>, vector<1x256xf32>
    %1328 = vector.broadcast %1327 : vector<1x256xf32> to vector<8x256xf32>
    %1329 = arith.mulf %1326, %1328 : vector<8x256xf32>
    %1330 = vector.extract_strided_slice %1329 {offsets = [0, 0], sizes = [1, 256], strides = [1, 1]} : vector<8x256xf32> to vector<1x256xf32>
    %c0_404 = arith.constant 0 : index
    %c56_405 = arith.constant 56 : index
    %1331 = vector.load %arg3[%c0_404, %c56_405] : memref<8x72xf32, #tpu.memory_space<vmem>>, vector<8x1xf32>
    %1332 = vector.broadcast %1330 : vector<1x256xf32> to vector<8x256xf32>
    %1333 = vector.broadcast %1331 : vector<8x1xf32> to vector<8x256xf32>
    %1334 = arith.mulf %1332, %1333 : vector<8x256xf32>
    %1335 = arith.addf %1325, %1334 : vector<8x256xf32>
    %1336 = vector.extract_strided_slice %1329 {offsets = [1, 0], sizes = [1, 256], strides = [1, 1]} : vector<8x256xf32> to vector<1x256xf32>
    %c0_406 = arith.constant 0 : index
    %c57_407 = arith.constant 57 : index
    %1337 = vector.load %arg3[%c0_406, %c57_407] : memref<8x72xf32, #tpu.memory_space<vmem>>, vector<8x1xf32>
    %1338 = vector.broadcast %1336 : vector<1x256xf32> to vector<8x256xf32>
    %1339 = vector.broadcast %1337 : vector<8x1xf32> to vector<8x256xf32>
    %1340 = arith.mulf %1338, %1339 : vector<8x256xf32>
    %1341 = arith.addf %1335, %1340 : vector<8x256xf32>
    %1342 = vector.extract_strided_slice %1329 {offsets = [2, 0], sizes = [1, 256], strides = [1, 1]} : vector<8x256xf32> to vector<1x256xf32>
    %c0_408 = arith.constant 0 : index
    %c58_409 = arith.constant 58 : index
    %1343 = vector.load %arg3[%c0_408, %c58_409] : memref<8x72xf32, #tpu.memory_space<vmem>>, vector<8x1xf32>
    %1344 = vector.broadcast %1342 : vector<1x256xf32> to vector<8x256xf32>
    %1345 = vector.broadcast %1343 : vector<8x1xf32> to vector<8x256xf32>
    %1346 = arith.mulf %1344, %1345 : vector<8x256xf32>
    %1347 = arith.addf %1341, %1346 : vector<8x256xf32>
    %1348 = vector.extract_strided_slice %1329 {offsets = [3, 0], sizes = [1, 256], strides = [1, 1]} : vector<8x256xf32> to vector<1x256xf32>
    %c0_410 = arith.constant 0 : index
    %c59_411 = arith.constant 59 : index
    %1349 = vector.load %arg3[%c0_410, %c59_411] : memref<8x72xf32, #tpu.memory_space<vmem>>, vector<8x1xf32>
    %1350 = vector.broadcast %1348 : vector<1x256xf32> to vector<8x256xf32>
    %1351 = vector.broadcast %1349 : vector<8x1xf32> to vector<8x256xf32>
    %1352 = arith.mulf %1350, %1351 : vector<8x256xf32>
    %1353 = arith.addf %1347, %1352 : vector<8x256xf32>
    %1354 = vector.extract_strided_slice %1329 {offsets = [4, 0], sizes = [1, 256], strides = [1, 1]} : vector<8x256xf32> to vector<1x256xf32>
    %c0_412 = arith.constant 0 : index
    %c60_413 = arith.constant 60 : index
    %1355 = vector.load %arg3[%c0_412, %c60_413] : memref<8x72xf32, #tpu.memory_space<vmem>>, vector<8x1xf32>
    %1356 = vector.broadcast %1354 : vector<1x256xf32> to vector<8x256xf32>
    %1357 = vector.broadcast %1355 : vector<8x1xf32> to vector<8x256xf32>
    %1358 = arith.mulf %1356, %1357 : vector<8x256xf32>
    %1359 = arith.addf %1353, %1358 : vector<8x256xf32>
    %1360 = vector.extract_strided_slice %1329 {offsets = [5, 0], sizes = [1, 256], strides = [1, 1]} : vector<8x256xf32> to vector<1x256xf32>
    %c0_414 = arith.constant 0 : index
    %c61_415 = arith.constant 61 : index
    %1361 = vector.load %arg3[%c0_414, %c61_415] : memref<8x72xf32, #tpu.memory_space<vmem>>, vector<8x1xf32>
    %1362 = vector.broadcast %1360 : vector<1x256xf32> to vector<8x256xf32>
    %1363 = vector.broadcast %1361 : vector<8x1xf32> to vector<8x256xf32>
    %1364 = arith.mulf %1362, %1363 : vector<8x256xf32>
    %1365 = arith.addf %1359, %1364 : vector<8x256xf32>
    %1366 = vector.extract_strided_slice %1329 {offsets = [6, 0], sizes = [1, 256], strides = [1, 1]} : vector<8x256xf32> to vector<1x256xf32>
    %c0_416 = arith.constant 0 : index
    %c62_417 = arith.constant 62 : index
    %1367 = vector.load %arg3[%c0_416, %c62_417] : memref<8x72xf32, #tpu.memory_space<vmem>>, vector<8x1xf32>
    %1368 = vector.broadcast %1366 : vector<1x256xf32> to vector<8x256xf32>
    %1369 = vector.broadcast %1367 : vector<8x1xf32> to vector<8x256xf32>
    %1370 = arith.mulf %1368, %1369 : vector<8x256xf32>
    %1371 = arith.addf %1365, %1370 : vector<8x256xf32>
    %1372 = vector.extract_strided_slice %1329 {offsets = [7, 0], sizes = [1, 256], strides = [1, 1]} : vector<8x256xf32> to vector<1x256xf32>
    %c0_418 = arith.constant 0 : index
    %c63_419 = arith.constant 63 : index
    %1373 = vector.load %arg3[%c0_418, %c63_419] : memref<8x72xf32, #tpu.memory_space<vmem>>, vector<8x1xf32>
    %1374 = vector.broadcast %1372 : vector<1x256xf32> to vector<8x256xf32>
    %1375 = vector.broadcast %1373 : vector<8x1xf32> to vector<8x256xf32>
    %1376 = arith.mulf %1374, %1375 : vector<8x256xf32>
    %1377 = arith.addf %1371, %1376 : vector<8x256xf32>
    %c239_i32_420 = arith.constant 239 : i32
    %1378 = tpu.dynamic_rotate %499 by %c239_i32_420 dim 1 : vector<8x256xf32>, i32 -> vector<8x256xf32>
    %c8_421 = arith.constant 8 : index
    %c0_422 = arith.constant 0 : index
    %1379 = vector.load %arg4[%c8_421, %c0_422] : memref<9x256xf32, #tpu.memory_space<vmem>>, vector<1x256xf32>
    %1380 = vector.broadcast %1379 : vector<1x256xf32> to vector<8x256xf32>
    %1381 = arith.mulf %1378, %1380 : vector<8x256xf32>
    %1382 = vector.extract_strided_slice %1381 {offsets = [0, 0], sizes = [1, 256], strides = [1, 1]} : vector<8x256xf32> to vector<1x256xf32>
    %c0_423 = arith.constant 0 : index
    %c64_424 = arith.constant 64 : index
    %1383 = vector.load %arg3[%c0_423, %c64_424] : memref<8x72xf32, #tpu.memory_space<vmem>>, vector<8x1xf32>
    %1384 = vector.broadcast %1382 : vector<1x256xf32> to vector<8x256xf32>
    %1385 = vector.broadcast %1383 : vector<8x1xf32> to vector<8x256xf32>
    %1386 = arith.mulf %1384, %1385 : vector<8x256xf32>
    %1387 = arith.addf %1377, %1386 : vector<8x256xf32>
    %1388 = vector.extract_strided_slice %1381 {offsets = [1, 0], sizes = [1, 256], strides = [1, 1]} : vector<8x256xf32> to vector<1x256xf32>
    %c0_425 = arith.constant 0 : index
    %c65_426 = arith.constant 65 : index
    %1389 = vector.load %arg3[%c0_425, %c65_426] : memref<8x72xf32, #tpu.memory_space<vmem>>, vector<8x1xf32>
    %1390 = vector.broadcast %1388 : vector<1x256xf32> to vector<8x256xf32>
    %1391 = vector.broadcast %1389 : vector<8x1xf32> to vector<8x256xf32>
    %1392 = arith.mulf %1390, %1391 : vector<8x256xf32>
    %1393 = arith.addf %1387, %1392 : vector<8x256xf32>
    %1394 = vector.extract_strided_slice %1381 {offsets = [2, 0], sizes = [1, 256], strides = [1, 1]} : vector<8x256xf32> to vector<1x256xf32>
    %c0_427 = arith.constant 0 : index
    %c66_428 = arith.constant 66 : index
    %1395 = vector.load %arg3[%c0_427, %c66_428] : memref<8x72xf32, #tpu.memory_space<vmem>>, vector<8x1xf32>
    %1396 = vector.broadcast %1394 : vector<1x256xf32> to vector<8x256xf32>
    %1397 = vector.broadcast %1395 : vector<8x1xf32> to vector<8x256xf32>
    %1398 = arith.mulf %1396, %1397 : vector<8x256xf32>
    %1399 = arith.addf %1393, %1398 : vector<8x256xf32>
    %1400 = vector.extract_strided_slice %1381 {offsets = [3, 0], sizes = [1, 256], strides = [1, 1]} : vector<8x256xf32> to vector<1x256xf32>
    %c0_429 = arith.constant 0 : index
    %c67_430 = arith.constant 67 : index
    %1401 = vector.load %arg3[%c0_429, %c67_430] : memref<8x72xf32, #tpu.memory_space<vmem>>, vector<8x1xf32>
    %1402 = vector.broadcast %1400 : vector<1x256xf32> to vector<8x256xf32>
    %1403 = vector.broadcast %1401 : vector<8x1xf32> to vector<8x256xf32>
    %1404 = arith.mulf %1402, %1403 : vector<8x256xf32>
    %1405 = arith.addf %1399, %1404 : vector<8x256xf32>
    %1406 = vector.extract_strided_slice %1381 {offsets = [4, 0], sizes = [1, 256], strides = [1, 1]} : vector<8x256xf32> to vector<1x256xf32>
    %c0_431 = arith.constant 0 : index
    %c68_432 = arith.constant 68 : index
    %1407 = vector.load %arg3[%c0_431, %c68_432] : memref<8x72xf32, #tpu.memory_space<vmem>>, vector<8x1xf32>
    %1408 = vector.broadcast %1406 : vector<1x256xf32> to vector<8x256xf32>
    %1409 = vector.broadcast %1407 : vector<8x1xf32> to vector<8x256xf32>
    %1410 = arith.mulf %1408, %1409 : vector<8x256xf32>
    %1411 = arith.addf %1405, %1410 : vector<8x256xf32>
    %1412 = vector.extract_strided_slice %1381 {offsets = [5, 0], sizes = [1, 256], strides = [1, 1]} : vector<8x256xf32> to vector<1x256xf32>
    %c0_433 = arith.constant 0 : index
    %c69_434 = arith.constant 69 : index
    %1413 = vector.load %arg3[%c0_433, %c69_434] : memref<8x72xf32, #tpu.memory_space<vmem>>, vector<8x1xf32>
    %1414 = vector.broadcast %1412 : vector<1x256xf32> to vector<8x256xf32>
    %1415 = vector.broadcast %1413 : vector<8x1xf32> to vector<8x256xf32>
    %1416 = arith.mulf %1414, %1415 : vector<8x256xf32>
    %1417 = arith.addf %1411, %1416 : vector<8x256xf32>
    %1418 = vector.extract_strided_slice %1381 {offsets = [6, 0], sizes = [1, 256], strides = [1, 1]} : vector<8x256xf32> to vector<1x256xf32>
    %c0_435 = arith.constant 0 : index
    %c70_436 = arith.constant 70 : index
    %1419 = vector.load %arg3[%c0_435, %c70_436] : memref<8x72xf32, #tpu.memory_space<vmem>>, vector<8x1xf32>
    %1420 = vector.broadcast %1418 : vector<1x256xf32> to vector<8x256xf32>
    %1421 = vector.broadcast %1419 : vector<8x1xf32> to vector<8x256xf32>
    %1422 = arith.mulf %1420, %1421 : vector<8x256xf32>
    %1423 = arith.addf %1417, %1422 : vector<8x256xf32>
    %1424 = vector.extract_strided_slice %1381 {offsets = [7, 0], sizes = [1, 256], strides = [1, 1]} : vector<8x256xf32> to vector<1x256xf32>
    %c0_437 = arith.constant 0 : index
    %c71_438 = arith.constant 71 : index
    %1425 = vector.load %arg3[%c0_437, %c71_438] : memref<8x72xf32, #tpu.memory_space<vmem>>, vector<8x1xf32>
    %1426 = vector.broadcast %1424 : vector<1x256xf32> to vector<8x256xf32>
    %1427 = vector.broadcast %1425 : vector<8x1xf32> to vector<8x256xf32>
    %1428 = arith.mulf %1426, %1427 : vector<8x256xf32>
    %1429 = arith.addf %1423, %1428 : vector<8x256xf32>
    %cst_439 = arith.constant dense<0.000000e+00> : vector<8xf32>
    %1430 = vector.multi_reduction <add>, %964, %cst_439 [1] : vector<8x256xf32> to vector<8xf32>
    %1431 = vector.shape_cast %1430 : vector<8xf32> to vector<8x1xf32>
    %cst_440 = arith.constant dense<0.000000e+00> : vector<8xf32>
    %1432 = vector.multi_reduction <add>, %1429, %cst_440 [1] : vector<8x256xf32> to vector<8xf32>
    %1433 = vector.shape_cast %1432 : vector<8xf32> to vector<8x1xf32>
    %1434 = arith.addf %1431, %1433 : vector<8x1xf32>
    %cst_441 = arith.constant 0.001953125 : f32
    %1435 = vector.broadcast %cst_441 : f32 to vector<8x1xf32>
    %1436 = arith.mulf %1434, %1435 : vector<8x1xf32>
    %1437 = vector.broadcast %1436 : vector<8x1xf32> to vector<8x256xf32>
    %1438 = arith.subf %964, %1437 : vector<8x256xf32>
    %1439 = vector.broadcast %1436 : vector<8x1xf32> to vector<8x256xf32>
    %1440 = arith.subf %1429, %1439 : vector<8x256xf32>
    %cst_442 = arith.constant 0.000000e+00 : f32
    %1441 = vector.broadcast %cst_442 : f32 to vector<8x1xf32>
    %1442 = arith.mulf %1438, %1438 : vector<8x256xf32>
    %cst_443 = arith.constant dense<0.000000e+00> : vector<8xf32>
    %1443 = vector.multi_reduction <add>, %1442, %cst_443 [1] : vector<8x256xf32> to vector<8xf32>
    %1444 = vector.shape_cast %1443 : vector<8xf32> to vector<8x1xf32>
    %1445 = arith.addf %1441, %1444 : vector<8x1xf32>
    %1446 = arith.mulf %1440, %1440 : vector<8x256xf32>
    %cst_444 = arith.constant dense<0.000000e+00> : vector<8xf32>
    %1447 = vector.multi_reduction <add>, %1446, %cst_444 [1] : vector<8x256xf32> to vector<8xf32>
    %1448 = vector.shape_cast %1447 : vector<8xf32> to vector<8x1xf32>
    %1449 = arith.addf %1445, %1448 : vector<8x1xf32>
    %cst_445 = arith.constant 0.001953125 : f32
    %1450 = vector.broadcast %cst_445 : f32 to vector<8x1xf32>
    %1451 = arith.mulf %1449, %1450 : vector<8x1xf32>
    %cst_446 = arith.constant 9.99999974E-6 : f32
    %1452 = vector.broadcast %cst_446 : f32 to vector<8x1xf32>
    %1453 = arith.addf %1451, %1452 : vector<8x1xf32>
    %1454 = math.rsqrt %1453 : vector<8x1xf32>
    %1455 = vector.broadcast %1454 : vector<8x1xf32> to vector<8x256xf32>
    %1456 = arith.mulf %1438, %1455 : vector<8x256xf32>
    %cst_447 = arith.constant 0.000000e+00 : f32
    %1457 = vector.broadcast %cst_447 : f32 to vector<8x256xf32>
    %1458 = arith.maximumf %1456, %1457 : vector<8x256xf32>
    %1459 = vector.broadcast %1454 : vector<8x1xf32> to vector<8x256xf32>
    %1460 = arith.mulf %1440, %1459 : vector<8x256xf32>
    %cst_448 = arith.constant 0.000000e+00 : f32
    %1461 = vector.broadcast %cst_448 : f32 to vector<8x256xf32>
    %1462 = arith.maximumf %1460, %1461 : vector<8x256xf32>
    %c0_449 = arith.constant 0 : index
    %c0_450 = arith.constant 0 : index
    %1463 = vector.load %arg5[%c0_449, %c0_450] : memref<16x256xf32, #tpu.memory_space<vmem>>, vector<8x256xf32>
    tpu.vector_store %arg5[%c0_449, %c0_450], %1458 {strides = array<i32>} : memref<16x256xf32, #tpu.memory_space<vmem>>, vector<8x256xf32>,
    %c8_451 = arith.constant 8 : index
    %c0_452 = arith.constant 0 : index
    %1464 = vector.load %arg5[%c8_451, %c0_452] : memref<16x256xf32, #tpu.memory_space<vmem>>, vector<8x256xf32>
    tpu.vector_store %arg5[%c8_451, %c0_452], %1462 {strides = array<i32>} : memref<16x256xf32, #tpu.memory_space<vmem>>, vector<8x256xf32>,
    return
  }
  func.func @transform_0(%arg0: i32) -> (i32, i32) {
    %c0_i32 = arith.constant 0 : i32
    %c0_i32_0 = arith.constant 0 : i32
    %c0_i32_1 = arith.constant 0 : i32
    return %c0_i32, %c0_i32_0 : i32, i32
  }
  func.func @transform_1(%arg0: i32) -> (i32, i32) {
    %c0_i32 = arith.constant 0 : i32
    %c0_i32_0 = arith.constant 0 : i32
    %c0_i32_1 = arith.constant 0 : i32
    return %c0_i32, %c0_i32_0 : i32, i32
  }
  func.func @transform_2(%arg0: i32) -> (i32, i32) {
    %c0_i32 = arith.constant 0 : i32
    %c0_i32_0 = arith.constant 0 : i32
    %c0_i32_1 = arith.constant 0 : i32
    return %c0_i32, %c0_i32_0 : i32, i32
  }
  func.func @transform_3(%arg0: i32) -> (i32, i32) {
    %c0_i32 = arith.constant 0 : i32
    %c0_i32_0 = arith.constant 0 : i32
    %c0_i32_1 = arith.constant 0 : i32
    return %c0_i32, %c0_i32_0 : i32, i32
  }
  func.func @transform_4(%arg0: i32) -> (i32, i32) {
    %c0_i32 = arith.constant 0 : i32
    %c0_i32_0 = arith.constant 0 : i32
    %c0_i32_1 = arith.constant 0 : i32
    return %c0_i32, %c0_i32_0 : i32, i32
  }
}

</mosaic_0001>

<llo_original>
// kernel: dconv_forward.1
$region0: #{dconv_forward.1}
  #allocation0 [shape = 'u32[]', space=smem, size = 0x4, offset = 0x4, fixed_abs, tag = 'smem constant byte address 0x4 - core index']
  #allocation1 [shape = 'u32[144,128]{1,0:T(1,128)}', space=vmem, size = 0x12000, scoped, tag = 'internal scratch']
  %s0 = inlined_call_operand.vmem [shape: f32[8,256], index: 0, kind: input, shape index: {}]
  %s1 = inlined_call_operand.vmem [shape: f32[8,36], index: 1, kind: input, shape index: {}]
  %s2 = inlined_call_operand.vmem [shape: f32[8,72], index: 2, kind: input, shape index: {}]
  %s3 = inlined_call_operand.vmem [shape: f32[9,256], index: 3, kind: input, shape index: {}]
  %s4 = inlined_call_operand.vmem [shape: f32[16,256], index: 4, kind: output, shape index: {}]
  %s5 = sld [smem:[#allocation0]]
  $region26: #{dconv_forward.1} parent=0
    _
  %s7 = ssub.s32 1, %s5
  %s8 = scalar_select 0, %s7, %s5
  // Predicated region
  $region2: #{dconv_forward.1} parent=0 // pred_check
    _
  $region3: #{dconv_forward.1} parent=0 // pred_check_branch
    %10 = sbr.rel (0) target = $region5
  $region4: #{dconv_forward.1} parent=0 // pred_region
    _
  $region5: #{dconv_forward.1} parent=0 // pred_fallthru
    _
  // Predicated region
  $region6: #{dconv_forward.1} parent=0 // pred_check
    _
  $region7: #{dconv_forward.1} parent=0 // pred_check_branch
    %12 = sbr.rel (0) target = $region9
  $region8: #{dconv_forward.1} parent=0 // pred_region
    _
  $region9: #{dconv_forward.1} parent=0 // pred_fallthru
    _
  // Predicated region
  $region10: #{dconv_forward.1} parent=0 // pred_check
    _
  $region11: #{dconv_forward.1} parent=0 // pred_check_branch
    %14 = sbr.rel (0) target = $region13
  $region12: #{dconv_forward.1} parent=0 // pred_region
    _
  $region13: #{dconv_forward.1} parent=0 // pred_fallthru
    _
  // Predicated region
  $region14: #{dconv_forward.1} parent=0 // pred_check
    _
  $region15: #{dconv_forward.1} parent=0 // pred_check_branch
    %16 = sbr.rel (0) target = $region17
  $region16: #{dconv_forward.1} parent=0 // pred_region
    _
  $region17: #{dconv_forward.1} parent=0 // pred_fallthru
    _
  %v17 = vld [vmem:[%s0] sm:$0xff]
  %v18 = vld [vmem:[%s0 + $0x8] sm:$0xff]
  %19 = vrot.lane.b32.xlu0 %v17, 17
  %v20 = vpop.permute.xlu0 %19
  %21 = vrot.lane.b32.xlu0 %v18, 17
  %v22 = vpop.permute.xlu0 %21
  %v23 = vlaneseq
  %v24 = vand.u32 %v23, 127
  %vm25 = vcmp.lt.s32.totalorder %v24, 17
  %v26 = vsel %vm25, %v20, %v22
  %v27 = vsel %vm25, %v22, %v20
  %v28 = vld [vmem:[%s3] ss:$8 sm:$0x3]
  %v30 = vlaneseq
  %v31 = vshrl.u32 %v30, 7
  %v32 = vsub.s32 0, %v31
  %v33 = vrot.slane %v28, %v32
  %v34 = vlaneseq
  %v35 = vshrl.u32 %v34, 7
  %v36 = vsub.s32 1, %v35
  %v37 = vrot.slane %v28, %v36
  %v40 = vmul.f32 %v27, %v33
  %v41 = vmul.f32 %v26, %v37
  %v42 = vld [vmem:[%s1] sm:$0xff]
  %v43 = vlaneseq
  %v44 = vshrl.u32 %v43, 7
  %v45 = vsub.s32 0, %v44
  %v46 = vrot.slane %v40, %v45
  %v47 = vlaneseq
  %v48 = vshrl.u32 %v47, 7
  %v49 = vsub.s32 0, %v48
  %v50 = vrot.slane %v41, %v49
  %52 = vset.pattern.permute.xlu0 0
  %53 = vperm.xlu0 %52, %v42
  %v54 = vpop.permute.xlu0 %53
  %v56 = vmul.f32 %v46, %v54
  %v57 = vmul.f32 %v50, %v54
  %v58 = vadd.f32 %v56, 0.0
  %v59 = vadd.f32 %v57, 0.0
  %v60 = vlaneseq
  %v61 = vshrl.u32 %v60, 7
  %v62 = vsub.s32 1, %v61
  %v63 = vrot.slane %v40, %v62
  %v64 = vlaneseq
  %v65 = vshrl.u32 %v64, 7
  %v66 = vsub.s32 1, %v65
  %v67 = vrot.slane %v41, %v66
  %68 = vset.pattern.permute.xlu0 1
  %69 = vperm.xlu0 %68, %v42
  %v70 = vpop.permute.xlu0 %69
  %v72 = vmul.f32 %v63, %v70
  %v73 = vmul.f32 %v67, %v70
  %v74 = vadd.f32 %v58, %v72
  %v75 = vadd.f32 %v59, %v73
  %v76 = vlaneseq
  %v77 = vshrl.u32 %v76, 7
  %v78 = vsub.s32 2, %v77
  %v79 = vrot.slane %v40, %v78
  %v80 = vlaneseq
  %v81 = vshrl.u32 %v80, 7
  %v82 = vsub.s32 2, %v81
  %v83 = vrot.slane %v41, %v82
  %84 = vset.pattern.permute.xlu0 2
  %85 = vperm.xlu0 %84, %v42
  %v86 = vpop.permute.xlu0 %85
  %v88 = vmul.f32 %v79, %v86
  %v89 = vmul.f32 %v83, %v86
  %v90 = vadd.f32 %v74, %v88
  %v91 = vadd.f32 %v75, %v89
  %v92 = vlaneseq
  %v93 = vshrl.u32 %v92, 7
  %v94 = vsub.s32 3, %v93
  %v95 = vrot.slane %v40, %v94
  %v96 = vlaneseq
  %v97 = vshrl.u32 %v96, 7
  %v98 = vsub.s32 3, %v97
  %v99 = vrot.slane %v41, %v98
  %100 = vset.pattern.permute.xlu0 3
  %101 = vperm.xlu0 %100, %v42
  %v102 = vpop.permute.xlu0 %101
  %v104 = vmul.f32 %v95, %v102
  %v105 = vmul.f32 %v99, %v102
  %v106 = vadd.f32 %v90, %v104
  %v107 = vadd.f32 %v91, %v105
  %v108 = vlaneseq
  %v109 = vshrl.u32 %v108, 7
  %v110 = vsub.s32 4, %v109
  %v111 = vrot.slane %v40, %v110
  %v112 = vlaneseq
  %v113 = vshrl.u32 %v112, 7
  %v114 = vsub.s32 4, %v113
  %v115 = vrot.slane %v41, %v114
  %v116 = vmul.f32 %v111, %v54
  %v117 = vmul.f32 %v115, %v54
  %v118 = vadd.f32 %v116, 0.0
  %v119 = vadd.f32 %v117, 0.0
  %v120 = vlaneseq
  %v121 = vshrl.u32 %v120, 7
  %v122 = vsub.s32 5, %v121
  %v123 = vrot.slane %v40, %v122
  %v124 = vlaneseq
  %v125 = vshrl.u32 %v124, 7
  %v126 = vsub.s32 5, %v125
  %v127 = vrot.slane %v41, %v126
  %v128 = vmul.f32 %v123, %v70
  %v129 = vmul.f32 %v127, %v70
  %v130 = vadd.f32 %v118, %v128
  %v131 = vadd.f32 %v119, %v129
  %v132 = vlaneseq
  %v133 = vshrl.u32 %v132, 7
  %v134 = vsub.s32 6, %v133
  %v135 = vrot.slane %v40, %v134
  %v136 = vlaneseq
  %v137 = vshrl.u32 %v136, 7
  %v138 = vsub.s32 6, %v137
  %v139 = vrot.slane %v41, %v138
  %v140 = vmul.f32 %v135, %v86
  %v141 = vmul.f32 %v139, %v86
  %v142 = vadd.f32 %v130, %v140
  %v143 = vadd.f32 %v131, %v141
  %v144 = vlaneseq
  %v145 = vshrl.u32 %v144, 7
  %v146 = vsub.s32 7, %v145
  %v147 = vrot.slane %v40, %v146
  %v148 = vlaneseq
  %v149 = vshrl.u32 %v148, 7
  %v150 = vsub.s32 7, %v149
  %v151 = vrot.slane %v41, %v150
  %v152 = vmul.f32 %v147, %v102
  %v153 = vmul.f32 %v151, %v102
  %v154 = vadd.f32 %v142, %v152
  %v155 = vadd.f32 %v143, %v153
  %156 = vrot.lane.b32.xlu0 %v17, 16
  %v157 = vpop.permute.xlu0 %156
  %158 = vrot.lane.b32.xlu0 %v18, 16
  %v159 = vpop.permute.xlu0 %158
  %vm160 = vcmp.lt.s32.totalorder %v24, 16
  %v161 = vsel %vm160, %v157, %v159
  %v162 = vsel %vm160, %v159, %v157
  %s163 = scalar_lea.vmem %s3, 1
  %v164 = vld [vmem:[%s163] ss:$8 sm:$0x3]
  %v166 = vlaneseq
  %v167 = vshrl.u32 %v166, 7
  %v168 = vsub.s32 0, %v167
  %v169 = vrot.slane %v164, %v168
  %v170 = vlaneseq
  %v171 = vshrl.u32 %v170, 7
  %v172 = vsub.s32 1, %v171
  %v173 = vrot.slane %v164, %v172
  %v176 = vmul.f32 %v162, %v169
  %v177 = vmul.f32 %v161, %v173
  %v178 = vlaneseq
  %v179 = vshrl.u32 %v178, 7
  %v180 = vsub.s32 0, %v179
  %v181 = vrot.slane %v176, %v180
  %v182 = vlaneseq
  %v183 = vshrl.u32 %v182, 7
  %v184 = vsub.s32 0, %v183
  %v185 = vrot.slane %v177, %v184
  %186 = vset.pattern.permute.xlu0 4
  %187 = vperm.xlu0 %186, %v42
  %v188 = vpop.permute.xlu0 %187
  %v190 = vmul.f32 %v181, %v188
  %v191 = vmul.f32 %v185, %v188
  %v192 = vadd.f32 %v106, %v190
  %v193 = vadd.f32 %v107, %v191
  %v194 = vlaneseq
  %v195 = vshrl.u32 %v194, 7
  %v196 = vsub.s32 1, %v195
  %v197 = vrot.slane %v176, %v196
  %v198 = vlaneseq
  %v199 = vshrl.u32 %v198, 7
  %v200 = vsub.s32 1, %v199
  %v201 = vrot.slane %v177, %v200
  %202 = vset.pattern.permute.xlu0 5
  %203 = vperm.xlu0 %202, %v42
  %v204 = vpop.permute.xlu0 %203
  %v206 = vmul.f32 %v197, %v204
  %v207 = vmul.f32 %v201, %v204
  %v208 = vadd.f32 %v192, %v206
  %v209 = vadd.f32 %v193, %v207
  %v210 = vlaneseq
  %v211 = vshrl.u32 %v210, 7
  %v212 = vsub.s32 2, %v211
  %v213 = vrot.slane %v176, %v212
  %v214 = vlaneseq
  %v215 = vshrl.u32 %v214, 7
  %v216 = vsub.s32 2, %v215
  %v217 = vrot.slane %v177, %v216
  %218 = vset.pattern.permute.xlu0 6
  %219 = vperm.xlu0 %218, %v42
  %v220 = vpop.permute.xlu0 %219
  %v222 = vmul.f32 %v213, %v220
  %v223 = vmul.f32 %v217, %v220
  %v224 = vadd.f32 %v208, %v222
  %v225 = vadd.f32 %v209, %v223
  %v226 = vlaneseq
  %v227 = vshrl.u32 %v226, 7
  %v228 = vsub.s32 3, %v227
  %v229 = vrot.slane %v176, %v228
  %v230 = vlaneseq
  %v231 = vshrl.u32 %v230, 7
  %v232 = vsub.s32 3, %v231
  %v233 = vrot.slane %v177, %v232
  %234 = vset.pattern.permute.xlu0 7
  %235 = vperm.xlu0 %234, %v42
  %v236 = vpop.permute.xlu0 %235
  %v238 = vmul.f32 %v229, %v236
  %v239 = vmul.f32 %v233, %v236
  %v240 = vadd.f32 %v224, %v238
  %v241 = vadd.f32 %v225, %v239
  %v242 = vlaneseq
  %v243 = vshrl.u32 %v242, 7
  %v244 = vsub.s32 4, %v243
  %v245 = vrot.slane %v176, %v244
  %v246 = vlaneseq
  %v247 = vshrl.u32 %v246, 7
  %v248 = vsub.s32 4, %v247
  %v249 = vrot.slane %v177, %v248
  %v250 = vmul.f32 %v245, %v188
  %v251 = vmul.f32 %v249, %v188
  %v252 = vadd.f32 %v154, %v250
  %v253 = vadd.f32 %v155, %v251
  %v254 = vlaneseq
  %v255 = vshrl.u32 %v254, 7
  %v256 = vsub.s32 5, %v255
  %v257 = vrot.slane %v176, %v256
  %v258 = vlaneseq
  %v259 = vshrl.u32 %v258, 7
  %v260 = vsub.s32 5, %v259
  %v261 = vrot.slane %v177, %v260
  %v262 = vmul.f32 %v257, %v204
  %v263 = vmul.f32 %v261, %v204
  %v264 = vadd.f32 %v252, %v262
  %v265 = vadd.f32 %v253, %v263
  %v266 = vlaneseq
  %v267 = vshrl.u32 %v266, 7
  %v268 = vsub.s32 6, %v267
  %v269 = vrot.slane %v176, %v268
  %v270 = vlaneseq
  %v271 = vshrl.u32 %v270, 7
  %v272 = vsub.s32 6, %v271
  %v273 = vrot.slane %v177, %v272
  %v274 = vmul.f32 %v269, %v220
  %v275 = vmul.f32 %v273, %v220
  %v276 = vadd.f32 %v264, %v274
  %v277 = vadd.f32 %v265, %v275
  %v278 = vlaneseq
  %v279 = vshrl.u32 %v278, 7
  %v280 = vsub.s32 7, %v279
  %v281 = vrot.slane %v176, %v280
  %v282 = vlaneseq
  %v283 = vshrl.u32 %v282, 7
  %v284 = vsub.s32 7, %v283
  %v285 = vrot.slane %v177, %v284
  %v286 = vmul.f32 %v281, %v236
  %v287 = vmul.f32 %v285, %v236
  %v288 = vadd.f32 %v276, %v286
  %v289 = vadd.f32 %v277, %v287
  %290 = vrot.lane.b32.xlu0 %v17, 15
  %v291 = vpop.permute.xlu0 %290
  %292 = vrot.lane.b32.xlu0 %v18, 15
  %v293 = vpop.permute.xlu0 %292
  %vm294 = vcmp.lt.s32.totalorder %v24, 15
  %v295 = vsel %vm294, %v291, %v293
  %v296 = vsel %vm294, %v293, %v291
  %s297 = scalar_lea.vmem %s3, 2
  %v298 = vld [vmem:[%s297] ss:$8 sm:$0x3]
  %v300 = vlaneseq
  %v301 = vshrl.u32 %v300, 7
  %v302 = vsub.s32 0, %v301
  %v303 = vrot.slane %v298, %v302
  %v304 = vlaneseq
  %v305 = vshrl.u32 %v304, 7
  %v306 = vsub.s32 1, %v305
  %v307 = vrot.slane %v298, %v306
  %v310 = vmul.f32 %v296, %v303
  %v311 = vmul.f32 %v295, %v307
  %v312 = vlaneseq
  %v313 = vshrl.u32 %v312, 7
  %v314 = vsub.s32 0, %v313
  %v315 = vrot.slane %v310, %v314
  %v316 = vlaneseq
  %v317 = vshrl.u32 %v316, 7
  %v318 = vsub.s32 0, %v317
  %v319 = vrot.slane %v311, %v318
  %320 = vset.pattern.permute.xlu0 8
  %321 = vperm.xlu0 %320, %v42
  %v322 = vpop.permute.xlu0 %321
  %v324 = vmul.f32 %v315, %v322
  %v325 = vmul.f32 %v319, %v322
  %v326 = vadd.f32 %v240, %v324
  %v327 = vadd.f32 %v241, %v325
  %v328 = vlaneseq
  %v329 = vshrl.u32 %v328, 7
  %v330 = vsub.s32 1, %v329
  %v331 = vrot.slane %v310, %v330
  %v332 = vlaneseq
  %v333 = vshrl.u32 %v332, 7
  %v334 = vsub.s32 1, %v333
  %v335 = vrot.slane %v311, %v334
  %336 = vset.pattern.permute.xlu0 9
  %337 = vperm.xlu0 %336, %v42
  %v338 = vpop.permute.xlu0 %337
  %v340 = vmul.f32 %v331, %v338
  %v341 = vmul.f32 %v335, %v338
  %v342 = vadd.f32 %v326, %v340
  %v343 = vadd.f32 %v327, %v341
  %v344 = vlaneseq
  %v345 = vshrl.u32 %v344, 7
  %v346 = vsub.s32 2, %v345
  %v347 = vrot.slane %v310, %v346
  %v348 = vlaneseq
  %v349 = vshrl.u32 %v348, 7
  %v350 = vsub.s32 2, %v349
  %v351 = vrot.slane %v311, %v350
  %352 = vset.pattern.permute.xlu0 10
  %353 = vperm.xlu0 %352, %v42
  %v354 = vpop.permute.xlu0 %353
  %v356 = vmul.f32 %v347, %v354
  %v357 = vmul.f32 %v351, %v354
  %v358 = vadd.f32 %v342, %v356
  %v359 = vadd.f32 %v343, %v357
  %v360 = vlaneseq
  %v361 = vshrl.u32 %v360, 7
  %v362 = vsub.s32 3, %v361
  %v363 = vrot.slane %v310, %v362
  %v364 = vlaneseq
  %v365 = vshrl.u32 %v364, 7
  %v366 = vsub.s32 3, %v365
  %v367 = vrot.slane %v311, %v366
  %368 = vset.pattern.permute.xlu0 11
  %369 = vperm.xlu0 %368, %v42
  %v370 = vpop.permute.xlu0 %369
  %v372 = vmul.f32 %v363, %v370
  %v373 = vmul.f32 %v367, %v370
  %v374 = vadd.f32 %v358, %v372
  %v375 = vadd.f32 %v359, %v373
  %v376 = vlaneseq
  %v377 = vshrl.u32 %v376, 7
  %v378 = vsub.s32 4, %v377
  %v379 = vrot.slane %v310, %v378
  %v380 = vlaneseq
  %v381 = vshrl.u32 %v380, 7
  %v382 = vsub.s32 4, %v381
  %v383 = vrot.slane %v311, %v382
  %v384 = vmul.f32 %v379, %v322
  %v385 = vmul.f32 %v383, %v322
  %v386 = vadd.f32 %v288, %v384
  %v387 = vadd.f32 %v289, %v385
  %v388 = vlaneseq
  %v389 = vshrl.u32 %v388, 7
  %v390 = vsub.s32 5, %v389
  %v391 = vrot.slane %v310, %v390
  %v392 = vlaneseq
  %v393 = vshrl.u32 %v392, 7
  %v394 = vsub.s32 5, %v393
  %v395 = vrot.slane %v311, %v394
  %v396 = vmul.f32 %v391, %v338
  %v397 = vmul.f32 %v395, %v338
  %v398 = vadd.f32 %v386, %v396
  %v399 = vadd.f32 %v387, %v397
  %v400 = vlaneseq
  %v401 = vshrl.u32 %v400, 7
  %v402 = vsub.s32 6, %v401
  %v403 = vrot.slane %v310, %v402
  %v404 = vlaneseq
  %v405 = vshrl.u32 %v404, 7
  %v406 = vsub.s32 6, %v405
  %v407 = vrot.slane %v311, %v406
  %v408 = vmul.f32 %v403, %v354
  %v409 = vmul.f32 %v407, %v354
  %v410 = vadd.f32 %v398, %v408
  %v411 = vadd.f32 %v399, %v409
  %v412 = vlaneseq
  %v413 = vshrl.u32 %v412, 7
  %v414 = vsub.s32 7, %v413
  %v415 = vrot.slane %v310, %v414
  %v416 = vlaneseq
  %v417 = vshrl.u32 %v416, 7
  %v418 = vsub.s32 7, %v417
  %v419 = vrot.slane %v311, %v418
  %v420 = vmul.f32 %v415, %v370
  %v421 = vmul.f32 %v419, %v370
  %v422 = vadd.f32 %v410, %v420
  %v423 = vadd.f32 %v411, %v421
  %424 = vrot.lane.b32.xlu0 %v17, 1
  %v425 = vpop.permute.xlu0 %424
  %426 = vrot.lane.b32.xlu0 %v18, 1
  %v427 = vpop.permute.xlu0 %426
  %vm428 = vcmp.lt.s32.totalorder %v24, 1
  %v429 = vsel %vm428, %v425, %v427
  %v430 = vsel %vm428, %v427, %v425
  %s431 = scalar_lea.vmem %s3, 3
  %v432 = vld [vmem:[%s431] ss:$8 sm:$0x3]
  %v434 = vlaneseq
  %v435 = vshrl.u32 %v434, 7
  %v436 = vsub.s32 0, %v435
  %v437 = vrot.slane %v432, %v436
  %v438 = vlaneseq
  %v439 = vshrl.u32 %v438, 7
  %v440 = vsub.s32 1, %v439
  %v441 = vrot.slane %v432, %v440
  %v444 = vmul.f32 %v430, %v437
  %v445 = vmul.f32 %v429, %v441
  %v446 = vlaneseq
  %v447 = vshrl.u32 %v446, 7
  %v448 = vsub.s32 0, %v447
  %v449 = vrot.slane %v444, %v448
  %v450 = vlaneseq
  %v451 = vshrl.u32 %v450, 7
  %v452 = vsub.s32 0, %v451
  %v453 = vrot.slane %v445, %v452
  %454 = vset.pattern.permute.xlu0 12
  %455 = vperm.xlu0 %454, %v42
  %v456 = vpop.permute.xlu0 %455
  %v458 = vmul.f32 %v449, %v456
  %v459 = vmul.f32 %v453, %v456
  %v460 = vadd.f32 %v374, %v458
  %v461 = vadd.f32 %v375, %v459
  %v462 = vlaneseq
  %v463 = vshrl.u32 %v462, 7
  %v464 = vsub.s32 1, %v463
  %v465 = vrot.slane %v444, %v464
  %v466 = vlaneseq
  %v467 = vshrl.u32 %v466, 7
  %v468 = vsub.s32 1, %v467
  %v469 = vrot.slane %v445, %v468
  %470 = vset.pattern.permute.xlu0 13
  %471 = vperm.xlu0 %470, %v42
  %v472 = vpop.permute.xlu0 %471
  %v474 = vmul.f32 %v465, %v472
  %v475 = vmul.f32 %v469, %v472
  %v476 = vadd.f32 %v460, %v474
  %v477 = vadd.f32 %v461, %v475
  %v478 = vlaneseq
  %v479 = vshrl.u32 %v478, 7
  %v480 = vsub.s32 2, %v479
  %v481 = vrot.slane %v444, %v480
  %v482 = vlaneseq
  %v483 = vshrl.u32 %v482, 7
  %v484 = vsub.s32 2, %v483
  %v485 = vrot.slane %v445, %v484
  %486 = vset.pattern.permute.xlu0 14
  %487 = vperm.xlu0 %486, %v42
  %v488 = vpop.permute.xlu0 %487
  %v490 = vmul.f32 %v481, %v488
  %v491 = vmul.f32 %v485, %v488
  %v492 = vadd.f32 %v476, %v490
  %v493 = vadd.f32 %v477, %v491
  %v494 = vlaneseq
  %v495 = vshrl.u32 %v494, 7
  %v496 = vsub.s32 3, %v495
  %v497 = vrot.slane %v444, %v496
  %v498 = vlaneseq
  %v499 = vshrl.u32 %v498, 7
  %v500 = vsub.s32 3, %v499
  %v501 = vrot.slane %v445, %v500
  %502 = vset.pattern.permute.xlu0 15
  %503 = vperm.xlu0 %502, %v42
  %v504 = vpop.permute.xlu0 %503
  %v506 = vmul.f32 %v497, %v504
  %v507 = vmul.f32 %v501, %v504
  %v508 = vadd.f32 %v492, %v506
  %v509 = vadd.f32 %v493, %v507
  %v510 = vlaneseq
  %v511 = vshrl.u32 %v510, 7
  %v512 = vsub.s32 4, %v511
  %v513 = vrot.slane %v444, %v512
  %v514 = vlaneseq
  %v515 = vshrl.u32 %v514, 7
  %v516 = vsub.s32 4, %v515
  %v517 = vrot.slane %v445, %v516
  %v518 = vmul.f32 %v513, %v456
  %v519 = vmul.f32 %v517, %v456
  %v520 = vadd.f32 %v422, %v518
  %v521 = vadd.f32 %v423, %v519
  %v522 = vlaneseq
  %v523 = vshrl.u32 %v522, 7
  %v524 = vsub.s32 5, %v523
  %v525 = vrot.slane %v444, %v524
  %v526 = vlaneseq
  %v527 = vshrl.u32 %v526, 7
  %v528 = vsub.s32 5, %v527
  %v529 = vrot.slane %v445, %v528
  %v530 = vmul.f32 %v525, %v472
  %v531 = vmul.f32 %v529, %v472
  %v532 = vadd.f32 %v520, %v530
  %v533 = vadd.f32 %v521, %v531
  %v534 = vlaneseq
  %v535 = vshrl.u32 %v534, 7
  %v536 = vsub.s32 6, %v535
  %v537 = vrot.slane %v444, %v536
  %v538 = vlaneseq
  %v539 = vshrl.u32 %v538, 7
  %v540 = vsub.s32 6, %v539
  %v541 = vrot.slane %v445, %v540
  %v542 = vmul.f32 %v537, %v488
  %v543 = vmul.f32 %v541, %v488
  %v544 = vadd.f32 %v532, %v542
  %v545 = vadd.f32 %v533, %v543
  %v546 = vlaneseq
  %v547 = vshrl.u32 %v546, 7
  %v548 = vsub.s32 7, %v547
  %v549 = vrot.slane %v444, %v548
  %v550 = vlaneseq
  %v551 = vshrl.u32 %v550, 7
  %v552 = vsub.s32 7, %v551
  %v553 = vrot.slane %v445, %v552
  %v554 = vmul.f32 %v549, %v504
  %v555 = vmul.f32 %v553, %v504
  %v556 = vadd.f32 %v544, %v554
  %v557 = vadd.f32 %v545, %v555
  %v558 = vlaneseq
  %v559 = vshrl.u32 %v558, 7
  %v560 = vsub.s32 0, %v559
  %v561 = vrot.slane %v17, %v560
  %v562 = vlaneseq
  %v563 = vshrl.u32 %v562, 7
  %v564 = vsub.s32 0, %v563
  %v565 = vrot.slane %v18, %v564
  %566 = vset.pattern.permute.xlu0 16
  %567 = vperm.xlu0 %566, %v42
  %v568 = vpop.permute.xlu0 %567
  %v570 = vmul.f32 %v561, %v568
  %v571 = vmul.f32 %v565, %v568
  %v572 = vadd.f32 %v508, %v570
  %v573 = vadd.f32 %v509, %v571
  %v574 = vlaneseq
  %v575 = vshrl.u32 %v574, 7
  %v576 = vsub.s32 1, %v575
  %v577 = vrot.slane %v17, %v576
  %v578 = vlaneseq
  %v579 = vshrl.u32 %v578, 7
  %v580 = vsub.s32 1, %v579
  %v581 = vrot.slane %v18, %v580
  %582 = vset.pattern.permute.xlu0 17
  %583 = vperm.xlu0 %582, %v42
  %v584 = vpop.permute.xlu0 %583
  %v586 = vmul.f32 %v577, %v584
  %v587 = vmul.f32 %v581, %v584
  %v588 = vadd.f32 %v572, %v586
  %v589 = vadd.f32 %v573, %v587
  %v590 = vlaneseq
  %v591 = vshrl.u32 %v590, 7
  %v592 = vsub.s32 2, %v591
  %v593 = vrot.slane %v17, %v592
  %v594 = vlaneseq
  %v595 = vshrl.u32 %v594, 7
  %v596 = vsub.s32 2, %v595
  %v597 = vrot.slane %v18, %v596
  %598 = vset.pattern.permute.xlu0 18
  %599 = vperm.xlu0 %598, %v42
  %v600 = vpop.permute.xlu0 %599
  %v602 = vmul.f32 %v593, %v600
  %v603 = vmul.f32 %v597, %v600
  %v604 = vadd.f32 %v588, %v602
  %v605 = vadd.f32 %v589, %v603
  %v606 = vlaneseq
  %v607 = vshrl.u32 %v606, 7
  %v608 = vsub.s32 3, %v607
  %v609 = vrot.slane %v17, %v608
  %v610 = vlaneseq
  %v611 = vshrl.u32 %v610, 7
  %v612 = vsub.s32 3, %v611
  %v613 = vrot.slane %v18, %v612
  %614 = vset.pattern.permute.xlu0 19
  %615 = vperm.xlu0 %614, %v42
  %v616 = vpop.permute.xlu0 %615
  %v618 = vmul.f32 %v609, %v616
  %v619 = vmul.f32 %v613, %v616
  %v620 = vadd.f32 %v604, %v618
  %v621 = vadd.f32 %v605, %v619
  %v622 = vlaneseq
  %v623 = vshrl.u32 %v622, 7
  %v624 = vsub.s32 4, %v623
  %v625 = vrot.slane %v17, %v624
  %v626 = vlaneseq
  %v627 = vshrl.u32 %v626, 7
  %v628 = vsub.s32 4, %v627
  %v629 = vrot.slane %v18, %v628
  %v630 = vmul.f32 %v625, %v568
  %v631 = vmul.f32 %v629, %v568
  %v632 = vadd.f32 %v556, %v630
  %v633 = vadd.f32 %v557, %v631
  %v634 = vlaneseq
  %v635 = vshrl.u32 %v634, 7
  %v636 = vsub.s32 5, %v635
  %v637 = vrot.slane %v17, %v636
  %v638 = vlaneseq
  %v639 = vshrl.u32 %v638, 7
  %v640 = vsub.s32 5, %v639
  %v641 = vrot.slane %v18, %v640
  %v642 = vmul.f32 %v637, %v584
  %v643 = vmul.f32 %v641, %v584
  %v644 = vadd.f32 %v632, %v642
  %v645 = vadd.f32 %v633, %v643
  %v646 = vlaneseq
  %v647 = vshrl.u32 %v646, 7
  %v648 = vsub.s32 6, %v647
  %v649 = vrot.slane %v17, %v648
  %v650 = vlaneseq
  %v651 = vshrl.u32 %v650, 7
  %v652 = vsub.s32 6, %v651
  %v653 = vrot.slane %v18, %v652
  %v654 = vmul.f32 %v649, %v600
  %v655 = vmul.f32 %v653, %v600
  %v656 = vadd.f32 %v644, %v654
  %v657 = vadd.f32 %v645, %v655
  %v658 = vlaneseq
  %v659 = vshrl.u32 %v658, 7
  %v660 = vsub.s32 7, %v659
  %v661 = vrot.slane %v17, %v660
  %v662 = vlaneseq
  %v663 = vshrl.u32 %v662, 7
  %v664 = vsub.s32 7, %v663
  %v665 = vrot.slane %v18, %v664
  %v666 = vmul.f32 %v661, %v616
  %v667 = vmul.f32 %v665, %v616
  %v668 = vadd.f32 %v656, %v666
  %v669 = vadd.f32 %v657, %v667
  %670 = vrot.lane.b32.xlu0 %v17, 127
  %v671 = vpop.permute.xlu0 %670
  %672 = vrot.lane.b32.xlu0 %v18, 127
  %v673 = vpop.permute.xlu0 %672
  %vm674 = vcmp.lt.s32.totalorder %v24, 127
  %v675 = vsel %vm674, %v671, %v673
  %v676 = vsel %vm674, %v673, %v671
  %s677 = scalar_lea.vmem %s3, 5
  %v678 = vld [vmem:[%s677] ss:$8 sm:$0x3]
  %v680 = vlaneseq
  %v681 = vshrl.u32 %v680, 7
  %v682 = vsub.s32 0, %v681
  %v683 = vrot.slane %v678, %v682
  %v684 = vlaneseq
  %v685 = vshrl.u32 %v684, 7
  %v686 = vsub.s32 1, %v685
  %v687 = vrot.slane %v678, %v686
  %v690 = vmul.f32 %v675, %v683
  %v691 = vmul.f32 %v676, %v687
  %v692 = vlaneseq
  %v693 = vshrl.u32 %v692, 7
  %v694 = vsub.s32 0, %v693
  %v695 = vrot.slane %v690, %v694
  %v696 = vlaneseq
  %v697 = vshrl.u32 %v696, 7
  %v698 = vsub.s32 0, %v697
  %v699 = vrot.slane %v691, %v698
  %700 = vset.pattern.permute.xlu0 20
  %701 = vperm.xlu0 %700, %v42
  %v702 = vpop.permute.xlu0 %701
  %v704 = vmul.f32 %v695, %v702
  %v705 = vmul.f32 %v699, %v702
  %v706 = vadd.f32 %v620, %v704
  %v707 = vadd.f32 %v621, %v705
  %v708 = vlaneseq
  %v709 = vshrl.u32 %v708, 7
  %v710 = vsub.s32 1, %v709
  %v711 = vrot.slane %v690, %v710
  %v712 = vlaneseq
  %v713 = vshrl.u32 %v712, 7
  %v714 = vsub.s32 1, %v713
  %v715 = vrot.slane %v691, %v714
  %716 = vset.pattern.permute.xlu0 21
  %717 = vperm.xlu0 %716, %v42
  %v718 = vpop.permute.xlu0 %717
  %v720 = vmul.f32 %v711, %v718
  %v721 = vmul.f32 %v715, %v718
  %v722 = vadd.f32 %v706, %v720
  %v723 = vadd.f32 %v707, %v721
  %v724 = vlaneseq
  %v725 = vshrl.u32 %v724, 7
  %v726 = vsub.s32 2, %v725
  %v727 = vrot.slane %v690, %v726
  %v728 = vlaneseq
  %v729 = vshrl.u32 %v728, 7
  %v730 = vsub.s32 2, %v729
  %v731 = vrot.slane %v691, %v730
  %732 = vset.pattern.permute.xlu0 22
  %733 = vperm.xlu0 %732, %v42
  %v734 = vpop.permute.xlu0 %733
  %v736 = vmul.f32 %v727, %v734
  %v737 = vmul.f32 %v731, %v734
  %v738 = vadd.f32 %v722, %v736
  %v739 = vadd.f32 %v723, %v737
  %v740 = vlaneseq
  %v741 = vshrl.u32 %v740, 7
  %v742 = vsub.s32 3, %v741
  %v743 = vrot.slane %v690, %v742
  %v744 = vlaneseq
  %v745 = vshrl.u32 %v744, 7
  %v746 = vsub.s32 3, %v745
  %v747 = vrot.slane %v691, %v746
  %748 = vset.pattern.permute.xlu0 23
  %749 = vperm.xlu0 %748, %v42
  %v750 = vpop.permute.xlu0 %749
  %v752 = vmul.f32 %v743, %v750
  %v753 = vmul.f32 %v747, %v750
  %v754 = vadd.f32 %v738, %v752
  %v755 = vadd.f32 %v739, %v753
  %v756 = vlaneseq
  %v757 = vshrl.u32 %v756, 7
  %v758 = vsub.s32 4, %v757
  %v759 = vrot.slane %v690, %v758
  %v760 = vlaneseq
  %v761 = vshrl.u32 %v760, 7
  %v762 = vsub.s32 4, %v761
  %v763 = vrot.slane %v691, %v762
  %v764 = vmul.f32 %v759, %v702
  %v765 = vmul.f32 %v763, %v702
  %v766 = vadd.f32 %v668, %v764
  %v767 = vadd.f32 %v669, %v765
  %v768 = vlaneseq
  %v769 = vshrl.u32 %v768, 7
  %v770 = vsub.s32 5, %v769
  %v771 = vrot.slane %v690, %v770
  %v772 = vlaneseq
  %v773 = vshrl.u32 %v772, 7
  %v774 = vsub.s32 5, %v773
  %v775 = vrot.slane %v691, %v774
  %v776 = vmul.f32 %v771, %v718
  %v777 = vmul.f32 %v775, %v718
  %v778 = vadd.f32 %v766, %v776
  %v779 = vadd.f32 %v767, %v777
  %v780 = vlaneseq
  %v781 = vshrl.u32 %v780, 7
  %v782 = vsub.s32 6, %v781
  %v783 = vrot.slane %v690, %v782
  %v784 = vlaneseq
  %v785 = vshrl.u32 %v784, 7
  %v786 = vsub.s32 6, %v785
  %v787 = vrot.slane %v691, %v786
  %v788 = vmul.f32 %v783, %v734
  %v789 = vmul.f32 %v787, %v734
  %v790 = vadd.f32 %v778, %v788
  %v791 = vadd.f32 %v779, %v789
  %v792 = vlaneseq
  %v793 = vshrl.u32 %v792, 7
  %v794 = vsub.s32 7, %v793
  %v795 = vrot.slane %v690, %v794
  %v796 = vlaneseq
  %v797 = vshrl.u32 %v796, 7
  %v798 = vsub.s32 7, %v797
  %v799 = vrot.slane %v691, %v798
  %v800 = vmul.f32 %v795, %v750
  %v801 = vmul.f32 %v799, %v750
  %v802 = vadd.f32 %v790, %v800
  %v803 = vadd.f32 %v791, %v801
  %804 = vrot.lane.b32.xlu0 %v17, 113
  %v805 = vpop.permute.xlu0 %804
  %806 = vrot.lane.b32.xlu0 %v18, 113
  %v807 = vpop.permute.xlu0 %806
  %vm808 = vcmp.lt.s32.totalorder %v24, 113
  %v809 = vsel %vm808, %v805, %v807
  %v810 = vsel %vm808, %v807, %v805
  %s811 = scalar_lea.vmem %s3, 6
  %v812 = vld [vmem:[%s811] ss:$8 sm:$0x3]
  %v814 = vlaneseq
  %v815 = vshrl.u32 %v814, 7
  %v816 = vsub.s32 0, %v815
  %v817 = vrot.slane %v812, %v816
  %v818 = vlaneseq
  %v819 = vshrl.u32 %v818, 7
  %v820 = vsub.s32 1, %v819
  %v821 = vrot.slane %v812, %v820
  %v824 = vmul.f32 %v809, %v817
  %v825 = vmul.f32 %v810, %v821
  %v826 = vlaneseq
  %v827 = vshrl.u32 %v826, 7
  %v828 = vsub.s32 0, %v827
  %v829 = vrot.slane %v824, %v828
  %v830 = vlaneseq
  %v831 = vshrl.u32 %v830, 7
  %v832 = vsub.s32 0, %v831
  %v833 = vrot.slane %v825, %v832
  %834 = vset.pattern.permute.xlu0 24
  %835 = vperm.xlu0 %834, %v42
  %v836 = vpop.permute.xlu0 %835
  %v838 = vmul.f32 %v829, %v836
  %v839 = vmul.f32 %v833, %v836
  %v840 = vadd.f32 %v754, %v838
  %v841 = vadd.f32 %v755, %v839
  %v842 = vlaneseq
  %v843 = vshrl.u32 %v842, 7
  %v844 = vsub.s32 1, %v843
  %v845 = vrot.slane %v824, %v844
  %v846 = vlaneseq
  %v847 = vshrl.u32 %v846, 7
  %v848 = vsub.s32 1, %v847
  %v849 = vrot.slane %v825, %v848
  %850 = vset.pattern.permute.xlu0 25
  %851 = vperm.xlu0 %850, %v42
  %v852 = vpop.permute.xlu0 %851
  %v854 = vmul.f32 %v845, %v852
  %v855 = vmul.f32 %v849, %v852
  %v856 = vadd.f32 %v840, %v854
  %v857 = vadd.f32 %v841, %v855
  %v858 = vlaneseq
  %v859 = vshrl.u32 %v858, 7
  %v860 = vsub.s32 2, %v859
  %v861 = vrot.slane %v824, %v860
  %v862 = vlaneseq
  %v863 = vshrl.u32 %v862, 7
  %v864 = vsub.s32 2, %v863
  %v865 = vrot.slane %v825, %v864
  %866 = vset.pattern.permute.xlu0 26
  %867 = vperm.xlu0 %866, %v42
  %v868 = vpop.permute.xlu0 %867
  %v870 = vmul.f32 %v861, %v868
  %v871 = vmul.f32 %v865, %v868
  %v872 = vadd.f32 %v856, %v870
  %v873 = vadd.f32 %v857, %v871
  %v874 = vlaneseq
  %v875 = vshrl.u32 %v874, 7
  %v876 = vsub.s32 3, %v875
  %v877 = vrot.slane %v824, %v876
  %v878 = vlaneseq
  %v879 = vshrl.u32 %v878, 7
  %v880 = vsub.s32 3, %v879
  %v881 = vrot.slane %v825, %v880
  %882 = vset.pattern.permute.xlu0 27
  %883 = vperm.xlu0 %882, %v42
  %v884 = vpop.permute.xlu0 %883
  %v886 = vmul.f32 %v877, %v884
  %v887 = vmul.f32 %v881, %v884
  %v888 = vadd.f32 %v872, %v886
  %v889 = vadd.f32 %v873, %v887
  %v890 = vlaneseq
  %v891 = vshrl.u32 %v890, 7
  %v892 = vsub.s32 4, %v891
  %v893 = vrot.slane %v824, %v892
  %v894 = vlaneseq
  %v895 = vshrl.u32 %v894, 7
  %v896 = vsub.s32 4, %v895
  %v897 = vrot.slane %v825, %v896
  %v898 = vmul.f32 %v893, %v836
  %v899 = vmul.f32 %v897, %v836
  %v900 = vadd.f32 %v802, %v898
  %v901 = vadd.f32 %v803, %v899
  %v902 = vlaneseq
  %v903 = vshrl.u32 %v902, 7
  %v904 = vsub.s32 5, %v903
  %v905 = vrot.slane %v824, %v904
  %v906 = vlaneseq
  %v907 = vshrl.u32 %v906, 7
  %v908 = vsub.s32 5, %v907
  %v909 = vrot.slane %v825, %v908
  %v910 = vmul.f32 %v905, %v852
  %v911 = vmul.f32 %v909, %v852
  %v912 = vadd.f32 %v900, %v910
  %v913 = vadd.f32 %v901, %v911
  %v914 = vlaneseq
  %v915 = vshrl.u32 %v914, 7
  %v916 = vsub.s32 6, %v915
  %v917 = vrot.slane %v824, %v916
  %v918 = vlaneseq
  %v919 = vshrl.u32 %v918, 7
  %v920 = vsub.s32 6, %v919
  %v921 = vrot.slane %v825, %v920
  %v922 = vmul.f32 %v917, %v868
  %v923 = vmul.f32 %v921, %v868
  %v924 = vadd.f32 %v912, %v922
  %v925 = vadd.f32 %v913, %v923
  %v926 = vlaneseq
  %v927 = vshrl.u32 %v926, 7
  %v928 = vsub.s32 7, %v927
  %v929 = vrot.slane %v824, %v928
  %v930 = vlaneseq
  %v931 = vshrl.u32 %v930, 7
  %v932 = vsub.s32 7, %v931
  %v933 = vrot.slane %v825, %v932
  %v934 = vmul.f32 %v929, %v884
  %v935 = vmul.f32 %v933, %v884
  %v936 = vadd.f32 %v924, %v934
  %v937 = vadd.f32 %v925, %v935
  %938 = vrot.lane.b32.xlu0 %v17, 112
  %v939 = vpop.permute.xlu0 %938
  %940 = vrot.lane.b32.xlu0 %v18, 112
  %v941 = vpop.permute.xlu0 %940
  %vm942 = vcmp.lt.s32.totalorder %v24, 112
  %v943 = vsel %vm942, %v939, %v941
  %v944 = vsel %vm942, %v941, %v939
  %s945 = scalar_lea.vmem %s3, 7
  %v946 = vld [vmem:[%s945] ss:$8 sm:$0x3]
  %v948 = vlaneseq
  %v949 = vshrl.u32 %v948, 7
  %v950 = vsub.s32 0, %v949
  %v951 = vrot.slane %v946, %v950
  %v952 = vlaneseq
  %v953 = vshrl.u32 %v952, 7
  %v954 = vsub.s32 1, %v953
  %v955 = vrot.slane %v946, %v954
  %v958 = vmul.f32 %v943, %v951
  %v959 = vmul.f32 %v944, %v955
  %v960 = vlaneseq
  %v961 = vshrl.u32 %v960, 7
  %v962 = vsub.s32 0, %v961
  %v963 = vrot.slane %v958, %v962
  %v964 = vlaneseq
  %v965 = vshrl.u32 %v964, 7
  %v966 = vsub.s32 0, %v965
  %v967 = vrot.slane %v959, %v966
  %968 = vset.pattern.permute.xlu0 28
  %969 = vperm.xlu0 %968, %v42
  %v970 = vpop.permute.xlu0 %969
  %v972 = vmul.f32 %v963, %v970
  %v973 = vmul.f32 %v967, %v970
  %v974 = vadd.f32 %v888, %v972
  %v975 = vadd.f32 %v889, %v973
  %v976 = vlaneseq
  %v977 = vshrl.u32 %v976, 7
  %v978 = vsub.s32 1, %v977
  %v979 = vrot.slane %v958, %v978
  %v980 = vlaneseq
  %v981 = vshrl.u32 %v980, 7
  %v982 = vsub.s32 1, %v981
  %v983 = vrot.slane %v959, %v982
  %984 = vset.pattern.permute.xlu0 29
  %985 = vperm.xlu0 %984, %v42
  %v986 = vpop.permute.xlu0 %985
  %v988 = vmul.f32 %v979, %v986
  %v989 = vmul.f32 %v983, %v986
  %v990 = vadd.f32 %v974, %v988
  %v991 = vadd.f32 %v975, %v989
  %v992 = vlaneseq
  %v993 = vshrl.u32 %v992, 7
  %v994 = vsub.s32 2, %v993
  %v995 = vrot.slane %v958, %v994
  %v996 = vlaneseq
  %v997 = vshrl.u32 %v996, 7
  %v998 = vsub.s32 2, %v997
  %v999 = vrot.slane %v959, %v998
  %1000 = vset.pattern.permute.xlu0 30
  %1001 = vperm.xlu0 %1000, %v42
  %v1002 = vpop.permute.xlu0 %1001
  %v1004 = vmul.f32 %v995, %v1002
  %v1005 = vmul.f32 %v999, %v1002
  %v1006 = vadd.f32 %v990, %v1004
  %v1007 = vadd.f32 %v991, %v1005
  %v1008 = vlaneseq
  %v1009 = vshrl.u32 %v1008, 7
  %v1010 = vsub.s32 3, %v1009
  %v1011 = vrot.slane %v958, %v1010
  %v1012 = vlaneseq
  %v1013 = vshrl.u32 %v1012, 7
  %v1014 = vsub.s32 3, %v1013
  %v1015 = vrot.slane %v959, %v1014
  %1016 = vset.pattern.permute.xlu0 31
  %1017 = vperm.xlu0 %1016, %v42
  %v1018 = vpop.permute.xlu0 %1017
  %v1020 = vmul.f32 %v1011, %v1018
  %v1021 = vmul.f32 %v1015, %v1018
  %v1022 = vadd.f32 %v1006, %v1020
  %v1023 = vadd.f32 %v1007, %v1021
  %v1024 = vlaneseq
  %v1025 = vshrl.u32 %v1024, 7
  %v1026 = vsub.s32 4, %v1025
  %v1027 = vrot.slane %v958, %v1026
  %v1028 = vlaneseq
  %v1029 = vshrl.u32 %v1028, 7
  %v1030 = vsub.s32 4, %v1029
  %v1031 = vrot.slane %v959, %v1030
  %v1032 = vmul.f32 %v1027, %v970
  %v1033 = vmul.f32 %v1031, %v970
  %v1034 = vadd.f32 %v936, %v1032
  %v1035 = vadd.f32 %v937, %v1033
  %v1036 = vlaneseq
  %v1037 = vshrl.u32 %v1036, 7
  %v1038 = vsub.s32 5, %v1037
  %v1039 = vrot.slane %v958, %v1038
  %v1040 = vlaneseq
  %v1041 = vshrl.u32 %v1040, 7
  %v1042 = vsub.s32 5, %v1041
  %v1043 = vrot.slane %v959, %v1042
  %v1044 = vmul.f32 %v1039, %v986
  %v1045 = vmul.f32 %v1043, %v986
  %v1046 = vadd.f32 %v1034, %v1044
  %v1047 = vadd.f32 %v1035, %v1045
  %v1048 = vlaneseq
  %v1049 = vshrl.u32 %v1048, 7
  %v1050 = vsub.s32 6, %v1049
  %v1051 = vrot.slane %v958, %v1050
  %v1052 = vlaneseq
  %v1053 = vshrl.u32 %v1052, 7
  %v1054 = vsub.s32 6, %v1053
  %v1055 = vrot.slane %v959, %v1054
  %v1056 = vmul.f32 %v1051, %v1002
  %v1057 = vmul.f32 %v1055, %v1002
  %v1058 = vadd.f32 %v1046, %v1056
  %v1059 = vadd.f32 %v1047, %v1057
  %v1060 = vlaneseq
  %v1061 = vshrl.u32 %v1060, 7
  %v1062 = vsub.s32 7, %v1061
  %v1063 = vrot.slane %v958, %v1062
  %v1064 = vlaneseq
  %v1065 = vshrl.u32 %v1064, 7
  %v1066 = vsub.s32 7, %v1065
  %v1067 = vrot.slane %v959, %v1066
  %v1068 = vmul.f32 %v1063, %v1018
  %v1069 = vmul.f32 %v1067, %v1018
  %v1070 = vadd.f32 %v1058, %v1068
  %v1071 = vadd.f32 %v1059, %v1069
  %1072 = vrot.lane.b32.xlu0 %v17, 111
  %v1073 = vpop.permute.xlu0 %1072
  %1074 = vrot.lane.b32.xlu0 %v18, 111
  %v1075 = vpop.permute.xlu0 %1074
  %vm1076 = vcmp.lt.s32.totalorder %v24, 111
  %v1077 = vsel %vm1076, %v1073, %v1075
  %v1078 = vsel %vm1076, %v1075, %v1073
  %s1079 = scalar_lea.vmem %s3, 16
  %v1080 = vld [vmem:[%s1079] ss:$8 sm:$0x3]
  %v1082 = vlaneseq
  %v1083 = vshrl.u32 %v1082, 7
  %v1084 = vsub.s32 0, %v1083
  %v1085 = vrot.slane %v1080, %v1084
  %v1086 = vlaneseq
  %v1087 = vshrl.u32 %v1086, 7
  %v1088 = vsub.s32 1, %v1087
  %v1089 = vrot.slane %v1080, %v1088
  %v1092 = vmul.f32 %v1077, %v1085
  %v1093 = vmul.f32 %v1078, %v1089
  %v1094 = vlaneseq
  %v1095 = vshrl.u32 %v1094, 7
  %v1096 = vsub.s32 0, %v1095
  %v1097 = vrot.slane %v1092, %v1096
  %v1098 = vlaneseq
  %v1099 = vshrl.u32 %v1098, 7
  %v1100 = vsub.s32 0, %v1099
  %v1101 = vrot.slane %v1093, %v1100
  %1102 = vset.pattern.permute.xlu0 32
  %1103 = vperm.xlu0 %1102, %v42
  %v1104 = vpop.permute.xlu0 %1103
  %v1106 = vmul.f32 %v1097, %v1104
  %v1107 = vmul.f32 %v1101, %v1104
  %v1108 = vadd.f32 %v1022, %v1106
  %v1109 = vadd.f32 %v1023, %v1107
  %v1110 = vlaneseq
  %v1111 = vshrl.u32 %v1110, 7
  %v1112 = vsub.s32 1, %v1111
  %v1113 = vrot.slane %v1092, %v1112
  %v1114 = vlaneseq
  %v1115 = vshrl.u32 %v1114, 7
  %v1116 = vsub.s32 1, %v1115
  %v1117 = vrot.slane %v1093, %v1116
  %1118 = vset.pattern.permute.xlu0 33
  %1119 = vperm.xlu0 %1118, %v42
  %v1120 = vpop.permute.xlu0 %1119
  %v1122 = vmul.f32 %v1113, %v1120
  %v1123 = vmul.f32 %v1117, %v1120
  %v1124 = vadd.f32 %v1108, %v1122
  %v1125 = vadd.f32 %v1109, %v1123
  %v1126 = vlaneseq
  %v1127 = vshrl.u32 %v1126, 7
  %v1128 = vsub.s32 2, %v1127
  %v1129 = vrot.slane %v1092, %v1128
  %v1130 = vlaneseq
  %v1131 = vshrl.u32 %v1130, 7
  %v1132 = vsub.s32 2, %v1131
  %v1133 = vrot.slane %v1093, %v1132
  %1134 = vset.pattern.permute.xlu0 34
  %1135 = vperm.xlu0 %1134, %v42
  %v1136 = vpop.permute.xlu0 %1135
  %v1138 = vmul.f32 %v1129, %v1136
  %v1139 = vmul.f32 %v1133, %v1136
  %v1140 = vadd.f32 %v1124, %v1138
  %v1141 = vadd.f32 %v1125, %v1139
  %v1142 = vlaneseq
  %v1143 = vshrl.u32 %v1142, 7
  %v1144 = vsub.s32 3, %v1143
  %v1145 = vrot.slane %v1092, %v1144
  %v1146 = vlaneseq
  %v1147 = vshrl.u32 %v1146, 7
  %v1148 = vsub.s32 3, %v1147
  %v1149 = vrot.slane %v1093, %v1148
  %1150 = vset.pattern.permute.xlu0 35
  %1151 = vperm.xlu0 %1150, %v42
  %v1152 = vpop.permute.xlu0 %1151
  %v1154 = vmul.f32 %v1145, %v1152
  %v1155 = vmul.f32 %v1149, %v1152
  %v1156 = vadd.f32 %v1140, %v1154
  %v1157 = vadd.f32 %v1141, %v1155
  %v1158 = vlaneseq
  %v1159 = vshrl.u32 %v1158, 7
  %v1160 = vsub.s32 4, %v1159
  %v1161 = vrot.slane %v1092, %v1160
  %v1162 = vlaneseq
  %v1163 = vshrl.u32 %v1162, 7
  %v1164 = vsub.s32 4, %v1163
  %v1165 = vrot.slane %v1093, %v1164
  %v1166 = vmul.f32 %v1161, %v1104
  %v1167 = vmul.f32 %v1165, %v1104
  %v1168 = vadd.f32 %v1070, %v1166
  %v1169 = vadd.f32 %v1071, %v1167
  %v1170 = vlaneseq
  %v1171 = vshrl.u32 %v1170, 7
  %v1172 = vsub.s32 5, %v1171
  %v1173 = vrot.slane %v1092, %v1172
  %v1174 = vlaneseq
  %v1175 = vshrl.u32 %v1174, 7
  %v1176 = vsub.s32 5, %v1175
  %v1177 = vrot.slane %v1093, %v1176
  %v1178 = vmul.f32 %v1173, %v1120
  %v1179 = vmul.f32 %v1177, %v1120
  %v1180 = vadd.f32 %v1168, %v1178
  %v1181 = vadd.f32 %v1169, %v1179
  %v1182 = vlaneseq
  %v1183 = vshrl.u32 %v1182, 7
  %v1184 = vsub.s32 6, %v1183
  %v1185 = vrot.slane %v1092, %v1184
  %v1186 = vlaneseq
  %v1187 = vshrl.u32 %v1186, 7
  %v1188 = vsub.s32 6, %v1187
  %v1189 = vrot.slane %v1093, %v1188
  %v1190 = vmul.f32 %v1185, %v1136
  %v1191 = vmul.f32 %v1189, %v1136
  %v1192 = vadd.f32 %v1180, %v1190
  %v1193 = vadd.f32 %v1181, %v1191
  %v1194 = vlaneseq
  %v1195 = vshrl.u32 %v1194, 7
  %v1196 = vsub.s32 7, %v1195
  %v1197 = vrot.slane %v1092, %v1196
  %v1198 = vlaneseq
  %v1199 = vshrl.u32 %v1198, 7
  %v1200 = vsub.s32 7, %v1199
  %v1201 = vrot.slane %v1093, %v1200
  %v1202 = vmul.f32 %v1197, %v1152
  %v1203 = vmul.f32 %v1201, %v1152
  %v1204 = vadd.f32 %v1192, %v1202
  %v1205 = vadd.f32 %v1193, %v1203
  %v1206 = vadd.f32 %v1156, %v1157
  %1207 = vadd.xlane.f32.xlu0 %v1206
  %v1208 = vpop.xlane.xlu0 %1207
  %v1209 = vadd.f32 %v1204, %v1205
  %1210 = vadd.xlane.f32.xlu0 %v1209
  %v1211 = vpop.xlane.xlu0 %1210
  %v1212 = vadd.f32 %v1208, %v1211
  %v1213 = vmul.f32 %v1212, 0.001953125
  %v1214 = vsub.f32 %v1156, %v1213
  %v1215 = vsub.f32 %v1157, %v1213
  %v1216 = vsub.f32 %v1204, %v1213
  %v1217 = vsub.f32 %v1205, %v1213
  %v1218 = vmul.f32 %v1214, %v1214
  %v1219 = vmul.f32 %v1215, %v1215
  %v1220 = vadd.f32 %v1218, %v1219
  %1221 = vadd.xlane.f32.xlu0 %v1220
  %v1222 = vpop.xlane.xlu0 %1221
  %v1223 = vadd.f32 %v1222, 0.0
  %v1224 = vmul.f32 %v1216, %v1216
  %v1225 = vmul.f32 %v1217, %v1217
  %v1226 = vadd.f32 %v1224, %v1225
  %1227 = vadd.xlane.f32.xlu0 %v1226
  %v1228 = vpop.xlane.xlu0 %1227
  %v1229 = vadd.f32 %v1223, %v1228
  %v1230 = vmul.f32 %v1229, 0.001953125
  %v1231 = vadd.f32 %v1230, 1e-05
  %v1232 = vrsqrt.pop %v1231
  %v1233 = vmul.f32 %v1214, %v1232
  %v1234 = vmul.f32 %v1215, %v1232
  %v1235 = vmax.f32 %v1233, 0.0
  %v1236 = vmax.f32 %v1234, 0.0
  %v1237 = vmul.f32 %v1216, %v1232
  %v1238 = vmul.f32 %v1217, %v1232
  %v1239 = vmax.f32 %v1237, 0.0
  %v1240 = vmax.f32 %v1238, 0.0
  %1241 = vrot.lane.b32.xlu0 %v1235, 17
  %v1242 = vpop.permute.xlu0 %1241
  %1243 = vrot.lane.b32.xlu0 %v1236, 17
  %v1244 = vpop.permute.xlu0 %1243
  %v1245 = vsel %vm25, %v1242, %v1244
  %v1246 = vsel %vm25, %v1244, %v1242
  %v1247 = vmul.f32 %v1246, %v33
  %v1248 = vmul.f32 %v1245, %v37
  %v1249 = vld [vmem:[%s2] sm:$0xff]
  %v1250 = vlaneseq
  %v1251 = vshrl.u32 %v1250, 7
  %v1252 = vsub.s32 0, %v1251
  %v1253 = vrot.slane %v1247, %v1252
  %v1254 = vlaneseq
  %v1255 = vshrl.u32 %v1254, 7
  %v1256 = vsub.s32 0, %v1255
  %v1257 = vrot.slane %v1248, %v1256
  %1259 = vset.pattern.permute.xlu0 0
  %1260 = vperm.xlu0 %1259, %v1249
  %v1261 = vpop.permute.xlu0 %1260
  %v1263 = vmul.f32 %v1253, %v1261
  %v1264 = vmul.f32 %v1257, %v1261
  %v1265 = vadd.f32 %v1263, 0.0
  %v1266 = vadd.f32 %v1264, 0.0
  %v1267 = vlaneseq
  %v1268 = vshrl.u32 %v1267, 7
  %v1269 = vsub.s32 1, %v1268
  %v1270 = vrot.slane %v1247, %v1269
  %v1271 = vlaneseq
  %v1272 = vshrl.u32 %v1271, 7
  %v1273 = vsub.s32 1, %v1272
  %v1274 = vrot.slane %v1248, %v1273
  %1275 = vset.pattern.permute.xlu0 1
  %1276 = vperm.xlu0 %1275, %v1249
  %v1277 = vpop.permute.xlu0 %1276
  %v1279 = vmul.f32 %v1270, %v1277
  %v1280 = vmul.f32 %v1274, %v1277
  %v1281 = vadd.f32 %v1265, %v1279
  %v1282 = vadd.f32 %v1266, %v1280
  %v1283 = vlaneseq
  %v1284 = vshrl.u32 %v1283, 7
  %v1285 = vsub.s32 2, %v1284
  %v1286 = vrot.slane %v1247, %v1285
  %v1287 = vlaneseq
  %v1288 = vshrl.u32 %v1287, 7
  %v1289 = vsub.s32 2, %v1288
  %v1290 = vrot.slane %v1248, %v1289
  %1291 = vset.pattern.permute.xlu0 2
  %1292 = vperm.xlu0 %1291, %v1249
  %v1293 = vpop.permute.xlu0 %1292
  %v1295 = vmul.f32 %v1286, %v1293
  %v1296 = vmul.f32 %v1290, %v1293
  %v1297 = vadd.f32 %v1281, %v1295
  %v1298 = vadd.f32 %v1282, %v1296
  %v1299 = vlaneseq
  %v1300 = vshrl.u32 %v1299, 7
  %v1301 = vsub.s32 3, %v1300
  %v1302 = vrot.slane %v1247, %v1301
  %v1303 = vlaneseq
  %v1304 = vshrl.u32 %v1303, 7
  %v1305 = vsub.s32 3, %v1304
  %v1306 = vrot.slane %v1248, %v1305
  %1307 = vset.pattern.permute.xlu0 3
  %1308 = vperm.xlu0 %1307, %v1249
  %v1309 = vpop.permute.xlu0 %1308
  %v1311 = vmul.f32 %v1302, %v1309
  %v1312 = vmul.f32 %v1306, %v1309
  %v1313 = vadd.f32 %v1297, %v1311
  %v1314 = vadd.f32 %v1298, %v1312
  %v1315 = vlaneseq
  %v1316 = vshrl.u32 %v1315, 7
  %v1317 = vsub.s32 4, %v1316
  %v1318 = vrot.slane %v1247, %v1317
  %v1319 = vlaneseq
  %v1320 = vshrl.u32 %v1319, 7
  %v1321 = vsub.s32 4, %v1320
  %v1322 = vrot.slane %v1248, %v1321
  %1323 = vset.pattern.permute.xlu0 4
  %1324 = vperm.xlu0 %1323, %v1249
  %v1325 = vpop.permute.xlu0 %1324
  %v1327 = vmul.f32 %v1318, %v1325
  %v1328 = vmul.f32 %v1322, %v1325
  %v1329 = vadd.f32 %v1313, %v1327
  %v1330 = vadd.f32 %v1314, %v1328
  %v1331 = vlaneseq
  %v1332 = vshrl.u32 %v1331, 7
  %v1333 = vsub.s32 5, %v1332
  %v1334 = vrot.slane %v1247, %v1333
  %v1335 = vlaneseq
  %v1336 = vshrl.u32 %v1335, 7
  %v1337 = vsub.s32 5, %v1336
  %v1338 = vrot.slane %v1248, %v1337
  %1339 = vset.pattern.permute.xlu0 5
  %1340 = vperm.xlu0 %1339, %v1249
  %v1341 = vpop.permute.xlu0 %1340
  %v1343 = vmul.f32 %v1334, %v1341
  %v1344 = vmul.f32 %v1338, %v1341
  %v1345 = vadd.f32 %v1329, %v1343
  %v1346 = vadd.f32 %v1330, %v1344
  %v1347 = vlaneseq
  %v1348 = vshrl.u32 %v1347, 7
  %v1349 = vsub.s32 6, %v1348
  %v1350 = vrot.slane %v1247, %v1349
  %v1351 = vlaneseq
  %v1352 = vshrl.u32 %v1351, 7
  %v1353 = vsub.s32 6, %v1352
  %v1354 = vrot.slane %v1248, %v1353
  %1355 = vset.pattern.permute.xlu0 6
  %1356 = vperm.xlu0 %1355, %v1249
  %v1357 = vpop.permute.xlu0 %1356
  %v1359 = vmul.f32 %v1350, %v1357
  %v1360 = vmul.f32 %v1354, %v1357
  %v1361 = vadd.f32 %v1345, %v1359
  %v1362 = vadd.f32 %v1346, %v1360
  %v1363 = vlaneseq
  %v1364 = vshrl.u32 %v1363, 7
  %v1365 = vsub.s32 7, %v1364
  %v1366 = vrot.slane %v1247, %v1365
  %v1367 = vlaneseq
  %v1368 = vshrl.u32 %v1367, 7
  %v1369 = vsub.s32 7, %v1368
  %v1370 = vrot.slane %v1248, %v1369
  %1371 = vset.pattern.permute.xlu0 7
  %1372 = vperm.xlu0 %1371, %v1249
  %v1373 = vpop.permute.xlu0 %1372
  %v1375 = vmul.f32 %v1366, %v1373
  %v1376 = vmul.f32 %v1370, %v1373
  %v1377 = vadd.f32 %v1361, %v1375
  %v1378 = vadd.f32 %v1362, %v1376
  %1379 = vrot.lane.b32.xlu0 %v1235, 16
  %v1380 = vpop.permute.xlu0 %1379
  %1381 = vrot.lane.b32.xlu0 %v1236, 16
  %v1382 = vpop.permute.xlu0 %1381
  %v1383 = vsel %vm160, %v1380, %v1382
  %v1384 = vsel %vm160, %v1382, %v1380
  %v1385 = vmul.f32 %v1384, %v169
  %v1386 = vmul.f32 %v1383, %v173
  %v1387 = vlaneseq
  %v1388 = vshrl.u32 %v1387, 7
  %v1389 = vsub.s32 0, %v1388
  %v1390 = vrot.slane %v1385, %v1389
  %v1391 = vlaneseq
  %v1392 = vshrl.u32 %v1391, 7
  %v1393 = vsub.s32 0, %v1392
  %v1394 = vrot.slane %v1386, %v1393
  %1395 = vset.pattern.permute.xlu0 8
  %1396 = vperm.xlu0 %1395, %v1249
  %v1397 = vpop.permute.xlu0 %1396
  %v1399 = vmul.f32 %v1390, %v1397
  %v1400 = vmul.f32 %v1394, %v1397
  %v1401 = vadd.f32 %v1377, %v1399
  %v1402 = vadd.f32 %v1378, %v1400
  %v1403 = vlaneseq
  %v1404 = vshrl.u32 %v1403, 7
  %v1405 = vsub.s32 1, %v1404
  %v1406 = vrot.slane %v1385, %v1405
  %v1407 = vlaneseq
  %v1408 = vshrl.u32 %v1407, 7
  %v1409 = vsub.s32 1, %v1408
  %v1410 = vrot.slane %v1386, %v1409
  %1411 = vset.pattern.permute.xlu0 9
  %1412 = vperm.xlu0 %1411, %v1249
  %v1413 = vpop.permute.xlu0 %1412
  %v1415 = vmul.f32 %v1406, %v1413
  %v1416 = vmul.f32 %v1410, %v1413
  %v1417 = vadd.f32 %v1401, %v1415
  %v1418 = vadd.f32 %v1402, %v1416
  %v1419 = vlaneseq
  %v1420 = vshrl.u32 %v1419, 7
  %v1421 = vsub.s32 2, %v1420
  %v1422 = vrot.slane %v1385, %v1421
  %v1423 = vlaneseq
  %v1424 = vshrl.u32 %v1423, 7
  %v1425 = vsub.s32 2, %v1424
  %v1426 = vrot.slane %v1386, %v1425
  %1427 = vset.pattern.permute.xlu0 10
  %1428 = vperm.xlu0 %1427, %v1249
  %v1429 = vpop.permute.xlu0 %1428
  %v1431 = vmul.f32 %v1422, %v1429
  %v1432 = vmul.f32 %v1426, %v1429
  %v1433 = vadd.f32 %v1417, %v1431
  %v1434 = vadd.f32 %v1418, %v1432
  %v1435 = vlaneseq
  %v1436 = vshrl.u32 %v1435, 7
  %v1437 = vsub.s32 3, %v1436
  %v1438 = vrot.slane %v1385, %v1437
  %v1439 = vlaneseq
  %v1440 = vshrl.u32 %v1439, 7
  %v1441 = vsub.s32 3, %v1440
  %v1442 = vrot.slane %v1386, %v1441
  %1443 = vset.pattern.permute.xlu0 11
  %1444 = vperm.xlu0 %1443, %v1249
  %v1445 = vpop.permute.xlu0 %1444
  %v1447 = vmul.f32 %v1438, %v1445
  %v1448 = vmul.f32 %v1442, %v1445
  %v1449 = vadd.f32 %v1433, %v1447
  %v1450 = vadd.f32 %v1434, %v1448
  %v1451 = vlaneseq
  %v1452 = vshrl.u32 %v1451, 7
  %v1453 = vsub.s32 4, %v1452
  %v1454 = vrot.slane %v1385, %v1453
  %v1455 = vlaneseq
  %v1456 = vshrl.u32 %v1455, 7
  %v1457 = vsub.s32 4, %v1456
  %v1458 = vrot.slane %v1386, %v1457
  %1459 = vset.pattern.permute.xlu0 12
  %1460 = vperm.xlu0 %1459, %v1249
  %v1461 = vpop.permute.xlu0 %1460
  %v1463 = vmul.f32 %v1454, %v1461
  %v1464 = vmul.f32 %v1458, %v1461
  %v1465 = vadd.f32 %v1449, %v1463
  %v1466 = vadd.f32 %v1450, %v1464
  %v1467 = vlaneseq
  %v1468 = vshrl.u32 %v1467, 7
  %v1469 = vsub.s32 5, %v1468
  %v1470 = vrot.slane %v1385, %v1469
  %v1471 = vlaneseq
  %v1472 = vshrl.u32 %v1471, 7
  %v1473 = vsub.s32 5, %v1472
  %v1474 = vrot.slane %v1386, %v1473
  %1475 = vset.pattern.permute.xlu0 13
  %1476 = vperm.xlu0 %1475, %v1249
  %v1477 = vpop.permute.xlu0 %1476
  %v1479 = vmul.f32 %v1470, %v1477
  %v1480 = vmul.f32 %v1474, %v1477
  %v1481 = vadd.f32 %v1465, %v1479
  %v1482 = vadd.f32 %v1466, %v1480
  %v1483 = vlaneseq
  %v1484 = vshrl.u32 %v1483, 7
  %v1485 = vsub.s32 6, %v1484
  %v1486 = vrot.slane %v1385, %v1485
  %v1487 = vlaneseq
  %v1488 = vshrl.u32 %v1487, 7
  %v1489 = vsub.s32 6, %v1488
  %v1490 = vrot.slane %v1386, %v1489
  %1491 = vset.pattern.permute.xlu0 14
  %1492 = vperm.xlu0 %1491, %v1249
  %v1493 = vpop.permute.xlu0 %1492
  %v1495 = vmul.f32 %v1486, %v1493
  %v1496 = vmul.f32 %v1490, %v1493
  %v1497 = vadd.f32 %v1481, %v1495
  %v1498 = vadd.f32 %v1482, %v1496
  %v1499 = vlaneseq
  %v1500 = vshrl.u32 %v1499, 7
  %v1501 = vsub.s32 7, %v1500
  %v1502 = vrot.slane %v1385, %v1501
  %v1503 = vlaneseq
  %v1504 = vshrl.u32 %v1503, 7
  %v1505 = vsub.s32 7, %v1504
  %v1506 = vrot.slane %v1386, %v1505
  %1507 = vset.pattern.permute.xlu0 15
  %1508 = vperm.xlu0 %1507, %v1249
  %v1509 = vpop.permute.xlu0 %1508
  %v1511 = vmul.f32 %v1502, %v1509
  %v1512 = vmul.f32 %v1506, %v1509
  %v1513 = vadd.f32 %v1497, %v1511
  %v1514 = vadd.f32 %v1498, %v1512
  %1515 = vrot.lane.b32.xlu0 %v1235, 15
  %v1516 = vpop.permute.xlu0 %1515
  %1517 = vrot.lane.b32.xlu0 %v1236, 15
  %v1518 = vpop.permute.xlu0 %1517
  %v1519 = vsel %vm294, %v1516, %v1518
  %v1520 = vsel %vm294, %v1518, %v1516
  %v1521 = vmul.f32 %v1520, %v303
  %v1522 = vmul.f32 %v1519, %v307
  %v1523 = vlaneseq
  %v1524 = vshrl.u32 %v1523, 7
  %v1525 = vsub.s32 0, %v1524
  %v1526 = vrot.slane %v1521, %v1525
  %v1527 = vlaneseq
  %v1528 = vshrl.u32 %v1527, 7
  %v1529 = vsub.s32 0, %v1528
  %v1530 = vrot.slane %v1522, %v1529
  %1531 = vset.pattern.permute.xlu0 16
  %1532 = vperm.xlu0 %1531, %v1249
  %v1533 = vpop.permute.xlu0 %1532
  %v1535 = vmul.f32 %v1526, %v1533
  %v1536 = vmul.f32 %v1530, %v1533
  %v1537 = vadd.f32 %v1513, %v1535
  %v1538 = vadd.f32 %v1514, %v1536
  %v1539 = vlaneseq
  %v1540 = vshrl.u32 %v1539, 7
  %v1541 = vsub.s32 1, %v1540
  %v1542 = vrot.slane %v1521, %v1541
  %v1543 = vlaneseq
  %v1544 = vshrl.u32 %v1543, 7
  %v1545 = vsub.s32 1, %v1544
  %v1546 = vrot.slane %v1522, %v1545
  %1547 = vset.pattern.permute.xlu0 17
  %1548 = vperm.xlu0 %1547, %v1249
  %v1549 = vpop.permute.xlu0 %1548
  %v1551 = vmul.f32 %v1542, %v1549
  %v1552 = vmul.f32 %v1546, %v1549
  %v1553 = vadd.f32 %v1537, %v1551
  %v1554 = vadd.f32 %v1538, %v1552
  %v1555 = vlaneseq
  %v1556 = vshrl.u32 %v1555, 7
  %v1557 = vsub.s32 2, %v1556
  %v1558 = vrot.slane %v1521, %v1557
  %v1559 = vlaneseq
  %v1560 = vshrl.u32 %v1559, 7
  %v1561 = vsub.s32 2, %v1560
  %v1562 = vrot.slane %v1522, %v1561
  %1563 = vset.pattern.permute.xlu0 18
  %1564 = vperm.xlu0 %1563, %v1249
  %v1565 = vpop.permute.xlu0 %1564
  %v1567 = vmul.f32 %v1558, %v1565
  %v1568 = vmul.f32 %v1562, %v1565
  %v1569 = vadd.f32 %v1553, %v1567
  %v1570 = vadd.f32 %v1554, %v1568
  %v1571 = vlaneseq
  %v1572 = vshrl.u32 %v1571, 7
  %v1573 = vsub.s32 3, %v1572
  %v1574 = vrot.slane %v1521, %v1573
  %v1575 = vlaneseq
  %v1576 = vshrl.u32 %v1575, 7
  %v1577 = vsub.s32 3, %v1576
  %v1578 = vrot.slane %v1522, %v1577
  %1579 = vset.pattern.permute.xlu0 19
  %1580 = vperm.xlu0 %1579, %v1249
  %v1581 = vpop.permute.xlu0 %1580
  %v1583 = vmul.f32 %v1574, %v1581
  %v1584 = vmul.f32 %v1578, %v1581
  %v1585 = vadd.f32 %v1569, %v1583
  %v1586 = vadd.f32 %v1570, %v1584
  %v1587 = vlaneseq
  %v1588 = vshrl.u32 %v1587, 7
  %v1589 = vsub.s32 4, %v1588
  %v1590 = vrot.slane %v1521, %v1589
  %v1591 = vlaneseq
  %v1592 = vshrl.u32 %v1591, 7
  %v1593 = vsub.s32 4, %v1592
  %v1594 = vrot.slane %v1522, %v1593
  %1595 = vset.pattern.permute.xlu0 20
  %1596 = vperm.xlu0 %1595, %v1249
  %v1597 = vpop.permute.xlu0 %1596
  %v1599 = vmul.f32 %v1590, %v1597
  %v1600 = vmul.f32 %v1594, %v1597
  %v1601 = vadd.f32 %v1585, %v1599
  %v1602 = vadd.f32 %v1586, %v1600
  %v1603 = vlaneseq
  %v1604 = vshrl.u32 %v1603, 7
  %v1605 = vsub.s32 5, %v1604
  %v1606 = vrot.slane %v1521, %v1605
  %v1607 = vlaneseq
  %v1608 = vshrl.u32 %v1607, 7
  %v1609 = vsub.s32 5, %v1608
  %v1610 = vrot.slane %v1522, %v1609
  %1611 = vset.pattern.permute.xlu0 21
  %1612 = vperm.xlu0 %1611, %v1249
  %v1613 = vpop.permute.xlu0 %1612
  %v1615 = vmul.f32 %v1606, %v1613
  %v1616 = vmul.f32 %v1610, %v1613
  %v1617 = vadd.f32 %v1601, %v1615
  %v1618 = vadd.f32 %v1602, %v1616
  %v1619 = vlaneseq
  %v1620 = vshrl.u32 %v1619, 7
  %v1621 = vsub.s32 6, %v1620
  %v1622 = vrot.slane %v1521, %v1621
  %v1623 = vlaneseq
  %v1624 = vshrl.u32 %v1623, 7
  %v1625 = vsub.s32 6, %v1624
  %v1626 = vrot.slane %v1522, %v1625
  %1627 = vset.pattern.permute.xlu0 22
  %1628 = vperm.xlu0 %1627, %v1249
  %v1629 = vpop.permute.xlu0 %1628
  %v1631 = vmul.f32 %v1622, %v1629
  %v1632 = vmul.f32 %v1626, %v1629
  %v1633 = vadd.f32 %v1617, %v1631
  %v1634 = vadd.f32 %v1618, %v1632
  %v1635 = vlaneseq
  %v1636 = vshrl.u32 %v1635, 7
  %v1637 = vsub.s32 7, %v1636
  %v1638 = vrot.slane %v1521, %v1637
  %v1639 = vlaneseq
  %v1640 = vshrl.u32 %v1639, 7
  %v1641 = vsub.s32 7, %v1640
  %v1642 = vrot.slane %v1522, %v1641
  %1643 = vset.pattern.permute.xlu0 23
  %1644 = vperm.xlu0 %1643, %v1249
  %v1645 = vpop.permute.xlu0 %1644
  %v1647 = vmul.f32 %v1638, %v1645
  %v1648 = vmul.f32 %v1642, %v1645
  %v1649 = vadd.f32 %v1633, %v1647
  %v1650 = vadd.f32 %v1634, %v1648
  %1651 = vrot.lane.b32.xlu0 %v1235, 1
  %v1652 = vpop.permute.xlu0 %1651
  %1653 = vrot.lane.b32.xlu0 %v1236, 1
  %v1654 = vpop.permute.xlu0 %1653
  %v1655 = vsel %vm428, %v1652, %v1654
  %v1656 = vsel %vm428, %v1654, %v1652
  %v1657 = vmul.f32 %v1656, %v437
  %v1658 = vmul.f32 %v1655, %v441
  %v1659 = vlaneseq
  %v1660 = vshrl.u32 %v1659, 7
  %v1661 = vsub.s32 0, %v1660
  %v1662 = vrot.slane %v1657, %v1661
  %v1663 = vlaneseq
  %v1664 = vshrl.u32 %v1663, 7
  %v1665 = vsub.s32 0, %v1664
  %v1666 = vrot.slane %v1658, %v1665
  %1667 = vset.pattern.permute.xlu0 24
  %1668 = vperm.xlu0 %1667, %v1249
  %v1669 = vpop.permute.xlu0 %1668
  %v1671 = vmul.f32 %v1662, %v1669
  %v1672 = vmul.f32 %v1666, %v1669
  %v1673 = vadd.f32 %v1649, %v1671
  %v1674 = vadd.f32 %v1650, %v1672
  %v1675 = vlaneseq
  %v1676 = vshrl.u32 %v1675, 7
  %v1677 = vsub.s32 1, %v1676
  %v1678 = vrot.slane %v1657, %v1677
  %v1679 = vlaneseq
  %v1680 = vshrl.u32 %v1679, 7
  %v1681 = vsub.s32 1, %v1680
  %v1682 = vrot.slane %v1658, %v1681
  %1683 = vset.pattern.permute.xlu0 25
  %1684 = vperm.xlu0 %1683, %v1249
  %v1685 = vpop.permute.xlu0 %1684
  %v1687 = vmul.f32 %v1678, %v1685
  %v1688 = vmul.f32 %v1682, %v1685
  %v1689 = vadd.f32 %v1673, %v1687
  %v1690 = vadd.f32 %v1674, %v1688
  %v1691 = vlaneseq
  %v1692 = vshrl.u32 %v1691, 7
  %v1693 = vsub.s32 2, %v1692
  %v1694 = vrot.slane %v1657, %v1693
  %v1695 = vlaneseq
  %v1696 = vshrl.u32 %v1695, 7
  %v1697 = vsub.s32 2, %v1696
  %v1698 = vrot.slane %v1658, %v1697
  %1699 = vset.pattern.permute.xlu0 26
  %1700 = vperm.xlu0 %1699, %v1249
  %v1701 = vpop.permute.xlu0 %1700
  %v1703 = vmul.f32 %v1694, %v1701
  %v1704 = vmul.f32 %v1698, %v1701
  %v1705 = vadd.f32 %v1689, %v1703
  %v1706 = vadd.f32 %v1690, %v1704
  %v1707 = vlaneseq
  %v1708 = vshrl.u32 %v1707, 7
  %v1709 = vsub.s32 3, %v1708
  %v1710 = vrot.slane %v1657, %v1709
  %v1711 = vlaneseq
  %v1712 = vshrl.u32 %v1711, 7
  %v1713 = vsub.s32 3, %v1712
  %v1714 = vrot.slane %v1658, %v1713
  %1715 = vset.pattern.permute.xlu0 27
  %1716 = vperm.xlu0 %1715, %v1249
  %v1717 = vpop.permute.xlu0 %1716
  %v1719 = vmul.f32 %v1710, %v1717
  %v1720 = vmul.f32 %v1714, %v1717
  %v1721 = vadd.f32 %v1705, %v1719
  %v1722 = vadd.f32 %v1706, %v1720
  %v1723 = vlaneseq
  %v1724 = vshrl.u32 %v1723, 7
  %v1725 = vsub.s32 4, %v1724
  %v1726 = vrot.slane %v1657, %v1725
  %v1727 = vlaneseq
  %v1728 = vshrl.u32 %v1727, 7
  %v1729 = vsub.s32 4, %v1728
  %v1730 = vrot.slane %v1658, %v1729
  %1731 = vset.pattern.permute.xlu0 28
  %1732 = vperm.xlu0 %1731, %v1249
  %v1733 = vpop.permute.xlu0 %1732
  %v1735 = vmul.f32 %v1726, %v1733
  %v1736 = vmul.f32 %v1730, %v1733
  %v1737 = vadd.f32 %v1721, %v1735
  %v1738 = vadd.f32 %v1722, %v1736
  %v1739 = vlaneseq
  %v1740 = vshrl.u32 %v1739, 7
  %v1741 = vsub.s32 5, %v1740
  %v1742 = vrot.slane %v1657, %v1741
  %v1743 = vlaneseq
  %v1744 = vshrl.u32 %v1743, 7
  %v1745 = vsub.s32 5, %v1744
  %v1746 = vrot.slane %v1658, %v1745
  %1747 = vset.pattern.permute.xlu0 29
  %1748 = vperm.xlu0 %1747, %v1249
  %v1749 = vpop.permute.xlu0 %1748
  %v1751 = vmul.f32 %v1742, %v1749
  %v1752 = vmul.f32 %v1746, %v1749
  %v1753 = vadd.f32 %v1737, %v1751
  %v1754 = vadd.f32 %v1738, %v1752
  %v1755 = vlaneseq
  %v1756 = vshrl.u32 %v1755, 7
  %v1757 = vsub.s32 6, %v1756
  %v1758 = vrot.slane %v1657, %v1757
  %v1759 = vlaneseq
  %v1760 = vshrl.u32 %v1759, 7
  %v1761 = vsub.s32 6, %v1760
  %v1762 = vrot.slane %v1658, %v1761
  %1763 = vset.pattern.permute.xlu0 30
  %1764 = vperm.xlu0 %1763, %v1249
  %v1765 = vpop.permute.xlu0 %1764
  %v1767 = vmul.f32 %v1758, %v1765
  %v1768 = vmul.f32 %v1762, %v1765
  %v1769 = vadd.f32 %v1753, %v1767
  %v1770 = vadd.f32 %v1754, %v1768
  %v1771 = vlaneseq
  %v1772 = vshrl.u32 %v1771, 7
  %v1773 = vsub.s32 7, %v1772
  %v1774 = vrot.slane %v1657, %v1773
  %v1775 = vlaneseq
  %v1776 = vshrl.u32 %v1775, 7
  %v1777 = vsub.s32 7, %v1776
  %v1778 = vrot.slane %v1658, %v1777
  %1779 = vset.pattern.permute.xlu0 31
  %1780 = vperm.xlu0 %1779, %v1249
  %v1781 = vpop.permute.xlu0 %1780
  %v1783 = vmul.f32 %v1774, %v1781
  %v1784 = vmul.f32 %v1778, %v1781
  %v1785 = vadd.f32 %v1769, %v1783
  %v1786 = vadd.f32 %v1770, %v1784
  %v1787 = vlaneseq
  %v1788 = vshrl.u32 %v1787, 7
  %v1789 = vsub.s32 0, %v1788
  %v1790 = vrot.slane %v1235, %v1789
  %v1791 = vlaneseq
  %v1792 = vshrl.u32 %v1791, 7
  %v1793 = vsub.s32 0, %v1792
  %v1794 = vrot.slane %v1236, %v1793
  %1795 = vset.pattern.permute.xlu0 32
  %1796 = vperm.xlu0 %1795, %v1249
  %v1797 = vpop.permute.xlu0 %1796
  %v1799 = vmul.f32 %v1790, %v1797
  %v1800 = vmul.f32 %v1794, %v1797
  %v1801 = vadd.f32 %v1785, %v1799
  %v1802 = vadd.f32 %v1786, %v1800
  %v1803 = vlaneseq
  %v1804 = vshrl.u32 %v1803, 7
  %v1805 = vsub.s32 1, %v1804
  %v1806 = vrot.slane %v1235, %v1805
  %v1807 = vlaneseq
  %v1808 = vshrl.u32 %v1807, 7
  %v1809 = vsub.s32 1, %v1808
  %v1810 = vrot.slane %v1236, %v1809
  %1811 = vset.pattern.permute.xlu0 33
  %1812 = vperm.xlu0 %1811, %v1249
  %v1813 = vpop.permute.xlu0 %1812
  %v1815 = vmul.f32 %v1806, %v1813
  %v1816 = vmul.f32 %v1810, %v1813
  %v1817 = vadd.f32 %v1801, %v1815
  %v1818 = vadd.f32 %v1802, %v1816
  %v1819 = vlaneseq
  %v1820 = vshrl.u32 %v1819, 7
  %v1821 = vsub.s32 2, %v1820
  %v1822 = vrot.slane %v1235, %v1821
  %v1823 = vlaneseq
  %v1824 = vshrl.u32 %v1823, 7
  %v1825 = vsub.s32 2, %v1824
  %v1826 = vrot.slane %v1236, %v1825
  %1827 = vset.pattern.permute.xlu0 34
  %1828 = vperm.xlu0 %1827, %v1249
  %v1829 = vpop.permute.xlu0 %1828
  %v1831 = vmul.f32 %v1822, %v1829
  %v1832 = vmul.f32 %v1826, %v1829
  %v1833 = vadd.f32 %v1817, %v1831
  %v1834 = vadd.f32 %v1818, %v1832
  %v1835 = vlaneseq
  %v1836 = vshrl.u32 %v1835, 7
  %v1837 = vsub.s32 3, %v1836
  %v1838 = vrot.slane %v1235, %v1837
  %v1839 = vlaneseq
  %v1840 = vshrl.u32 %v1839, 7
  %v1841 = vsub.s32 3, %v1840
  %v1842 = vrot.slane %v1236, %v1841
  %1843 = vset.pattern.permute.xlu0 35
  %1844 = vperm.xlu0 %1843, %v1249
  %v1845 = vpop.permute.xlu0 %1844
  %v1847 = vmul.f32 %v1838, %v1845
  %v1848 = vmul.f32 %v1842, %v1845
  %v1849 = vadd.f32 %v1833, %v1847
  %v1850 = vadd.f32 %v1834, %v1848
  %v1851 = vlaneseq
  %v1852 = vshrl.u32 %v1851, 7
  %v1853 = vsub.s32 4, %v1852
  %v1854 = vrot.slane %v1235, %v1853
  %v1855 = vlaneseq
  %v1856 = vshrl.u32 %v1855, 7
  %v1857 = vsub.s32 4, %v1856
  %v1858 = vrot.slane %v1236, %v1857
  %1859 = vset.pattern.permute.xlu0 36
  %1860 = vperm.xlu0 %1859, %v1249
  %v1861 = vpop.permute.xlu0 %1860
  %v1863 = vmul.f32 %v1854, %v1861
  %v1864 = vmul.f32 %v1858, %v1861
  %v1865 = vadd.f32 %v1849, %v1863
  %v1866 = vadd.f32 %v1850, %v1864
  %v1867 = vlaneseq
  %v1868 = vshrl.u32 %v1867, 7
  %v1869 = vsub.s32 5, %v1868
  %v1870 = vrot.slane %v1235, %v1869
  %v1871 = vlaneseq
  %v1872 = vshrl.u32 %v1871, 7
  %v1873 = vsub.s32 5, %v1872
  %v1874 = vrot.slane %v1236, %v1873
  %1875 = vset.pattern.permute.xlu0 37
  %1876 = vperm.xlu0 %1875, %v1249
  %v1877 = vpop.permute.xlu0 %1876
  %v1879 = vmul.f32 %v1870, %v1877
  %v1880 = vmul.f32 %v1874, %v1877
  %v1881 = vadd.f32 %v1865, %v1879
  %v1882 = vadd.f32 %v1866, %v1880
  %v1883 = vlaneseq
  %v1884 = vshrl.u32 %v1883, 7
  %v1885 = vsub.s32 6, %v1884
  %v1886 = vrot.slane %v1235, %v1885
  %v1887 = vlaneseq
  %v1888 = vshrl.u32 %v1887, 7
  %v1889 = vsub.s32 6, %v1888
  %v1890 = vrot.slane %v1236, %v1889
  %1891 = vset.pattern.permute.xlu0 38
  %1892 = vperm.xlu0 %1891, %v1249
  %v1893 = vpop.permute.xlu0 %1892
  %v1895 = vmul.f32 %v1886, %v1893
  %v1896 = vmul.f32 %v1890, %v1893
  %v1897 = vadd.f32 %v1881, %v1895
  %v1898 = vadd.f32 %v1882, %v1896
  %v1899 = vlaneseq
  %v1900 = vshrl.u32 %v1899, 7
  %v1901 = vsub.s32 7, %v1900
  %v1902 = vrot.slane %v1235, %v1901
  %v1903 = vlaneseq
  %v1904 = vshrl.u32 %v1903, 7
  %v1905 = vsub.s32 7, %v1904
  %v1906 = vrot.slane %v1236, %v1905
  %1907 = vset.pattern.permute.xlu0 39
  %1908 = vperm.xlu0 %1907, %v1249
  %v1909 = vpop.permute.xlu0 %1908
  %v1911 = vmul.f32 %v1902, %v1909
  %v1912 = vmul.f32 %v1906, %v1909
  %v1913 = vadd.f32 %v1897, %v1911
  %v1914 = vadd.f32 %v1898, %v1912
  %1915 = vrot.lane.b32.xlu0 %v1235, 127
  %v1916 = vpop.permute.xlu0 %1915
  %1917 = vrot.lane.b32.xlu0 %v1236, 127
  %v1918 = vpop.permute.xlu0 %1917
  %v1919 = vsel %vm674, %v1916, %v1918
  %v1920 = vsel %vm674, %v1918, %v1916
  %v1921 = vmul.f32 %v1919, %v683
  %v1922 = vmul.f32 %v1920, %v687
  %v1923 = vlaneseq
  %v1924 = vshrl.u32 %v1923, 7
  %v1925 = vsub.s32 0, %v1924
  %v1926 = vrot.slane %v1921, %v1925
  %v1927 = vlaneseq
  %v1928 = vshrl.u32 %v1927, 7
  %v1929 = vsub.s32 0, %v1928
  %v1930 = vrot.slane %v1922, %v1929
  %1931 = vset.pattern.permute.xlu0 40
  %1932 = vperm.xlu0 %1931, %v1249
  %v1933 = vpop.permute.xlu0 %1932
  %v1935 = vmul.f32 %v1926, %v1933
  %v1936 = vmul.f32 %v1930, %v1933
  %v1937 = vadd.f32 %v1913, %v1935
  %v1938 = vadd.f32 %v1914, %v1936
  %v1939 = vlaneseq
  %v1940 = vshrl.u32 %v1939, 7
  %v1941 = vsub.s32 1, %v1940
  %v1942 = vrot.slane %v1921, %v1941
  %v1943 = vlaneseq
  %v1944 = vshrl.u32 %v1943, 7
  %v1945 = vsub.s32 1, %v1944
  %v1946 = vrot.slane %v1922, %v1945
  %1947 = vset.pattern.permute.xlu0 41
  %1948 = vperm.xlu0 %1947, %v1249
  %v1949 = vpop.permute.xlu0 %1948
  %v1951 = vmul.f32 %v1942, %v1949
  %v1952 = vmul.f32 %v1946, %v1949
  %v1953 = vadd.f32 %v1937, %v1951
  %v1954 = vadd.f32 %v1938, %v1952
  %v1955 = vlaneseq
  %v1956 = vshrl.u32 %v1955, 7
  %v1957 = vsub.s32 2, %v1956
  %v1958 = vrot.slane %v1921, %v1957
  %v1959 = vlaneseq
  %v1960 = vshrl.u32 %v1959, 7
  %v1961 = vsub.s32 2, %v1960
  %v1962 = vrot.slane %v1922, %v1961
  %1963 = vset.pattern.permute.xlu0 42
  %1964 = vperm.xlu0 %1963, %v1249
  %v1965 = vpop.permute.xlu0 %1964
  %v1967 = vmul.f32 %v1958, %v1965
  %v1968 = vmul.f32 %v1962, %v1965
  %v1969 = vadd.f32 %v1953, %v1967
  %v1970 = vadd.f32 %v1954, %v1968
  %v1971 = vlaneseq
  %v1972 = vshrl.u32 %v1971, 7
  %v1973 = vsub.s32 3, %v1972
  %v1974 = vrot.slane %v1921, %v1973
  %v1975 = vlaneseq
  %v1976 = vshrl.u32 %v1975, 7
  %v1977 = vsub.s32 3, %v1976
  %v1978 = vrot.slane %v1922, %v1977
  %1979 = vset.pattern.permute.xlu0 43
  %1980 = vperm.xlu0 %1979, %v1249
  %v1981 = vpop.permute.xlu0 %1980
  %v1983 = vmul.f32 %v1974, %v1981
  %v1984 = vmul.f32 %v1978, %v1981
  %v1985 = vadd.f32 %v1969, %v1983
  %v1986 = vadd.f32 %v1970, %v1984
  %v1987 = vlaneseq
  %v1988 = vshrl.u32 %v1987, 7
  %v1989 = vsub.s32 4, %v1988
  %v1990 = vrot.slane %v1921, %v1989
  %v1991 = vlaneseq
  %v1992 = vshrl.u32 %v1991, 7
  %v1993 = vsub.s32 4, %v1992
  %v1994 = vrot.slane %v1922, %v1993
  %1995 = vset.pattern.permute.xlu0 44
  %1996 = vperm.xlu0 %1995, %v1249
  %v1997 = vpop.permute.xlu0 %1996
  %v1999 = vmul.f32 %v1990, %v1997
  %v2000 = vmul.f32 %v1994, %v1997
  %v2001 = vadd.f32 %v1985, %v1999
  %v2002 = vadd.f32 %v1986, %v2000
  %v2003 = vlaneseq
  %v2004 = vshrl.u32 %v2003, 7
  %v2005 = vsub.s32 5, %v2004
  %v2006 = vrot.slane %v1921, %v2005
  %v2007 = vlaneseq
  %v2008 = vshrl.u32 %v2007, 7
  %v2009 = vsub.s32 5, %v2008
  %v2010 = vrot.slane %v1922, %v2009
  %2011 = vset.pattern.permute.xlu0 45
  %2012 = vperm.xlu0 %2011, %v1249
  %v2013 = vpop.permute.xlu0 %2012
  %v2015 = vmul.f32 %v2006, %v2013
  %v2016 = vmul.f32 %v2010, %v2013
  %v2017 = vadd.f32 %v2001, %v2015
  %v2018 = vadd.f32 %v2002, %v2016
  %v2019 = vlaneseq
  %v2020 = vshrl.u32 %v2019, 7
  %v2021 = vsub.s32 6, %v2020
  %v2022 = vrot.slane %v1921, %v2021
  %v2023 = vlaneseq
  %v2024 = vshrl.u32 %v2023, 7
  %v2025 = vsub.s32 6, %v2024
  %v2026 = vrot.slane %v1922, %v2025
  %2027 = vset.pattern.permute.xlu0 46
  %2028 = vperm.xlu0 %2027, %v1249
  %v2029 = vpop.permute.xlu0 %2028
  %v2031 = vmul.f32 %v2022, %v2029
  %v2032 = vmul.f32 %v2026, %v2029
  %v2033 = vadd.f32 %v2017, %v2031
  %v2034 = vadd.f32 %v2018, %v2032
  %v2035 = vlaneseq
  %v2036 = vshrl.u32 %v2035, 7
  %v2037 = vsub.s32 7, %v2036
  %v2038 = vrot.slane %v1921, %v2037
  %v2039 = vlaneseq
  %v2040 = vshrl.u32 %v2039, 7
  %v2041 = vsub.s32 7, %v2040
  %v2042 = vrot.slane %v1922, %v2041
  %2043 = vset.pattern.permute.xlu0 47
  %2044 = vperm.xlu0 %2043, %v1249
  %v2045 = vpop.permute.xlu0 %2044
  %v2047 = vmul.f32 %v2038, %v2045
  %v2048 = vmul.f32 %v2042, %v2045
  %v2049 = vadd.f32 %v2033, %v2047
  %v2050 = vadd.f32 %v2034, %v2048
  %2051 = vrot.lane.b32.xlu0 %v1235, 113
  %v2052 = vpop.permute.xlu0 %2051
  %2053 = vrot.lane.b32.xlu0 %v1236, 113
  %v2054 = vpop.permute.xlu0 %2053
  %v2055 = vsel %vm808, %v2052, %v2054
  %v2056 = vsel %vm808, %v2054, %v2052
  %v2057 = vmul.f32 %v2055, %v817
  %v2058 = vmul.f32 %v2056, %v821
  %v2059 = vlaneseq
  %v2060 = vshrl.u32 %v2059, 7
  %v2061 = vsub.s32 0, %v2060
  %v2062 = vrot.slane %v2057, %v2061
  %v2063 = vlaneseq
  %v2064 = vshrl.u32 %v2063, 7
  %v2065 = vsub.s32 0, %v2064
  %v2066 = vrot.slane %v2058, %v2065
  %2067 = vset.pattern.permute.xlu0 48
  %2068 = vperm.xlu0 %2067, %v1249
  %v2069 = vpop.permute.xlu0 %2068
  %v2071 = vmul.f32 %v2062, %v2069
  %v2072 = vmul.f32 %v2066, %v2069
  %v2073 = vadd.f32 %v2049, %v2071
  %v2074 = vadd.f32 %v2050, %v2072
  %v2075 = vlaneseq
  %v2076 = vshrl.u32 %v2075, 7
  %v2077 = vsub.s32 1, %v2076
  %v2078 = vrot.slane %v2057, %v2077
  %v2079 = vlaneseq
  %v2080 = vshrl.u32 %v2079, 7
  %v2081 = vsub.s32 1, %v2080
  %v2082 = vrot.slane %v2058, %v2081
  %2083 = vset.pattern.permute.xlu0 49
  %2084 = vperm.xlu0 %2083, %v1249
  %v2085 = vpop.permute.xlu0 %2084
  %v2087 = vmul.f32 %v2078, %v2085
  %v2088 = vmul.f32 %v2082, %v2085
  %v2089 = vadd.f32 %v2073, %v2087
  %v2090 = vadd.f32 %v2074, %v2088
  %v2091 = vlaneseq
  %v2092 = vshrl.u32 %v2091, 7
  %v2093 = vsub.s32 2, %v2092
  %v2094 = vrot.slane %v2057, %v2093
  %v2095 = vlaneseq
  %v2096 = vshrl.u32 %v2095, 7
  %v2097 = vsub.s32 2, %v2096
  %v2098 = vrot.slane %v2058, %v2097
  %2099 = vset.pattern.permute.xlu0 50
  %2100 = vperm.xlu0 %2099, %v1249
  %v2101 = vpop.permute.xlu0 %2100
  %v2103 = vmul.f32 %v2094, %v2101
  %v2104 = vmul.f32 %v2098, %v2101
  %v2105 = vadd.f32 %v2089, %v2103
  %v2106 = vadd.f32 %v2090, %v2104
  %v2107 = vlaneseq
  %v2108 = vshrl.u32 %v2107, 7
  %v2109 = vsub.s32 3, %v2108
  %v2110 = vrot.slane %v2057, %v2109
  %v2111 = vlaneseq
  %v2112 = vshrl.u32 %v2111, 7
  %v2113 = vsub.s32 3, %v2112
  %v2114 = vrot.slane %v2058, %v2113
  %2115 = vset.pattern.permute.xlu0 51
  %2116 = vperm.xlu0 %2115, %v1249
  %v2117 = vpop.permute.xlu0 %2116
  %v2119 = vmul.f32 %v2110, %v2117
  %v2120 = vmul.f32 %v2114, %v2117
  %v2121 = vadd.f32 %v2105, %v2119
  %v2122 = vadd.f32 %v2106, %v2120
  %v2123 = vlaneseq
  %v2124 = vshrl.u32 %v2123, 7
  %v2125 = vsub.s32 4, %v2124
  %v2126 = vrot.slane %v2057, %v2125
  %v2127 = vlaneseq
  %v2128 = vshrl.u32 %v2127, 7
  %v2129 = vsub.s32 4, %v2128
  %v2130 = vrot.slane %v2058, %v2129
  %2131 = vset.pattern.permute.xlu0 52
  %2132 = vperm.xlu0 %2131, %v1249
  %v2133 = vpop.permute.xlu0 %2132
  %v2135 = vmul.f32 %v2126, %v2133
  %v2136 = vmul.f32 %v2130, %v2133
  %v2137 = vadd.f32 %v2121, %v2135
  %v2138 = vadd.f32 %v2122, %v2136
  %v2139 = vlaneseq
  %v2140 = vshrl.u32 %v2139, 7
  %v2141 = vsub.s32 5, %v2140
  %v2142 = vrot.slane %v2057, %v2141
  %v2143 = vlaneseq
  %v2144 = vshrl.u32 %v2143, 7
  %v2145 = vsub.s32 5, %v2144
  %v2146 = vrot.slane %v2058, %v2145
  %2147 = vset.pattern.permute.xlu0 53
  %2148 = vperm.xlu0 %2147, %v1249
  %v2149 = vpop.permute.xlu0 %2148
  %v2151 = vmul.f32 %v2142, %v2149
  %v2152 = vmul.f32 %v2146, %v2149
  %v2153 = vadd.f32 %v2137, %v2151
  %v2154 = vadd.f32 %v2138, %v2152
  %v2155 = vlaneseq
  %v2156 = vshrl.u32 %v2155, 7
  %v2157 = vsub.s32 6, %v2156
  %v2158 = vrot.slane %v2057, %v2157
  %v2159 = vlaneseq
  %v2160 = vshrl.u32 %v2159, 7
  %v2161 = vsub.s32 6, %v2160
  %v2162 = vrot.slane %v2058, %v2161
  %2163 = vset.pattern.permute.xlu0 54
  %2164 = vperm.xlu0 %2163, %v1249
  %v2165 = vpop.permute.xlu0 %2164
  %v2167 = vmul.f32 %v2158, %v2165
  %v2168 = vmul.f32 %v2162, %v2165
  %v2169 = vadd.f32 %v2153, %v2167
  %v2170 = vadd.f32 %v2154, %v2168
  %v2171 = vlaneseq
  %v2172 = vshrl.u32 %v2171, 7
  %v2173 = vsub.s32 7, %v2172
  %v2174 = vrot.slane %v2057, %v2173
  %v2175 = vlaneseq
  %v2176 = vshrl.u32 %v2175, 7
  %v2177 = vsub.s32 7, %v2176
  %v2178 = vrot.slane %v2058, %v2177
  %2179 = vset.pattern.permute.xlu0 55
  %2180 = vperm.xlu0 %2179, %v1249
  %v2181 = vpop.permute.xlu0 %2180
  %v2183 = vmul.f32 %v2174, %v2181
  %v2184 = vmul.f32 %v2178, %v2181
  %v2185 = vadd.f32 %v2169, %v2183
  %v2186 = vadd.f32 %v2170, %v2184
  %2187 = vrot.lane.b32.xlu0 %v1235, 112
  %v2188 = vpop.permute.xlu0 %2187
  %2189 = vrot.lane.b32.xlu0 %v1236, 112
  %v2190 = vpop.permute.xlu0 %2189
  %v2191 = vsel %vm942, %v2188, %v2190
  %v2192 = vsel %vm942, %v2190, %v2188
  %v2193 = vmul.f32 %v2191, %v951
  %v2194 = vmul.f32 %v2192, %v955
  %v2195 = vlaneseq
  %v2196 = vshrl.u32 %v2195, 7
  %v2197 = vsub.s32 0, %v2196
  %v2198 = vrot.slane %v2193, %v2197
  %v2199 = vlaneseq
  %v2200 = vshrl.u32 %v2199, 7
  %v2201 = vsub.s32 0, %v2200
  %v2202 = vrot.slane %v2194, %v2201
  %2203 = vset.pattern.permute.xlu0 56
  %2204 = vperm.xlu0 %2203, %v1249
  %v2205 = vpop.permute.xlu0 %2204
  %v2207 = vmul.f32 %v2198, %v2205
  %v2208 = vmul.f32 %v2202, %v2205
  %v2209 = vadd.f32 %v2185, %v2207
  %v2210 = vadd.f32 %v2186, %v2208
  %v2211 = vlaneseq
  %v2212 = vshrl.u32 %v2211, 7
  %v2213 = vsub.s32 1, %v2212
  %v2214 = vrot.slane %v2193, %v2213
  %v2215 = vlaneseq
  %v2216 = vshrl.u32 %v2215, 7
  %v2217 = vsub.s32 1, %v2216
  %v2218 = vrot.slane %v2194, %v2217
  %2219 = vset.pattern.permute.xlu0 57
  %2220 = vperm.xlu0 %2219, %v1249
  %v2221 = vpop.permute.xlu0 %2220
  %v2223 = vmul.f32 %v2214, %v2221
  %v2224 = vmul.f32 %v2218, %v2221
  %v2225 = vadd.f32 %v2209, %v2223
  %v2226 = vadd.f32 %v2210, %v2224
  %v2227 = vlaneseq
  %v2228 = vshrl.u32 %v2227, 7
  %v2229 = vsub.s32 2, %v2228
  %v2230 = vrot.slane %v2193, %v2229
  %v2231 = vlaneseq
  %v2232 = vshrl.u32 %v2231, 7
  %v2233 = vsub.s32 2, %v2232
  %v2234 = vrot.slane %v2194, %v2233
  %2235 = vset.pattern.permute.xlu0 58
  %2236 = vperm.xlu0 %2235, %v1249
  %v2237 = vpop.permute.xlu0 %2236
  %v2239 = vmul.f32 %v2230, %v2237
  %v2240 = vmul.f32 %v2234, %v2237
  %v2241 = vadd.f32 %v2225, %v2239
  %v2242 = vadd.f32 %v2226, %v2240
  %v2243 = vlaneseq
  %v2244 = vshrl.u32 %v2243, 7
  %v2245 = vsub.s32 3, %v2244
  %v2246 = vrot.slane %v2193, %v2245
  %v2247 = vlaneseq
  %v2248 = vshrl.u32 %v2247, 7
  %v2249 = vsub.s32 3, %v2248
  %v2250 = vrot.slane %v2194, %v2249
  %2251 = vset.pattern.permute.xlu0 59
  %2252 = vperm.xlu0 %2251, %v1249
  %v2253 = vpop.permute.xlu0 %2252
  %v2255 = vmul.f32 %v2246, %v2253
  %v2256 = vmul.f32 %v2250, %v2253
  %v2257 = vadd.f32 %v2241, %v2255
  %v2258 = vadd.f32 %v2242, %v2256
  %v2259 = vlaneseq
  %v2260 = vshrl.u32 %v2259, 7
  %v2261 = vsub.s32 4, %v2260
  %v2262 = vrot.slane %v2193, %v2261
  %v2263 = vlaneseq
  %v2264 = vshrl.u32 %v2263, 7
  %v2265 = vsub.s32 4, %v2264
  %v2266 = vrot.slane %v2194, %v2265
  %2267 = vset.pattern.permute.xlu0 60
  %2268 = vperm.xlu0 %2267, %v1249
  %v2269 = vpop.permute.xlu0 %2268
  %v2271 = vmul.f32 %v2262, %v2269
  %v2272 = vmul.f32 %v2266, %v2269
  %v2273 = vadd.f32 %v2257, %v2271
  %v2274 = vadd.f32 %v2258, %v2272
  %v2275 = vlaneseq
  %v2276 = vshrl.u32 %v2275, 7
  %v2277 = vsub.s32 5, %v2276
  %v2278 = vrot.slane %v2193, %v2277
  %v2279 = vlaneseq
  %v2280 = vshrl.u32 %v2279, 7
  %v2281 = vsub.s32 5, %v2280
  %v2282 = vrot.slane %v2194, %v2281
  %2283 = vset.pattern.permute.xlu0 61
  %2284 = vperm.xlu0 %2283, %v1249
  %v2285 = vpop.permute.xlu0 %2284
  %v2287 = vmul.f32 %v2278, %v2285
  %v2288 = vmul.f32 %v2282, %v2285
  %v2289 = vadd.f32 %v2273, %v2287
  %v2290 = vadd.f32 %v2274, %v2288
  %v2291 = vlaneseq
  %v2292 = vshrl.u32 %v2291, 7
  %v2293 = vsub.s32 6, %v2292
  %v2294 = vrot.slane %v2193, %v2293
  %v2295 = vlaneseq
  %v2296 = vshrl.u32 %v2295, 7
  %v2297 = vsub.s32 6, %v2296
  %v2298 = vrot.slane %v2194, %v2297
  %2299 = vset.pattern.permute.xlu0 62
  %2300 = vperm.xlu0 %2299, %v1249
  %v2301 = vpop.permute.xlu0 %2300
  %v2303 = vmul.f32 %v2294, %v2301
  %v2304 = vmul.f32 %v2298, %v2301
  %v2305 = vadd.f32 %v2289, %v2303
  %v2306 = vadd.f32 %v2290, %v2304
  %v2307 = vlaneseq
  %v2308 = vshrl.u32 %v2307, 7
  %v2309 = vsub.s32 7, %v2308
  %v2310 = vrot.slane %v2193, %v2309
  %v2311 = vlaneseq
  %v2312 = vshrl.u32 %v2311, 7
  %v2313 = vsub.s32 7, %v2312
  %v2314 = vrot.slane %v2194, %v2313
  %2315 = vset.pattern.permute.xlu0 63
  %2316 = vperm.xlu0 %2315, %v1249
  %v2317 = vpop.permute.xlu0 %2316
  %v2319 = vmul.f32 %v2310, %v2317
  %v2320 = vmul.f32 %v2314, %v2317
  %v2321 = vadd.f32 %v2305, %v2319
  %v2322 = vadd.f32 %v2306, %v2320
  %2323 = vrot.lane.b32.xlu0 %v1235, 111
  %v2324 = vpop.permute.xlu0 %2323
  %2325 = vrot.lane.b32.xlu0 %v1236, 111
  %v2326 = vpop.permute.xlu0 %2325
  %v2327 = vsel %vm1076, %v2324, %v2326
  %v2328 = vsel %vm1076, %v2326, %v2324
  %v2329 = vmul.f32 %v2327, %v1085
  %v2330 = vmul.f32 %v2328, %v1089
  %v2331 = vlaneseq
  %v2332 = vshrl.u32 %v2331, 7
  %v2333 = vsub.s32 0, %v2332
  %v2334 = vrot.slane %v2329, %v2333
  %v2335 = vlaneseq
  %v2336 = vshrl.u32 %v2335, 7
  %v2337 = vsub.s32 0, %v2336
  %v2338 = vrot.slane %v2330, %v2337
  %2339 = vset.pattern.permute.xlu0 64
  %2340 = vperm.xlu0 %2339, %v1249
  %v2341 = vpop.permute.xlu0 %2340
  %v2343 = vmul.f32 %v2334, %v2341
  %v2344 = vmul.f32 %v2338, %v2341
  %v2345 = vadd.f32 %v2321, %v2343
  %v2346 = vadd.f32 %v2322, %v2344
  %v2347 = vlaneseq
  %v2348 = vshrl.u32 %v2347, 7
  %v2349 = vsub.s32 1, %v2348
  %v2350 = vrot.slane %v2329, %v2349
  %v2351 = vlaneseq
  %v2352 = vshrl.u32 %v2351, 7
  %v2353 = vsub.s32 1, %v2352
  %v2354 = vrot.slane %v2330, %v2353
  %2355 = vset.pattern.permute.xlu0 65
  %2356 = vperm.xlu0 %2355, %v1249
  %v2357 = vpop.permute.xlu0 %2356
  %v2359 = vmul.f32 %v2350, %v2357
  %v2360 = vmul.f32 %v2354, %v2357
  %v2361 = vadd.f32 %v2345, %v2359
  %v2362 = vadd.f32 %v2346, %v2360
  %v2363 = vlaneseq
  %v2364 = vshrl.u32 %v2363, 7
  %v2365 = vsub.s32 2, %v2364
  %v2366 = vrot.slane %v2329, %v2365
  %v2367 = vlaneseq
  %v2368 = vshrl.u32 %v2367, 7
  %v2369 = vsub.s32 2, %v2368
  %v2370 = vrot.slane %v2330, %v2369
  %2371 = vset.pattern.permute.xlu0 66
  %2372 = vperm.xlu0 %2371, %v1249
  %v2373 = vpop.permute.xlu0 %2372
  %v2375 = vmul.f32 %v2366, %v2373
  %v2376 = vmul.f32 %v2370, %v2373
  %v2377 = vadd.f32 %v2361, %v2375
  %v2378 = vadd.f32 %v2362, %v2376
  %v2379 = vlaneseq
  %v2380 = vshrl.u32 %v2379, 7
  %v2381 = vsub.s32 3, %v2380
  %v2382 = vrot.slane %v2329, %v2381
  %v2383 = vlaneseq
  %v2384 = vshrl.u32 %v2383, 7
  %v2385 = vsub.s32 3, %v2384
  %v2386 = vrot.slane %v2330, %v2385
  %2387 = vset.pattern.permute.xlu0 67
  %2388 = vperm.xlu0 %2387, %v1249
  %v2389 = vpop.permute.xlu0 %2388
  %v2391 = vmul.f32 %v2382, %v2389
  %v2392 = vmul.f32 %v2386, %v2389
  %v2393 = vadd.f32 %v2377, %v2391
  %v2394 = vadd.f32 %v2378, %v2392
  %v2395 = vlaneseq
  %v2396 = vshrl.u32 %v2395, 7
  %v2397 = vsub.s32 4, %v2396
  %v2398 = vrot.slane %v2329, %v2397
  %v2399 = vlaneseq
  %v2400 = vshrl.u32 %v2399, 7
  %v2401 = vsub.s32 4, %v2400
  %v2402 = vrot.slane %v2330, %v2401
  %2403 = vset.pattern.permute.xlu0 68
  %2404 = vperm.xlu0 %2403, %v1249
  %v2405 = vpop.permute.xlu0 %2404
  %v2407 = vmul.f32 %v2398, %v2405
  %v2408 = vmul.f32 %v2402, %v2405
  %v2409 = vadd.f32 %v2393, %v2407
  %v2410 = vadd.f32 %v2394, %v2408
  %v2411 = vlaneseq
  %v2412 = vshrl.u32 %v2411, 7
  %v2413 = vsub.s32 5, %v2412
  %v2414 = vrot.slane %v2329, %v2413
  %v2415 = vlaneseq
  %v2416 = vshrl.u32 %v2415, 7
  %v2417 = vsub.s32 5, %v2416
  %v2418 = vrot.slane %v2330, %v2417
  %2419 = vset.pattern.permute.xlu0 69
  %2420 = vperm.xlu0 %2419, %v1249
  %v2421 = vpop.permute.xlu0 %2420
  %v2423 = vmul.f32 %v2414, %v2421
  %v2424 = vmul.f32 %v2418, %v2421
  %v2425 = vadd.f32 %v2409, %v2423
  %v2426 = vadd.f32 %v2410, %v2424
  %v2427 = vlaneseq
  %v2428 = vshrl.u32 %v2427, 7
  %v2429 = vsub.s32 6, %v2428
  %v2430 = vrot.slane %v2329, %v2429
  %v2431 = vlaneseq
  %v2432 = vshrl.u32 %v2431, 7
  %v2433 = vsub.s32 6, %v2432
  %v2434 = vrot.slane %v2330, %v2433
  %2435 = vset.pattern.permute.xlu0 70
  %2436 = vperm.xlu0 %2435, %v1249
  %v2437 = vpop.permute.xlu0 %2436
  %v2439 = vmul.f32 %v2430, %v2437
  %v2440 = vmul.f32 %v2434, %v2437
  %v2441 = vadd.f32 %v2425, %v2439
  %v2442 = vadd.f32 %v2426, %v2440
  %v2443 = vlaneseq
  %v2444 = vshrl.u32 %v2443, 7
  %v2445 = vsub.s32 7, %v2444
  %v2446 = vrot.slane %v2329, %v2445
  %v2447 = vlaneseq
  %v2448 = vshrl.u32 %v2447, 7
  %v2449 = vsub.s32 7, %v2448
  %v2450 = vrot.slane %v2330, %v2449
  %2451 = vset.pattern.permute.xlu0 71
  %2452 = vperm.xlu0 %2451, %v1249
  %v2453 = vpop.permute.xlu0 %2452
  %v2455 = vmul.f32 %v2446, %v2453
  %v2456 = vmul.f32 %v2450, %v2453
  %v2457 = vadd.f32 %v2441, %v2455
  %v2458 = vadd.f32 %v2442, %v2456
  %2459 = vrot.lane.b32.xlu0 %v1239, 17
  %v2460 = vpop.permute.xlu0 %2459
  %2461 = vrot.lane.b32.xlu0 %v1240, 17
  %v2462 = vpop.permute.xlu0 %2461
  %v2463 = vsel %vm25, %v2460, %v2462
  %v2464 = vsel %vm25, %v2462, %v2460
  %v2465 = vmul.f32 %v2464, %v33
  %v2466 = vmul.f32 %v2463, %v37
  %v2467 = vlaneseq
  %v2468 = vshrl.u32 %v2467, 7
  %v2469 = vsub.s32 0, %v2468
  %v2470 = vrot.slane %v2465, %v2469
  %v2471 = vlaneseq
  %v2472 = vshrl.u32 %v2471, 7
  %v2473 = vsub.s32 0, %v2472
  %v2474 = vrot.slane %v2466, %v2473
  %v2475 = vmul.f32 %v2470, %v1261
  %v2476 = vmul.f32 %v2474, %v1261
  %v2477 = vadd.f32 %v2475, 0.0
  %v2478 = vadd.f32 %v2476, 0.0
  %v2479 = vlaneseq
  %v2480 = vshrl.u32 %v2479, 7
  %v2481 = vsub.s32 1, %v2480
  %v2482 = vrot.slane %v2465, %v2481
  %v2483 = vlaneseq
  %v2484 = vshrl.u32 %v2483, 7
  %v2485 = vsub.s32 1, %v2484
  %v2486 = vrot.slane %v2466, %v2485
  %v2487 = vmul.f32 %v2482, %v1277
  %v2488 = vmul.f32 %v2486, %v1277
  %v2489 = vadd.f32 %v2477, %v2487
  %v2490 = vadd.f32 %v2478, %v2488
  %v2491 = vlaneseq
  %v2492 = vshrl.u32 %v2491, 7
  %v2493 = vsub.s32 2, %v2492
  %v2494 = vrot.slane %v2465, %v2493
  %v2495 = vlaneseq
  %v2496 = vshrl.u32 %v2495, 7
  %v2497 = vsub.s32 2, %v2496
  %v2498 = vrot.slane %v2466, %v2497
  %v2499 = vmul.f32 %v2494, %v1293
  %v2500 = vmul.f32 %v2498, %v1293
  %v2501 = vadd.f32 %v2489, %v2499
  %v2502 = vadd.f32 %v2490, %v2500
  %v2503 = vlaneseq
  %v2504 = vshrl.u32 %v2503, 7
  %v2505 = vsub.s32 3, %v2504
  %v2506 = vrot.slane %v2465, %v2505
  %v2507 = vlaneseq
  %v2508 = vshrl.u32 %v2507, 7
  %v2509 = vsub.s32 3, %v2508
  %v2510 = vrot.slane %v2466, %v2509
  %v2511 = vmul.f32 %v2506, %v1309
  %v2512 = vmul.f32 %v2510, %v1309
  %v2513 = vadd.f32 %v2501, %v2511
  %v2514 = vadd.f32 %v2502, %v2512
  %v2515 = vlaneseq
  %v2516 = vshrl.u32 %v2515, 7
  %v2517 = vsub.s32 4, %v2516
  %v2518 = vrot.slane %v2465, %v2517
  %v2519 = vlaneseq
  %v2520 = vshrl.u32 %v2519, 7
  %v2521 = vsub.s32 4, %v2520
  %v2522 = vrot.slane %v2466, %v2521
  %v2523 = vmul.f32 %v2518, %v1325
  %v2524 = vmul.f32 %v2522, %v1325
  %v2525 = vadd.f32 %v2513, %v2523
  %v2526 = vadd.f32 %v2514, %v2524
  %v2527 = vlaneseq
  %v2528 = vshrl.u32 %v2527, 7
  %v2529 = vsub.s32 5, %v2528
  %v2530 = vrot.slane %v2465, %v2529
  %v2531 = vlaneseq
  %v2532 = vshrl.u32 %v2531, 7
  %v2533 = vsub.s32 5, %v2532
  %v2534 = vrot.slane %v2466, %v2533
  %v2535 = vmul.f32 %v2530, %v1341
  %v2536 = vmul.f32 %v2534, %v1341
  %v2537 = vadd.f32 %v2525, %v2535
  %v2538 = vadd.f32 %v2526, %v2536
  %v2539 = vlaneseq
  %v2540 = vshrl.u32 %v2539, 7
  %v2541 = vsub.s32 6, %v2540
  %v2542 = vrot.slane %v2465, %v2541
  %v2543 = vlaneseq
  %v2544 = vshrl.u32 %v2543, 7
  %v2545 = vsub.s32 6, %v2544
  %v2546 = vrot.slane %v2466, %v2545
  %v2547 = vmul.f32 %v2542, %v1357
  %v2548 = vmul.f32 %v2546, %v1357
  %v2549 = vadd.f32 %v2537, %v2547
  %v2550 = vadd.f32 %v2538, %v2548
  %v2551 = vlaneseq
  %v2552 = vshrl.u32 %v2551, 7
  %v2553 = vsub.s32 7, %v2552
  %v2554 = vrot.slane %v2465, %v2553
  %v2555 = vlaneseq
  %v2556 = vshrl.u32 %v2555, 7
  %v2557 = vsub.s32 7, %v2556
  %v2558 = vrot.slane %v2466, %v2557
  %v2559 = vmul.f32 %v2554, %v1373
  %v2560 = vmul.f32 %v2558, %v1373
  %v2561 = vadd.f32 %v2549, %v2559
  %v2562 = vadd.f32 %v2550, %v2560
  %2563 = vrot.lane.b32.xlu0 %v1239, 16
  %v2564 = vpop.permute.xlu0 %2563
  %2565 = vrot.lane.b32.xlu0 %v1240, 16
  %v2566 = vpop.permute.xlu0 %2565
  %v2567 = vsel %vm160, %v2564, %v2566
  %v2568 = vsel %vm160, %v2566, %v2564
  %v2569 = vmul.f32 %v2568, %v169
  %v2570 = vmul.f32 %v2567, %v173
  %v2571 = vlaneseq
  %v2572 = vshrl.u32 %v2571, 7
  %v2573 = vsub.s32 0, %v2572
  %v2574 = vrot.slane %v2569, %v2573
  %v2575 = vlaneseq
  %v2576 = vshrl.u32 %v2575, 7
  %v2577 = vsub.s32 0, %v2576
  %v2578 = vrot.slane %v2570, %v2577
  %v2579 = vmul.f32 %v2574, %v1397
  %v2580 = vmul.f32 %v2578, %v1397
  %v2581 = vadd.f32 %v2561, %v2579
  %v2582 = vadd.f32 %v2562, %v2580
  %v2583 = vlaneseq
  %v2584 = vshrl.u32 %v2583, 7
  %v2585 = vsub.s32 1, %v2584
  %v2586 = vrot.slane %v2569, %v2585
  %v2587 = vlaneseq
  %v2588 = vshrl.u32 %v2587, 7
  %v2589 = vsub.s32 1, %v2588
  %v2590 = vrot.slane %v2570, %v2589
  %v2591 = vmul.f32 %v2586, %v1413
  %v2592 = vmul.f32 %v2590, %v1413
  %v2593 = vadd.f32 %v2581, %v2591
  %v2594 = vadd.f32 %v2582, %v2592
  %v2595 = vlaneseq
  %v2596 = vshrl.u32 %v2595, 7
  %v2597 = vsub.s32 2, %v2596
  %v2598 = vrot.slane %v2569, %v2597
  %v2599 = vlaneseq
  %v2600 = vshrl.u32 %v2599, 7
  %v2601 = vsub.s32 2, %v2600
  %v2602 = vrot.slane %v2570, %v2601
  %v2603 = vmul.f32 %v2598, %v1429
  %v2604 = vmul.f32 %v2602, %v1429
  %v2605 = vadd.f32 %v2593, %v2603
  %v2606 = vadd.f32 %v2594, %v2604
  %v2607 = vlaneseq
  %v2608 = vshrl.u32 %v2607, 7
  %v2609 = vsub.s32 3, %v2608
  %v2610 = vrot.slane %v2569, %v2609
  %v2611 = vlaneseq
  %v2612 = vshrl.u32 %v2611, 7
  %v2613 = vsub.s32 3, %v2612
  %v2614 = vrot.slane %v2570, %v2613
  %v2615 = vmul.f32 %v2610, %v1445
  %v2616 = vmul.f32 %v2614, %v1445
  %v2617 = vadd.f32 %v2605, %v2615
  %v2618 = vadd.f32 %v2606, %v2616
  %v2619 = vlaneseq
  %v2620 = vshrl.u32 %v2619, 7
  %v2621 = vsub.s32 4, %v2620
  %v2622 = vrot.slane %v2569, %v2621
  %v2623 = vlaneseq
  %v2624 = vshrl.u32 %v2623, 7
  %v2625 = vsub.s32 4, %v2624
  %v2626 = vrot.slane %v2570, %v2625
  %v2627 = vmul.f32 %v2622, %v1461
  %v2628 = vmul.f32 %v2626, %v1461
  %v2629 = vadd.f32 %v2617, %v2627
  %v2630 = vadd.f32 %v2618, %v2628
  %v2631 = vlaneseq
  %v2632 = vshrl.u32 %v2631, 7
  %v2633 = vsub.s32 5, %v2632
  %v2634 = vrot.slane %v2569, %v2633
  %v2635 = vlaneseq
  %v2636 = vshrl.u32 %v2635, 7
  %v2637 = vsub.s32 5, %v2636
  %v2638 = vrot.slane %v2570, %v2637
  %v2639 = vmul.f32 %v2634, %v1477
  %v2640 = vmul.f32 %v2638, %v1477
  %v2641 = vadd.f32 %v2629, %v2639
  %v2642 = vadd.f32 %v2630, %v2640
  %v2643 = vlaneseq
  %v2644 = vshrl.u32 %v2643, 7
  %v2645 = vsub.s32 6, %v2644
  %v2646 = vrot.slane %v2569, %v2645
  %v2647 = vlaneseq
  %v2648 = vshrl.u32 %v2647, 7
  %v2649 = vsub.s32 6, %v2648
  %v2650 = vrot.slane %v2570, %v2649
  %v2651 = vmul.f32 %v2646, %v1493
  %v2652 = vmul.f32 %v2650, %v1493
  %v2653 = vadd.f32 %v2641, %v2651
  %v2654 = vadd.f32 %v2642, %v2652
  %v2655 = vlaneseq
  %v2656 = vshrl.u32 %v2655, 7
  %v2657 = vsub.s32 7, %v2656
  %v2658 = vrot.slane %v2569, %v2657
  %v2659 = vlaneseq
  %v2660 = vshrl.u32 %v2659, 7
  %v2661 = vsub.s32 7, %v2660
  %v2662 = vrot.slane %v2570, %v2661
  %v2663 = vmul.f32 %v2658, %v1509
  %v2664 = vmul.f32 %v2662, %v1509
  %v2665 = vadd.f32 %v2653, %v2663
  %v2666 = vadd.f32 %v2654, %v2664
  %2667 = vrot.lane.b32.xlu0 %v1239, 15
  %v2668 = vpop.permute.xlu0 %2667
  %2669 = vrot.lane.b32.xlu0 %v1240, 15
  %v2670 = vpop.permute.xlu0 %2669
  %v2671 = vsel %vm294, %v2668, %v2670
  %v2672 = vsel %vm294, %v2670, %v2668
  %v2673 = vmul.f32 %v2672, %v303
  %v2674 = vmul.f32 %v2671, %v307
  %v2675 = vlaneseq
  %v2676 = vshrl.u32 %v2675, 7
  %v2677 = vsub.s32 0, %v2676
  %v2678 = vrot.slane %v2673, %v2677
  %v2679 = vlaneseq
  %v2680 = vshrl.u32 %v2679, 7
  %v2681 = vsub.s32 0, %v2680
  %v2682 = vrot.slane %v2674, %v2681
  %v2683 = vmul.f32 %v2678, %v1533
  %v2684 = vmul.f32 %v2682, %v1533
  %v2685 = vadd.f32 %v2665, %v2683
  %v2686 = vadd.f32 %v2666, %v2684
  %v2687 = vlaneseq
  %v2688 = vshrl.u32 %v2687, 7
  %v2689 = vsub.s32 1, %v2688
  %v2690 = vrot.slane %v2673, %v2689
  %v2691 = vlaneseq
  %v2692 = vshrl.u32 %v2691, 7
  %v2693 = vsub.s32 1, %v2692
  %v2694 = vrot.slane %v2674, %v2693
  %v2695 = vmul.f32 %v2690, %v1549
  %v2696 = vmul.f32 %v2694, %v1549
  %v2697 = vadd.f32 %v2685, %v2695
  %v2698 = vadd.f32 %v2686, %v2696
  %v2699 = vlaneseq
  %v2700 = vshrl.u32 %v2699, 7
  %v2701 = vsub.s32 2, %v2700
  %v2702 = vrot.slane %v2673, %v2701
  %v2703 = vlaneseq
  %v2704 = vshrl.u32 %v2703, 7
  %v2705 = vsub.s32 2, %v2704
  %v2706 = vrot.slane %v2674, %v2705
  %v2707 = vmul.f32 %v2702, %v1565
  %v2708 = vmul.f32 %v2706, %v1565
  %v2709 = vadd.f32 %v2697, %v2707
  %v2710 = vadd.f32 %v2698, %v2708
  %v2711 = vlaneseq
  %v2712 = vshrl.u32 %v2711, 7
  %v2713 = vsub.s32 3, %v2712
  %v2714 = vrot.slane %v2673, %v2713
  %v2715 = vlaneseq
  %v2716 = vshrl.u32 %v2715, 7
  %v2717 = vsub.s32 3, %v2716
  %v2718 = vrot.slane %v2674, %v2717
  %v2719 = vmul.f32 %v2714, %v1581
  %v2720 = vmul.f32 %v2718, %v1581
  %v2721 = vadd.f32 %v2709, %v2719
  %v2722 = vadd.f32 %v2710, %v2720
  %v2723 = vlaneseq
  %v2724 = vshrl.u32 %v2723, 7
  %v2725 = vsub.s32 4, %v2724
  %v2726 = vrot.slane %v2673, %v2725
  %v2727 = vlaneseq
  %v2728 = vshrl.u32 %v2727, 7
  %v2729 = vsub.s32 4, %v2728
  %v2730 = vrot.slane %v2674, %v2729
  %v2731 = vmul.f32 %v2726, %v1597
  %v2732 = vmul.f32 %v2730, %v1597
  %v2733 = vadd.f32 %v2721, %v2731
  %v2734 = vadd.f32 %v2722, %v2732
  %v2735 = vlaneseq
  %v2736 = vshrl.u32 %v2735, 7
  %v2737 = vsub.s32 5, %v2736
  %v2738 = vrot.slane %v2673, %v2737
  %v2739 = vlaneseq
  %v2740 = vshrl.u32 %v2739, 7
  %v2741 = vsub.s32 5, %v2740
  %v2742 = vrot.slane %v2674, %v2741
  %v2743 = vmul.f32 %v2738, %v1613
  %v2744 = vmul.f32 %v2742, %v1613
  %v2745 = vadd.f32 %v2733, %v2743
  %v2746 = vadd.f32 %v2734, %v2744
  %v2747 = vlaneseq
  %v2748 = vshrl.u32 %v2747, 7
  %v2749 = vsub.s32 6, %v2748
  %v2750 = vrot.slane %v2673, %v2749
  %v2751 = vlaneseq
  %v2752 = vshrl.u32 %v2751, 7
  %v2753 = vsub.s32 6, %v2752
  %v2754 = vrot.slane %v2674, %v2753
  %v2755 = vmul.f32 %v2750, %v1629
  %v2756 = vmul.f32 %v2754, %v1629
  %v2757 = vadd.f32 %v2745, %v2755
  %v2758 = vadd.f32 %v2746, %v2756
  %v2759 = vlaneseq
  %v2760 = vshrl.u32 %v2759, 7
  %v2761 = vsub.s32 7, %v2760
  %v2762 = vrot.slane %v2673, %v2761
  %v2763 = vlaneseq
  %v2764 = vshrl.u32 %v2763, 7
  %v2765 = vsub.s32 7, %v2764
  %v2766 = vrot.slane %v2674, %v2765
  %v2767 = vmul.f32 %v2762, %v1645
  %v2768 = vmul.f32 %v2766, %v1645
  %v2769 = vadd.f32 %v2757, %v2767
  %v2770 = vadd.f32 %v2758, %v2768
  %2771 = vrot.lane.b32.xlu0 %v1239, 1
  %v2772 = vpop.permute.xlu0 %2771
  %2773 = vrot.lane.b32.xlu0 %v1240, 1
  %v2774 = vpop.permute.xlu0 %2773
  %v2775 = vsel %vm428, %v2772, %v2774
  %v2776 = vsel %vm428, %v2774, %v2772
  %v2777 = vmul.f32 %v2776, %v437
  %v2778 = vmul.f32 %v2775, %v441
  %v2779 = vlaneseq
  %v2780 = vshrl.u32 %v2779, 7
  %v2781 = vsub.s32 0, %v2780
  %v2782 = vrot.slane %v2777, %v2781
  %v2783 = vlaneseq
  %v2784 = vshrl.u32 %v2783, 7
  %v2785 = vsub.s32 0, %v2784
  %v2786 = vrot.slane %v2778, %v2785
  %v2787 = vmul.f32 %v2782, %v1669
  %v2788 = vmul.f32 %v2786, %v1669
  %v2789 = vadd.f32 %v2769, %v2787
  %v2790 = vadd.f32 %v2770, %v2788
  %v2791 = vlaneseq
  %v2792 = vshrl.u32 %v2791, 7
  %v2793 = vsub.s32 1, %v2792
  %v2794 = vrot.slane %v2777, %v2793
  %v2795 = vlaneseq
  %v2796 = vshrl.u32 %v2795, 7
  %v2797 = vsub.s32 1, %v2796
  %v2798 = vrot.slane %v2778, %v2797
  %v2799 = vmul.f32 %v2794, %v1685
  %v2800 = vmul.f32 %v2798, %v1685
  %v2801 = vadd.f32 %v2789, %v2799
  %v2802 = vadd.f32 %v2790, %v2800
  %v2803 = vlaneseq
  %v2804 = vshrl.u32 %v2803, 7
  %v2805 = vsub.s32 2, %v2804
  %v2806 = vrot.slane %v2777, %v2805
  %v2807 = vlaneseq
  %v2808 = vshrl.u32 %v2807, 7
  %v2809 = vsub.s32 2, %v2808
  %v2810 = vrot.slane %v2778, %v2809
  %v2811 = vmul.f32 %v2806, %v1701
  %v2812 = vmul.f32 %v2810, %v1701
  %v2813 = vadd.f32 %v2801, %v2811
  %v2814 = vadd.f32 %v2802, %v2812
  %v2815 = vlaneseq
  %v2816 = vshrl.u32 %v2815, 7
  %v2817 = vsub.s32 3, %v2816
  %v2818 = vrot.slane %v2777, %v2817
  %v2819 = vlaneseq
  %v2820 = vshrl.u32 %v2819, 7
  %v2821 = vsub.s32 3, %v2820
  %v2822 = vrot.slane %v2778, %v2821
  %v2823 = vmul.f32 %v2818, %v1717
  %v2824 = vmul.f32 %v2822, %v1717
  %v2825 = vadd.f32 %v2813, %v2823
  %v2826 = vadd.f32 %v2814, %v2824
  %v2827 = vlaneseq
  %v2828 = vshrl.u32 %v2827, 7
  %v2829 = vsub.s32 4, %v2828
  %v2830 = vrot.slane %v2777, %v2829
  %v2831 = vlaneseq
  %v2832 = vshrl.u32 %v2831, 7
  %v2833 = vsub.s32 4, %v2832
  %v2834 = vrot.slane %v2778, %v2833
  %v2835 = vmul.f32 %v2830, %v1733
  %v2836 = vmul.f32 %v2834, %v1733
  %v2837 = vadd.f32 %v2825, %v2835
  %v2838 = vadd.f32 %v2826, %v2836
  %v2839 = vlaneseq
  %v2840 = vshrl.u32 %v2839, 7
  %v2841 = vsub.s32 5, %v2840
  %v2842 = vrot.slane %v2777, %v2841
  %v2843 = vlaneseq
  %v2844 = vshrl.u32 %v2843, 7
  %v2845 = vsub.s32 5, %v2844
  %v2846 = vrot.slane %v2778, %v2845
  %v2847 = vmul.f32 %v2842, %v1749
  %v2848 = vmul.f32 %v2846, %v1749
  %v2849 = vadd.f32 %v2837, %v2847
  %v2850 = vadd.f32 %v2838, %v2848
  %v2851 = vlaneseq
  %v2852 = vshrl.u32 %v2851, 7
  %v2853 = vsub.s32 6, %v2852
  %v2854 = vrot.slane %v2777, %v2853
  %v2855 = vlaneseq
  %v2856 = vshrl.u32 %v2855, 7
  %v2857 = vsub.s32 6, %v2856
  %v2858 = vrot.slane %v2778, %v2857
  %v2859 = vmul.f32 %v2854, %v1765
  %v2860 = vmul.f32 %v2858, %v1765
  %v2861 = vadd.f32 %v2849, %v2859
  %v2862 = vadd.f32 %v2850, %v2860
  %v2863 = vlaneseq
  %v2864 = vshrl.u32 %v2863, 7
  %v2865 = vsub.s32 7, %v2864
  %v2866 = vrot.slane %v2777, %v2865
  %v2867 = vlaneseq
  %v2868 = vshrl.u32 %v2867, 7
  %v2869 = vsub.s32 7, %v2868
  %v2870 = vrot.slane %v2778, %v2869
  %v2871 = vmul.f32 %v2866, %v1781
  %v2872 = vmul.f32 %v2870, %v1781
  %v2873 = vadd.f32 %v2861, %v2871
  %v2874 = vadd.f32 %v2862, %v2872
  %v2875 = vlaneseq
  %v2876 = vshrl.u32 %v2875, 7
  %v2877 = vsub.s32 0, %v2876
  %v2878 = vrot.slane %v1239, %v2877
  %v2879 = vlaneseq
  %v2880 = vshrl.u32 %v2879, 7
  %v2881 = vsub.s32 0, %v2880
  %v2882 = vrot.slane %v1240, %v2881
  %v2883 = vmul.f32 %v2878, %v1797
  %v2884 = vmul.f32 %v2882, %v1797
  %v2885 = vadd.f32 %v2873, %v2883
  %v2886 = vadd.f32 %v2874, %v2884
  %v2887 = vlaneseq
  %v2888 = vshrl.u32 %v2887, 7
  %v2889 = vsub.s32 1, %v2888
  %v2890 = vrot.slane %v1239, %v2889
  %v2891 = vlaneseq
  %v2892 = vshrl.u32 %v2891, 7
  %v2893 = vsub.s32 1, %v2892
  %v2894 = vrot.slane %v1240, %v2893
  %v2895 = vmul.f32 %v2890, %v1813
  %v2896 = vmul.f32 %v2894, %v1813
  %v2897 = vadd.f32 %v2885, %v2895
  %v2898 = vadd.f32 %v2886, %v2896
  %v2899 = vlaneseq
  %v2900 = vshrl.u32 %v2899, 7
  %v2901 = vsub.s32 2, %v2900
  %v2902 = vrot.slane %v1239, %v2901
  %v2903 = vlaneseq
  %v2904 = vshrl.u32 %v2903, 7
  %v2905 = vsub.s32 2, %v2904
  %v2906 = vrot.slane %v1240, %v2905
  %v2907 = vmul.f32 %v2902, %v1829
  %v2908 = vmul.f32 %v2906, %v1829
  %v2909 = vadd.f32 %v2897, %v2907
  %v2910 = vadd.f32 %v2898, %v2908
  %v2911 = vlaneseq
  %v2912 = vshrl.u32 %v2911, 7
  %v2913 = vsub.s32 3, %v2912
  %v2914 = vrot.slane %v1239, %v2913
  %v2915 = vlaneseq
  %v2916 = vshrl.u32 %v2915, 7
  %v2917 = vsub.s32 3, %v2916
  %v2918 = vrot.slane %v1240, %v2917
  %v2919 = vmul.f32 %v2914, %v1845
  %v2920 = vmul.f32 %v2918, %v1845
  %v2921 = vadd.f32 %v2909, %v2919
  %v2922 = vadd.f32 %v2910, %v2920
  %v2923 = vlaneseq
  %v2924 = vshrl.u32 %v2923, 7
  %v2925 = vsub.s32 4, %v2924
  %v2926 = vrot.slane %v1239, %v2925
  %v2927 = vlaneseq
  %v2928 = vshrl.u32 %v2927, 7
  %v2929 = vsub.s32 4, %v2928
  %v2930 = vrot.slane %v1240, %v2929
  %v2931 = vmul.f32 %v2926, %v1861
  %v2932 = vmul.f32 %v2930, %v1861
  %v2933 = vadd.f32 %v2921, %v2931
  %v2934 = vadd.f32 %v2922, %v2932
  %v2935 = vlaneseq
  %v2936 = vshrl.u32 %v2935, 7
  %v2937 = vsub.s32 5, %v2936
  %v2938 = vrot.slane %v1239, %v2937
  %v2939 = vlaneseq
  %v2940 = vshrl.u32 %v2939, 7
  %v2941 = vsub.s32 5, %v2940
  %v2942 = vrot.slane %v1240, %v2941
  %v2943 = vmul.f32 %v2938, %v1877
  %v2944 = vmul.f32 %v2942, %v1877
  %v2945 = vadd.f32 %v2933, %v2943
  %v2946 = vadd.f32 %v2934, %v2944
  %v2947 = vlaneseq
  %v2948 = vshrl.u32 %v2947, 7
  %v2949 = vsub.s32 6, %v2948
  %v2950 = vrot.slane %v1239, %v2949
  %v2951 = vlaneseq
  %v2952 = vshrl.u32 %v2951, 7
  %v2953 = vsub.s32 6, %v2952
  %v2954 = vrot.slane %v1240, %v2953
  %v2955 = vmul.f32 %v2950, %v1893
  %v2956 = vmul.f32 %v2954, %v1893
  %v2957 = vadd.f32 %v2945, %v2955
  %v2958 = vadd.f32 %v2946, %v2956
  %v2959 = vlaneseq
  %v2960 = vshrl.u32 %v2959, 7
  %v2961 = vsub.s32 7, %v2960
  %v2962 = vrot.slane %v1239, %v2961
  %v2963 = vlaneseq
  %v2964 = vshrl.u32 %v2963, 7
  %v2965 = vsub.s32 7, %v2964
  %v2966 = vrot.slane %v1240, %v2965
  %v2967 = vmul.f32 %v2962, %v1909
  %v2968 = vmul.f32 %v2966, %v1909
  %v2969 = vadd.f32 %v2957, %v2967
  %v2970 = vadd.f32 %v2958, %v2968
  %2971 = vrot.lane.b32.xlu0 %v1239, 127
  %v2972 = vpop.permute.xlu0 %2971
  %2973 = vrot.lane.b32.xlu0 %v1240, 127
  %v2974 = vpop.permute.xlu0 %2973
  %v2975 = vsel %vm674, %v2972, %v2974
  %v2976 = vsel %vm674, %v2974, %v2972
  %v2977 = vmul.f32 %v2975, %v683
  %v2978 = vmul.f32 %v2976, %v687
  %v2979 = vlaneseq
  %v2980 = vshrl.u32 %v2979, 7
  %v2981 = vsub.s32 0, %v2980
  %v2982 = vrot.slane %v2977, %v2981
  %v2983 = vlaneseq
  %v2984 = vshrl.u32 %v2983, 7
  %v2985 = vsub.s32 0, %v2984
  %v2986 = vrot.slane %v2978, %v2985
  %v2987 = vmul.f32 %v2982, %v1933
  %v2988 = vmul.f32 %v2986, %v1933
  %v2989 = vadd.f32 %v2969, %v2987
  %v2990 = vadd.f32 %v2970, %v2988
  %v2991 = vlaneseq
  %v2992 = vshrl.u32 %v2991, 7
  %v2993 = vsub.s32 1, %v2992
  %v2994 = vrot.slane %v2977, %v2993
  %v2995 = vlaneseq
  %v2996 = vshrl.u32 %v2995, 7
  %v2997 = vsub.s32 1, %v2996
  %v2998 = vrot.slane %v2978, %v2997
  %v2999 = vmul.f32 %v2994, %v1949
  %v3000 = vmul.f32 %v2998, %v1949
  %v3001 = vadd.f32 %v2989, %v2999
  %v3002 = vadd.f32 %v2990, %v3000
  %v3003 = vlaneseq
  %v3004 = vshrl.u32 %v3003, 7
  %v3005 = vsub.s32 2, %v3004
  %v3006 = vrot.slane %v2977, %v3005
  %v3007 = vlaneseq
  %v3008 = vshrl.u32 %v3007, 7
  %v3009 = vsub.s32 2, %v3008
  %v3010 = vrot.slane %v2978, %v3009
  %v3011 = vmul.f32 %v3006, %v1965
  %v3012 = vmul.f32 %v3010, %v1965
  %v3013 = vadd.f32 %v3001, %v3011
  %v3014 = vadd.f32 %v3002, %v3012
  %v3015 = vlaneseq
  %v3016 = vshrl.u32 %v3015, 7
  %v3017 = vsub.s32 3, %v3016
  %v3018 = vrot.slane %v2977, %v3017
  %v3019 = vlaneseq
  %v3020 = vshrl.u32 %v3019, 7
  %v3021 = vsub.s32 3, %v3020
  %v3022 = vrot.slane %v2978, %v3021
  %v3023 = vmul.f32 %v3018, %v1981
  %v3024 = vmul.f32 %v3022, %v1981
  %v3025 = vadd.f32 %v3013, %v3023
  %v3026 = vadd.f32 %v3014, %v3024
  %v3027 = vlaneseq
  %v3028 = vshrl.u32 %v3027, 7
  %v3029 = vsub.s32 4, %v3028
  %v3030 = vrot.slane %v2977, %v3029
  %v3031 = vlaneseq
  %v3032 = vshrl.u32 %v3031, 7
  %v3033 = vsub.s32 4, %v3032
  %v3034 = vrot.slane %v2978, %v3033
  %v3035 = vmul.f32 %v3030, %v1997
  %v3036 = vmul.f32 %v3034, %v1997
  %v3037 = vadd.f32 %v3025, %v3035
  %v3038 = vadd.f32 %v3026, %v3036
  %v3039 = vlaneseq
  %v3040 = vshrl.u32 %v3039, 7
  %v3041 = vsub.s32 5, %v3040
  %v3042 = vrot.slane %v2977, %v3041
  %v3043 = vlaneseq
  %v3044 = vshrl.u32 %v3043, 7
  %v3045 = vsub.s32 5, %v3044
  %v3046 = vrot.slane %v2978, %v3045
  %v3047 = vmul.f32 %v3042, %v2013
  %v3048 = vmul.f32 %v3046, %v2013
  %v3049 = vadd.f32 %v3037, %v3047
  %v3050 = vadd.f32 %v3038, %v3048
  %v3051 = vlaneseq
  %v3052 = vshrl.u32 %v3051, 7
  %v3053 = vsub.s32 6, %v3052
  %v3054 = vrot.slane %v2977, %v3053
  %v3055 = vlaneseq
  %v3056 = vshrl.u32 %v3055, 7
  %v3057 = vsub.s32 6, %v3056
  %v3058 = vrot.slane %v2978, %v3057
  %v3059 = vmul.f32 %v3054, %v2029
  %v3060 = vmul.f32 %v3058, %v2029
  %v3061 = vadd.f32 %v3049, %v3059
  %v3062 = vadd.f32 %v3050, %v3060
  %v3063 = vlaneseq
  %v3064 = vshrl.u32 %v3063, 7
  %v3065 = vsub.s32 7, %v3064
  %v3066 = vrot.slane %v2977, %v3065
  %v3067 = vlaneseq
  %v3068 = vshrl.u32 %v3067, 7
  %v3069 = vsub.s32 7, %v3068
  %v3070 = vrot.slane %v2978, %v3069
  %v3071 = vmul.f32 %v3066, %v2045
  %v3072 = vmul.f32 %v3070, %v2045
  %v3073 = vadd.f32 %v3061, %v3071
  %v3074 = vadd.f32 %v3062, %v3072
  %3075 = vrot.lane.b32.xlu0 %v1239, 113
  %v3076 = vpop.permute.xlu0 %3075
  %3077 = vrot.lane.b32.xlu0 %v1240, 113
  %v3078 = vpop.permute.xlu0 %3077
  %v3079 = vsel %vm808, %v3076, %v3078
  %v3080 = vsel %vm808, %v3078, %v3076
  %v3081 = vmul.f32 %v3079, %v817
  %v3082 = vmul.f32 %v3080, %v821
  %v3083 = vlaneseq
  %v3084 = vshrl.u32 %v3083, 7
  %v3085 = vsub.s32 0, %v3084
  %v3086 = vrot.slane %v3081, %v3085
  %v3087 = vlaneseq
  %v3088 = vshrl.u32 %v3087, 7
  %v3089 = vsub.s32 0, %v3088
  %v3090 = vrot.slane %v3082, %v3089
  %v3091 = vmul.f32 %v3086, %v2069
  %v3092 = vmul.f32 %v3090, %v2069
  %v3093 = vadd.f32 %v3073, %v3091
  %v3094 = vadd.f32 %v3074, %v3092
  %v3095 = vlaneseq
  %v3096 = vshrl.u32 %v3095, 7
  %v3097 = vsub.s32 1, %v3096
  %v3098 = vrot.slane %v3081, %v3097
  %v3099 = vlaneseq
  %v3100 = vshrl.u32 %v3099, 7
  %v3101 = vsub.s32 1, %v3100
  %v3102 = vrot.slane %v3082, %v3101
  %v3103 = vmul.f32 %v3098, %v2085
  %v3104 = vmul.f32 %v3102, %v2085
  %v3105 = vadd.f32 %v3093, %v3103
  %v3106 = vadd.f32 %v3094, %v3104
  %v3107 = vlaneseq
  %v3108 = vshrl.u32 %v3107, 7
  %v3109 = vsub.s32 2, %v3108
  %v3110 = vrot.slane %v3081, %v3109
  %v3111 = vlaneseq
  %v3112 = vshrl.u32 %v3111, 7
  %v3113 = vsub.s32 2, %v3112
  %v3114 = vrot.slane %v3082, %v3113
  %v3115 = vmul.f32 %v3110, %v2101
  %v3116 = vmul.f32 %v3114, %v2101
  %v3117 = vadd.f32 %v3105, %v3115
  %v3118 = vadd.f32 %v3106, %v3116
  %v3119 = vlaneseq
  %v3120 = vshrl.u32 %v3119, 7
  %v3121 = vsub.s32 3, %v3120
  %v3122 = vrot.slane %v3081, %v3121
  %v3123 = vlaneseq
  %v3124 = vshrl.u32 %v3123, 7
  %v3125 = vsub.s32 3, %v3124
  %v3126 = vrot.slane %v3082, %v3125
  %v3127 = vmul.f32 %v3122, %v2117
  %v3128 = vmul.f32 %v3126, %v2117
  %v3129 = vadd.f32 %v3117, %v3127
  %v3130 = vadd.f32 %v3118, %v3128
  %v3131 = vlaneseq
  %v3132 = vshrl.u32 %v3131, 7
  %v3133 = vsub.s32 4, %v3132
  %v3134 = vrot.slane %v3081, %v3133
  %v3135 = vlaneseq
  %v3136 = vshrl.u32 %v3135, 7
  %v3137 = vsub.s32 4, %v3136
  %v3138 = vrot.slane %v3082, %v3137
  %v3139 = vmul.f32 %v3134, %v2133
  %v3140 = vmul.f32 %v3138, %v2133
  %v3141 = vadd.f32 %v3129, %v3139
  %v3142 = vadd.f32 %v3130, %v3140
  %v3143 = vlaneseq
  %v3144 = vshrl.u32 %v3143, 7
  %v3145 = vsub.s32 5, %v3144
  %v3146 = vrot.slane %v3081, %v3145
  %v3147 = vlaneseq
  %v3148 = vshrl.u32 %v3147, 7
  %v3149 = vsub.s32 5, %v3148
  %v3150 = vrot.slane %v3082, %v3149
  %v3151 = vmul.f32 %v3146, %v2149
  %v3152 = vmul.f32 %v3150, %v2149
  %v3153 = vadd.f32 %v3141, %v3151
  %v3154 = vadd.f32 %v3142, %v3152
  %v3155 = vlaneseq
  %v3156 = vshrl.u32 %v3155, 7
  %v3157 = vsub.s32 6, %v3156
  %v3158 = vrot.slane %v3081, %v3157
  %v3159 = vlaneseq
  %v3160 = vshrl.u32 %v3159, 7
  %v3161 = vsub.s32 6, %v3160
  %v3162 = vrot.slane %v3082, %v3161
  %v3163 = vmul.f32 %v3158, %v2165
  %v3164 = vmul.f32 %v3162, %v2165
  %v3165 = vadd.f32 %v3153, %v3163
  %v3166 = vadd.f32 %v3154, %v3164
  %v3167 = vlaneseq
  %v3168 = vshrl.u32 %v3167, 7
  %v3169 = vsub.s32 7, %v3168
  %v3170 = vrot.slane %v3081, %v3169
  %v3171 = vlaneseq
  %v3172 = vshrl.u32 %v3171, 7
  %v3173 = vsub.s32 7, %v3172
  %v3174 = vrot.slane %v3082, %v3173
  %v3175 = vmul.f32 %v3170, %v2181
  %v3176 = vmul.f32 %v3174, %v2181
  %v3177 = vadd.f32 %v3165, %v3175
  %v3178 = vadd.f32 %v3166, %v3176
  %3179 = vrot.lane.b32.xlu0 %v1239, 112
  %v3180 = vpop.permute.xlu0 %3179
  %3181 = vrot.lane.b32.xlu0 %v1240, 112
  %v3182 = vpop.permute.xlu0 %3181
  %v3183 = vsel %vm942, %v3180, %v3182
  %v3184 = vsel %vm942, %v3182, %v3180
  %v3185 = vmul.f32 %v3183, %v951
  %v3186 = vmul.f32 %v3184, %v955
  %v3187 = vlaneseq
  %v3188 = vshrl.u32 %v3187, 7
  %v3189 = vsub.s32 0, %v3188
  %v3190 = vrot.slane %v3185, %v3189
  %v3191 = vlaneseq
  %v3192 = vshrl.u32 %v3191, 7
  %v3193 = vsub.s32 0, %v3192
  %v3194 = vrot.slane %v3186, %v3193
  %v3195 = vmul.f32 %v3190, %v2205
  %v3196 = vmul.f32 %v3194, %v2205
  %v3197 = vadd.f32 %v3177, %v3195
  %v3198 = vadd.f32 %v3178, %v3196
  %v3199 = vlaneseq
  %v3200 = vshrl.u32 %v3199, 7
  %v3201 = vsub.s32 1, %v3200
  %v3202 = vrot.slane %v3185, %v3201
  %v3203 = vlaneseq
  %v3204 = vshrl.u32 %v3203, 7
  %v3205 = vsub.s32 1, %v3204
  %v3206 = vrot.slane %v3186, %v3205
  %v3207 = vmul.f32 %v3202, %v2221
  %v3208 = vmul.f32 %v3206, %v2221
  %v3209 = vadd.f32 %v3197, %v3207
  %v3210 = vadd.f32 %v3198, %v3208
  %v3211 = vlaneseq
  %v3212 = vshrl.u32 %v3211, 7
  %v3213 = vsub.s32 2, %v3212
  %v3214 = vrot.slane %v3185, %v3213
  %v3215 = vlaneseq
  %v3216 = vshrl.u32 %v3215, 7
  %v3217 = vsub.s32 2, %v3216
  %v3218 = vrot.slane %v3186, %v3217
  %v3219 = vmul.f32 %v3214, %v2237
  %v3220 = vmul.f32 %v3218, %v2237
  %v3221 = vadd.f32 %v3209, %v3219
  %v3222 = vadd.f32 %v3210, %v3220
  %v3223 = vlaneseq
  %v3224 = vshrl.u32 %v3223, 7
  %v3225 = vsub.s32 3, %v3224
  %v3226 = vrot.slane %v3185, %v3225
  %v3227 = vlaneseq
  %v3228 = vshrl.u32 %v3227, 7
  %v3229 = vsub.s32 3, %v3228
  %v3230 = vrot.slane %v3186, %v3229
  %v3231 = vmul.f32 %v3226, %v2253
  %v3232 = vmul.f32 %v3230, %v2253
  %v3233 = vadd.f32 %v3221, %v3231
  %v3234 = vadd.f32 %v3222, %v3232
  %v3235 = vlaneseq
  %v3236 = vshrl.u32 %v3235, 7
  %v3237 = vsub.s32 4, %v3236
  %v3238 = vrot.slane %v3185, %v3237
  %v3239 = vlaneseq
  %v3240 = vshrl.u32 %v3239, 7
  %v3241 = vsub.s32 4, %v3240
  %v3242 = vrot.slane %v3186, %v3241
  %v3243 = vmul.f32 %v3238, %v2269
  %v3244 = vmul.f32 %v3242, %v2269
  %v3245 = vadd.f32 %v3233, %v3243
  %v3246 = vadd.f32 %v3234, %v3244
  %v3247 = vlaneseq
  %v3248 = vshrl.u32 %v3247, 7
  %v3249 = vsub.s32 5, %v3248
  %v3250 = vrot.slane %v3185, %v3249
  %v3251 = vlaneseq
  %v3252 = vshrl.u32 %v3251, 7
  %v3253 = vsub.s32 5, %v3252
  %v3254 = vrot.slane %v3186, %v3253
  %v3255 = vmul.f32 %v3250, %v2285
  %v3256 = vmul.f32 %v3254, %v2285
  %v3257 = vadd.f32 %v3245, %v3255
  %v3258 = vadd.f32 %v3246, %v3256
  %v3259 = vlaneseq
  %v3260 = vshrl.u32 %v3259, 7
  %v3261 = vsub.s32 6, %v3260
  %v3262 = vrot.slane %v3185, %v3261
  %v3263 = vlaneseq
  %v3264 = vshrl.u32 %v3263, 7
  %v3265 = vsub.s32 6, %v3264
  %v3266 = vrot.slane %v3186, %v3265
  %v3267 = vmul.f32 %v3262, %v2301
  %v3268 = vmul.f32 %v3266, %v2301
  %v3269 = vadd.f32 %v3257, %v3267
  %v3270 = vadd.f32 %v3258, %v3268
  %v3271 = vlaneseq
  %v3272 = vshrl.u32 %v3271, 7
  %v3273 = vsub.s32 7, %v3272
  %v3274 = vrot.slane %v3185, %v3273
  %v3275 = vlaneseq
  %v3276 = vshrl.u32 %v3275, 7
  %v3277 = vsub.s32 7, %v3276
  %v3278 = vrot.slane %v3186, %v3277
  %v3279 = vmul.f32 %v3274, %v2317
  %v3280 = vmul.f32 %v3278, %v2317
  %v3281 = vadd.f32 %v3269, %v3279
  %v3282 = vadd.f32 %v3270, %v3280
  %3283 = vrot.lane.b32.xlu0 %v1239, 111
  %v3284 = vpop.permute.xlu0 %3283
  %3285 = vrot.lane.b32.xlu0 %v1240, 111
  %v3286 = vpop.permute.xlu0 %3285
  %v3287 = vsel %vm1076, %v3284, %v3286
  %v3288 = vsel %vm1076, %v3286, %v3284
  %v3289 = vmul.f32 %v3287, %v1085
  %v3290 = vmul.f32 %v3288, %v1089
  %v3291 = vlaneseq
  %v3292 = vshrl.u32 %v3291, 7
  %v3293 = vsub.s32 0, %v3292
  %v3294 = vrot.slane %v3289, %v3293
  %v3295 = vlaneseq
  %v3296 = vshrl.u32 %v3295, 7
  %v3297 = vsub.s32 0, %v3296
  %v3298 = vrot.slane %v3290, %v3297
  %v3299 = vmul.f32 %v3294, %v2341
  %v3300 = vmul.f32 %v3298, %v2341
  %v3301 = vadd.f32 %v3281, %v3299
  %v3302 = vadd.f32 %v3282, %v3300
  %v3303 = vlaneseq
  %v3304 = vshrl.u32 %v3303, 7
  %v3305 = vsub.s32 1, %v3304
  %v3306 = vrot.slane %v3289, %v3305
  %v3307 = vlaneseq
  %v3308 = vshrl.u32 %v3307, 7
  %v3309 = vsub.s32 1, %v3308
  %v3310 = vrot.slane %v3290, %v3309
  %v3311 = vmul.f32 %v3306, %v2357
  %v3312 = vmul.f32 %v3310, %v2357
  %v3313 = vadd.f32 %v3301, %v3311
  %v3314 = vadd.f32 %v3302, %v3312
  %v3315 = vlaneseq
  %v3316 = vshrl.u32 %v3315, 7
  %v3317 = vsub.s32 2, %v3316
  %v3318 = vrot.slane %v3289, %v3317
  %v3319 = vlaneseq
  %v3320 = vshrl.u32 %v3319, 7
  %v3321 = vsub.s32 2, %v3320
  %v3322 = vrot.slane %v3290, %v3321
  %v3323 = vmul.f32 %v3318, %v2373
  %v3324 = vmul.f32 %v3322, %v2373
  %v3325 = vadd.f32 %v3313, %v3323
  %v3326 = vadd.f32 %v3314, %v3324
  %v3327 = vlaneseq
  %v3328 = vshrl.u32 %v3327, 7
  %v3329 = vsub.s32 3, %v3328
  %v3330 = vrot.slane %v3289, %v3329
  %v3331 = vlaneseq
  %v3332 = vshrl.u32 %v3331, 7
  %v3333 = vsub.s32 3, %v3332
  %v3334 = vrot.slane %v3290, %v3333
  %v3335 = vmul.f32 %v3330, %v2389
  %v3336 = vmul.f32 %v3334, %v2389
  %v3337 = vadd.f32 %v3325, %v3335
  %v3338 = vadd.f32 %v3326, %v3336
  %v3339 = vlaneseq
  %v3340 = vshrl.u32 %v3339, 7
  %v3341 = vsub.s32 4, %v3340
  %v3342 = vrot.slane %v3289, %v3341
  %v3343 = vlaneseq
  %v3344 = vshrl.u32 %v3343, 7
  %v3345 = vsub.s32 4, %v3344
  %v3346 = vrot.slane %v3290, %v3345
  %v3347 = vmul.f32 %v3342, %v2405
  %v3348 = vmul.f32 %v3346, %v2405
  %v3349 = vadd.f32 %v3337, %v3347
  %v3350 = vadd.f32 %v3338, %v3348
  %v3351 = vlaneseq
  %v3352 = vshrl.u32 %v3351, 7
  %v3353 = vsub.s32 5, %v3352
  %v3354 = vrot.slane %v3289, %v3353
  %v3355 = vlaneseq
  %v3356 = vshrl.u32 %v3355, 7
  %v3357 = vsub.s32 5, %v3356
  %v3358 = vrot.slane %v3290, %v3357
  %v3359 = vmul.f32 %v3354, %v2421
  %v3360 = vmul.f32 %v3358, %v2421
  %v3361 = vadd.f32 %v3349, %v3359
  %v3362 = vadd.f32 %v3350, %v3360
  %v3363 = vlaneseq
  %v3364 = vshrl.u32 %v3363, 7
  %v3365 = vsub.s32 6, %v3364
  %v3366 = vrot.slane %v3289, %v3365
  %v3367 = vlaneseq
  %v3368 = vshrl.u32 %v3367, 7
  %v3369 = vsub.s32 6, %v3368
  %v3370 = vrot.slane %v3290, %v3369
  %v3371 = vmul.f32 %v3366, %v2437
  %v3372 = vmul.f32 %v3370, %v2437
  %v3373 = vadd.f32 %v3361, %v3371
  %v3374 = vadd.f32 %v3362, %v3372
  %v3375 = vlaneseq
  %v3376 = vshrl.u32 %v3375, 7
  %v3377 = vsub.s32 7, %v3376
  %v3378 = vrot.slane %v3289, %v3377
  %v3379 = vlaneseq
  %v3380 = vshrl.u32 %v3379, 7
  %v3381 = vsub.s32 7, %v3380
  %v3382 = vrot.slane %v3290, %v3381
  %v3383 = vmul.f32 %v3378, %v2453
  %v3384 = vmul.f32 %v3382, %v2453
  %v3385 = vadd.f32 %v3373, %v3383
  %v3386 = vadd.f32 %v3374, %v3384
  %v3387 = vadd.f32 %v2457, %v2458
  %3388 = vadd.xlane.f32.xlu0 %v3387
  %v3389 = vpop.xlane.xlu0 %3388
  %v3390 = vadd.f32 %v3385, %v3386
  %3391 = vadd.xlane.f32.xlu0 %v3390
  %v3392 = vpop.xlane.xlu0 %3391
  %v3393 = vadd.f32 %v3389, %v3392
  %v3394 = vmul.f32 %v3393, 0.001953125
  %v3395 = vsub.f32 %v2457, %v3394
  %v3396 = vsub.f32 %v2458, %v3394
  %v3397 = vsub.f32 %v3385, %v3394
  %v3398 = vsub.f32 %v3386, %v3394
  %v3399 = vmul.f32 %v3395, %v3395
  %v3400 = vmul.f32 %v3396, %v3396
  %v3401 = vadd.f32 %v3399, %v3400
  %3402 = vadd.xlane.f32.xlu0 %v3401
  %v3403 = vpop.xlane.xlu0 %3402
  %v3404 = vadd.f32 %v3403, 0.0
  %v3405 = vmul.f32 %v3397, %v3397
  %v3406 = vmul.f32 %v3398, %v3398
  %v3407 = vadd.f32 %v3405, %v3406
  %3408 = vadd.xlane.f32.xlu0 %v3407
  %v3409 = vpop.xlane.xlu0 %3408
  %v3410 = vadd.f32 %v3404, %v3409
  %v3411 = vmul.f32 %v3410, 0.001953125
  %v3412 = vadd.f32 %v3411, 1e-05
  %v3413 = vrsqrt.pop %v3412
  %v3414 = vmul.f32 %v3395, %v3413
  %v3415 = vmul.f32 %v3396, %v3413
  %v3416 = vmax.f32 %v3414, 0.0
  %v3417 = vmax.f32 %v3415, 0.0
  %v3418 = vmul.f32 %v3397, %v3413
  %v3419 = vmul.f32 %v3398, %v3413
  %v3420 = vmax.f32 %v3418, 0.0
  %v3421 = vmax.f32 %v3419, 0.0
  %3422 = vst [vmem:[%s4] sm:$0xff] %v3416
  %3423 = vst [vmem:[%s4 + $0x8] sm:$0xff] %v3417
  %3424 = vst [vmem:[%s4 + $0x10] sm:$0xff] %v3420
  %3425 = vst [vmem:[%s4 + $0x18] sm:$0xff] %v3421
  // Predicated region
  $region18: #{dconv_forward.1} parent=0 // pred_check
    _
  $region19: #{dconv_forward.1} parent=0 // pred_check_branch
    %3427 = sbr.rel (0) target = $region21
  $region20: #{dconv_forward.1} parent=0 // pred_region
    _
  $region21: #{dconv_forward.1} parent=0 // pred_fallthru
    _
  // Predicated region
  $region22: #{dconv_forward.1} parent=0 // pred_check
    _
  $region23: #{dconv_forward.1} parent=0 // pred_check_branch
    %3429 = sbr.rel (0) target = $region25
  $region24: #{dconv_forward.1} parent=0 // pred_region
    _
  $region25: #{dconv_forward.1} parent=0 // pred_fallthru
    _

</llo_original>
